<compile_context>
chip_gen: v5e
topology: v5e:2x2
jax: 0.10.0
libtpu: 0.0.40
codegen_flags: <defaults>
</compile_context>

<pallas_src>
import jax
import jax.numpy as jnp
from jax.experimental import pallas as pl
from jax.experimental.pallas import tpu as pltpu

# ---- "const" values (synthetic stand-ins for const.*) ----
DYN_LSD = 32
PROC_PATH_LENGTH = 8
APP_LSD = 16
OUT_DIM = PROC_PATH_LENGTH * APP_LSD          # 128 (already lane-aligned)

# Logical (PyTorch) hidden widths and their 128-aligned padded versions.
H1, H2, H3 = 100, 150, 80


def _round_up(n, m=128):
    return ((n + m - 1) // m) * m


H1P, H2P, H3P = _round_up(H1), _round_up(H2), _round_up(H3)   # 128, 256, 128

LEAKY_SLOPE = 0.01       # torch F.leaky_relu default negative_slope
TILE_B = 512             # 512+ rows needed to approach the HBM roofline
MIN_PALLAS_BATCH = 256   # below this, XLA fusion of 4 tiny dots wins


def _leaky_relu(x):
    # one vmul + one vmax per vreg (vs. compare + select of jnp.where)
    return jnp.maximum(x, LEAKY_SLOPE * x)


# ---------------------------------------------------------------------------
# Kernel: whole MLP for one batch tile. Weights/biases are full (padded)
# arrays, VMEM-resident across the grid. Matmul operands bf16, epilogue f32.
# ---------------------------------------------------------------------------
def hidden_state_kernel(w_ref,
                        w1_ref, b1_ref,
                        w2_ref, b2_ref,
                        w3_ref, b3_ref,
                        w4_ref, b4_ref,
                        out_ref):
    x = w_ref[...].astype(jnp.bfloat16)
    h = jnp.dot(x, w1_ref[...], preferred_element_type=jnp.float32)
    h = _leaky_relu(h + b1_ref[...])
    h = jnp.dot(h.astype(jnp.bfloat16), w2_ref[...],
                preferred_element_type=jnp.float32)
    h = _leaky_relu(h + b2_ref[...])
    h = jnp.dot(h.astype(jnp.bfloat16), w3_ref[...],
                preferred_element_type=jnp.float32)
    h = _leaky_relu(h + b3_ref[...])
    h = jnp.dot(h.astype(jnp.bfloat16), w4_ref[...],
                preferred_element_type=jnp.float32)
    out_ref[...] = jax.nn.sigmoid(h + b4_ref[...]).astype(out_ref.dtype)


# ---------------------------------------------------------------------------
# Parameter init (PyTorch nn.Linear semantics) + 128-alignment padding.
# ---------------------------------------------------------------------------
def init_params(key, dtype=jnp.float32):
    """PyTorch nn.Linear init U(-1/sqrt(fan_in), 1/sqrt(fan_in)); W stored (in, out)."""
    dims = [(DYN_LSD, H1), (H1, H2), (H2, H3), (H3, OUT_DIM)]
    params = []
    for fan_in, fan_out in dims:
        key, kw, kb = jax.random.split(key, 3)
        bound = 1.0 / float(fan_in) ** 0.5
        W = jax.random.uniform(kw, (fan_in, fan_out), dtype, -bound, bound)
        b = jax.random.uniform(kb, (1, fan_out), dtype, -bound, bound)
        params += [W, b]
    return params


def _pad2(a, rows, cols):
    return jnp.pad(a, ((0, rows - a.shape[0]), (0, cols - a.shape[1])))


def pad_params(params, weight_dtype=jnp.bfloat16):
    """Zero-pad hidden widths to 128-multiples; cast weights to bf16.

    Padded hidden units stay exactly 0 through leaky_relu (their bias pad is 0)
    and the matching zero rows of the next weight ignore them, so the padded
    network is numerically identical to the logical one.
    """
    w1, b1, w2, b2, w3, b3, w4, b4 = params
    return [
        _pad2(w1, DYN_LSD, H1P).astype(weight_dtype), _pad2(b1, 1, H1P),
        _pad2(w2, H1P, H2P).astype(weight_dtype),     _pad2(b2, 1, H2P),
        _pad2(w3, H2P, H3P).astype(weight_dtype),     _pad2(b3, 1, H3P),
        _pad2(w4, H3P, OUT_DIM).astype(weight_dtype), _pad2(b4, 1, OUT_DIM),
    ]


# ---------------------------------------------------------------------------
# Forward wrappers.
# ---------------------------------------------------------------------------
def _pallas_forward(w, padded_params, tile_b):
    B = w.shape[0]
    b_pad = ((B + tile_b - 1) // tile_b) * tile_b
    if b_pad != B:
        w = jnp.pad(w, ((0, b_pad - B), (0, 0)))          # zero rows are benign
    grid = (b_pad // tile_b,)

    in_specs = [pl.BlockSpec((tile_b, DYN_LSD), lambda i: (i, 0))]
    for p in padded_params:
        # default-arg capture fixes the late-binding closure bug
        in_specs.append(pl.BlockSpec(p.shape, lambda i, n=p.ndim: (0,) * n))

    out = pl.pallas_call(
        hidden_state_kernel,
        out_shape=jax.ShapeDtypeStruct((b_pad, OUT_DIM), jnp.float32),
        grid=grid,
        in_specs=in_specs,
        out_specs=pl.BlockSpec((tile_b, OUT_DIM), lambda i: (i, 0)),
        compiler_params=pltpu.CompilerParams(
            dimension_semantics=("parallel",)),   # megacore / v7x 2-TC sharding
    )(w, *padded_params)
    return out[:B].reshape(B, PROC_PATH_LENGTH, APP_LSD)


def _xla_forward(w, padded_params):
    """Small-batch path: identical math (same bf16 casts), plain XLA fusion."""
    w1, b1, w2, b2, w3, b3, w4, b4 = padded_params
    h = _leaky_relu(jnp.dot(w.astype(jnp.bfloat16), w1,
                            preferred_element_type=jnp.float32) + b1)
    h = _leaky_relu(jnp.dot(h.astype(jnp.bfloat16), w2,
                            preferred_element_type=jnp.float32) + b2)
    h = _leaky_relu(jnp.dot(h.astype(jnp.bfloat16), w3,
                            preferred_element_type=jnp.float32) + b3)
    h = jax.nn.sigmoid(jnp.dot(h.astype(jnp.bfloat16), w4,
                               preferred_element_type=jnp.float32) + b4)
    return h.reshape(-1, PROC_PATH_LENGTH, APP_LSD)


def hidden_state_forward(w, padded_params, *, tile_b=TILE_B,
                         min_pallas_batch=MIN_PALLAS_BATCH,
                         force_pallas=False):
    """w: (B, DYN_LSD) -> (B, PROC_PATH_LENGTH, APP_LSD)."""
    B = w.shape[0]
    if B < min_pallas_batch and not force_pallas:
        # launch/DMA overhead dominates at tiny B; let XLA fuse the four dots
        return _xla_forward(w, padded_params)
    return _pallas_forward(w, padded_params, tile_b)


def hidden_state_reference(w, params):
    """Pure-f32 reference matching the PyTorch module exactly."""
    w1, b1, w2, b2, w3, b3, w4, b4 = params
    h = _leaky_relu(w @ w1 + b1)
    h = _leaky_relu(h @ w2 + b2)
    h = _leaky_relu(h @ w3 + b3)
    h = jax.nn.sigmoid(h @ w4 + b4)
    return h.reshape(-1, PROC_PATH_LENGTH, APP_LSD)


if __name__ == "__main__":
    key = jax.random.PRNGKey(0)
    key, kx = jax.random.split(key)

    B = 1000                       # not a tile multiple -> exercises pad/slice
    w = jax.random.normal(kx, (B, DYN_LSD), jnp.float32)

    logical_params = init_params(key)
    padded_params = pad_params(logical_params)

    out = hidden_state_forward(w, padded_params, tile_b=TILE_B,
                               force_pallas=True)
    out = jax.block_until_ready(out)
    assert out.shape == (B, PROC_PATH_LENGTH, APP_LSD), out.shape

    # Tight check vs. an XLA implementation with identical bf16 matmul casts.
    ref_bf16 = _xla_forward(w, padded_params)
    err_bf16 = float(jnp.max(jnp.abs(out - ref_bf16)))
    assert err_bf16 < 1e-3, err_bf16

    # Module-semantics check vs. the pure-f32 PyTorch-equivalent reference
    # (difference is only bf16 rounding of the matmul operands).
    ref_f32 = hidden_state_reference(w, logical_params)
    err_f32 = float(jnp.max(jnp.abs(out - ref_f32)))
    assert err_f32 < 3e-2, err_f32

    print("KERNEL_OK")
</pallas_src>

<mosaic_0001>
module attributes {stable_mosaic.version = 11 : i64} {
  func.func @hidden_state_kernel(%arg0: i32, %arg1: memref<512x32xf32, #tpu.memory_space<vmem>>, %arg2: memref<32x128xbf16, #tpu.memory_space<vmem>>, %arg3: memref<1x128xf32, #tpu.memory_space<vmem>>, %arg4: memref<128x256xbf16, #tpu.memory_space<vmem>>, %arg5: memref<1x256xf32, #tpu.memory_space<vmem>>, %arg6: memref<256x128xbf16, #tpu.memory_space<vmem>>, %arg7: memref<1x128xf32, #tpu.memory_space<vmem>>, %arg8: memref<128x128xbf16, #tpu.memory_space<vmem>>, %arg9: memref<1x128xf32, #tpu.memory_space<vmem>>, %arg10: memref<512x128xf32, #tpu.memory_space<vmem>>) attributes {dimension_semantics = [#tpu.dimension_semantics<parallel>], iteration_bounds = array<i64: 2>, scalar_prefetch = 0 : i64, scratch_operands = 0 : i64, tpu.core_type = #tpu.core_type<tc>, window_params = [{transform_indices = @transform_0, window_bounds = array<i64: 512, 32>}, {pipeline_mode = #tpu.pipeline_mode<synchronous>, transform_indices = @transform_1, window_bounds = array<i64: 32, 128>}, {pipeline_mode = #tpu.pipeline_mode<synchronous>, transform_indices = @transform_2, window_bounds = array<i64: 1, 128>}, {pipeline_mode = #tpu.pipeline_mode<synchronous>, transform_indices = @transform_3, window_bounds = array<i64: 128, 256>}, {pipeline_mode = #tpu.pipeline_mode<synchronous>, transform_indices = @transform_4, window_bounds = array<i64: 1, 256>}, {pipeline_mode = #tpu.pipeline_mode<synchronous>, transform_indices = @transform_5, window_bounds = array<i64: 256, 128>}, {pipeline_mode = #tpu.pipeline_mode<synchronous>, transform_indices = @transform_6, window_bounds = array<i64: 1, 128>}, {pipeline_mode = #tpu.pipeline_mode<synchronous>, transform_indices = @transform_7, window_bounds = array<i64: 128, 128>}, {pipeline_mode = #tpu.pipeline_mode<synchronous>, transform_indices = @transform_8, window_bounds = array<i64: 1, 128>}, {transform_indices = @transform_9, window_bounds = array<i64: 512, 128>}]} {
    %c0 = arith.constant 0 : index
    %c0_0 = arith.constant 0 : index
    %0 = vector.load %arg1[%c0, %c0_0] : memref<512x32xf32, #tpu.memory_space<vmem>>, vector<512x32xf32>
    %1 = arith.truncf %0 : vector<512x32xf32> to vector<512x32xbf16>
    %c0_1 = arith.constant 0 : index
    %c0_2 = arith.constant 0 : index
    %2 = vector.load %arg2[%c0_1, %c0_2] : memref<32x128xbf16, #tpu.memory_space<vmem>>, vector<32x128xbf16>
    %cst = arith.constant dense<0.000000e+00> : vector<512x128xf32>
    %3 = tpu.matmul %1, %2, %cst {dimension_numbers = #tpu.dot_dimension_numbers<[1], [0], [0], [1], [0, 0, 1, 1], [], []>} : vector<512x32xbf16>, vector<32x128xbf16>, vector<512x128xf32> -> vector<512x128xf32>
    %c0_3 = arith.constant 0 : index
    %c0_4 = arith.constant 0 : index
    %4 = vector.load %arg3[%c0_3, %c0_4] : memref<1x128xf32, #tpu.memory_space<vmem>>, vector<1x128xf32>
    %5 = vector.broadcast %4 : vector<1x128xf32> to vector<512x128xf32>
    %6 = arith.addf %3, %5 : vector<512x128xf32>
    %cst_5 = arith.constant 0.00999999977 : f32
    %7 = vector.broadcast %cst_5 : f32 to vector<512x128xf32>
    %8 = arith.mulf %7, %6 : vector<512x128xf32>
    %9 = arith.maximumf %6, %8 : vector<512x128xf32>
    %10 = arith.truncf %9 : vector<512x128xf32> to vector<512x128xbf16>
    %c0_6 = arith.constant 0 : index
    %c0_7 = arith.constant 0 : index
    %11 = vector.load %arg4[%c0_6, %c0_7] : memref<128x256xbf16, #tpu.memory_space<vmem>>, vector<128x256xbf16>
    %cst_8 = arith.constant dense<0.000000e+00> : vector<512x256xf32>
    %12 = tpu.matmul %10, %11, %cst_8 {dimension_numbers = #tpu.dot_dimension_numbers<[1], [0], [0], [1], [0, 0, 1, 1], [], []>} : vector<512x128xbf16>, vector<128x256xbf16>, vector<512x256xf32> -> vector<512x256xf32>
    %c0_9 = arith.constant 0 : index
    %c0_10 = arith.constant 0 : index
    %13 = vector.load %arg5[%c0_9, %c0_10] : memref<1x256xf32, #tpu.memory_space<vmem>>, vector<1x256xf32>
    %14 = vector.broadcast %13 : vector<1x256xf32> to vector<512x256xf32>
    %15 = arith.addf %12, %14 : vector<512x256xf32>
    %cst_11 = arith.constant 0.00999999977 : f32
    %16 = vector.broadcast %cst_11 : f32 to vector<512x256xf32>
    %17 = arith.mulf %16, %15 : vector<512x256xf32>
    %18 = arith.maximumf %15, %17 : vector<512x256xf32>
    %19 = arith.truncf %18 : vector<512x256xf32> to vector<512x256xbf16>
    %c0_12 = arith.constant 0 : index
    %c0_13 = arith.constant 0 : index
    %20 = vector.load %arg6[%c0_12, %c0_13] : memref<256x128xbf16, #tpu.memory_space<vmem>>, vector<256x128xbf16>
    %cst_14 = arith.constant dense<0.000000e+00> : vector<512x128xf32>
    %21 = tpu.matmul %19, %20, %cst_14 {dimension_numbers = #tpu.dot_dimension_numbers<[1], [0], [0], [1], [0, 0, 1, 1], [], []>} : vector<512x256xbf16>, vector<256x128xbf16>, vector<512x128xf32> -> vector<512x128xf32>
    %c0_15 = arith.constant 0 : index
    %c0_16 = arith.constant 0 : index
    %22 = vector.load %arg7[%c0_15, %c0_16] : memref<1x128xf32, #tpu.memory_space<vmem>>, vector<1x128xf32>
    %23 = vector.broadcast %22 : vector<1x128xf32> to vector<512x128xf32>
    %24 = arith.addf %21, %23 : vector<512x128xf32>
    %cst_17 = arith.constant 0.00999999977 : f32
    %25 = vector.broadcast %cst_17 : f32 to vector<512x128xf32>
    %26 = arith.mulf %25, %24 : vector<512x128xf32>
    %27 = arith.maximumf %24, %26 : vector<512x128xf32>
    %28 = arith.truncf %27 : vector<512x128xf32> to vector<512x128xbf16>
    %c0_18 = arith.constant 0 : index
    %c0_19 = arith.constant 0 : index
    %29 = vector.load %arg8[%c0_18, %c0_19] : memref<128x128xbf16, #tpu.memory_space<vmem>>, vector<128x128xbf16>
    %cst_20 = arith.constant dense<0.000000e+00> : vector<512x128xf32>
    %30 = tpu.matmul %28, %29, %cst_20 {dimension_numbers = #tpu.dot_dimension_numbers<[1], [0], [0], [1], [0, 0, 1, 1], [], []>} : vector<512x128xbf16>, vector<128x128xbf16>, vector<512x128xf32> -> vector<512x128xf32>
    %c0_21 = arith.constant 0 : index
    %c0_22 = arith.constant 0 : index
    %31 = vector.load %arg9[%c0_21, %c0_22] : memref<1x128xf32, #tpu.memory_space<vmem>>, vector<1x128xf32>
    %32 = vector.broadcast %31 : vector<1x128xf32> to vector<512x128xf32>
    %33 = arith.addf %30, %32 : vector<512x128xf32>
    %34 = arith.negf %33 : vector<512x128xf32>
    %35 = math.exp %34 : vector<512x128xf32>
    %cst_23 = arith.constant 1.000000e+00 : f32
    %36 = vector.broadcast %cst_23 : f32 to vector<512x128xf32>
    %37 = arith.addf %36, %35 : vector<512x128xf32>
    %38 = arith.divf %36, %37 : vector<512x128xf32>
    %c0_24 = arith.constant 0 : index
    %c0_25 = arith.constant 0 : index
    %39 = vector.load %arg10[%c0_24, %c0_25] : memref<512x128xf32, #tpu.memory_space<vmem>>, vector<512x128xf32>
    tpu.vector_store %arg10[%c0_24, %c0_25], %38 {strides = array<i32>} : memref<512x128xf32, #tpu.memory_space<vmem>>, vector<512x128xf32>,
    return
  }
  func.func @transform_0(%arg0: i32) -> (i32, i32) {
    %c0_i32 = arith.constant 0 : i32
    %c0_i32_0 = arith.constant 0 : i32
    return %arg0, %c0_i32 : i32, i32
  }
  func.func @transform_1(%arg0: i32) -> (i32, i32) {
    %c0_i32 = arith.constant 0 : i32
    %c0_i32_0 = arith.constant 0 : i32
    %c0_i32_1 = arith.constant 0 : i32
    return %c0_i32, %c0_i32_0 : i32, i32
  }
  func.func @transform_2(%arg0: i32) -> (i32, i32) {
    %c0_i32 = arith.constant 0 : i32
    %c0_i32_0 = arith.constant 0 : i32
    %c0_i32_1 = arith.constant 0 : i32
    return %c0_i32, %c0_i32_0 : i32, i32
  }
  func.func @transform_3(%arg0: i32) -> (i32, i32) {
    %c0_i32 = arith.constant 0 : i32
    %c0_i32_0 = arith.constant 0 : i32
    %c0_i32_1 = arith.constant 0 : i32
    return %c0_i32, %c0_i32_0 : i32, i32
  }
  func.func @transform_4(%arg0: i32) -> (i32, i32) {
    %c0_i32 = arith.constant 0 : i32
    %c0_i32_0 = arith.constant 0 : i32
    %c0_i32_1 = arith.constant 0 : i32
    return %c0_i32, %c0_i32_0 : i32, i32
  }
  func.func @transform_5(%arg0: i32) -> (i32, i32) {
    %c0_i32 = arith.constant 0 : i32
    %c0_i32_0 = arith.constant 0 : i32
    %c0_i32_1 = arith.constant 0 : i32
    return %c0_i32, %c0_i32_0 : i32, i32
  }
  func.func @transform_6(%arg0: i32) -> (i32, i32) {
    %c0_i32 = arith.constant 0 : i32
    %c0_i32_0 = arith.constant 0 : i32
    %c0_i32_1 = arith.constant 0 : i32
    return %c0_i32, %c0_i32_0 : i32, i32
  }
  func.func @transform_7(%arg0: i32) -> (i32, i32) {
    %c0_i32 = arith.constant 0 : i32
    %c0_i32_0 = arith.constant 0 : i32
    %c0_i32_1 = arith.constant 0 : i32
    return %c0_i32, %c0_i32_0 : i32, i32
  }
  func.func @transform_8(%arg0: i32) -> (i32, i32) {
    %c0_i32 = arith.constant 0 : i32
    %c0_i32_0 = arith.constant 0 : i32
    %c0_i32_1 = arith.constant 0 : i32
    return %c0_i32, %c0_i32_0 : i32, i32
  }
  func.func @transform_9(%arg0: i32) -> (i32, i32) {
    %c0_i32 = arith.constant 0 : i32
    %c0_i32_0 = arith.constant 0 : i32
    return %arg0, %c0_i32 : i32, i32
  }
}

</mosaic_0001>

<llo_original>
// kernel: tpu_custom_call.1
$region0: #{tpu_custom_call.1}
  #allocation0 [shape = 'u32[]', space=smem, size = 0x4, offset = 0x4, fixed_abs, tag = 'smem constant byte address 0x4 - core index']
  #allocation1 [shape = 'u32[72,128]{1,0:T(1,128)}', space=vmem, size = 0x9000, scoped, tag = 'internal scratch']
  %s0 = inlined_call_operand.vmem [shape: f32[1024,32], index: 0, kind: input, shape index: {}]
  %s1 = inlined_call_operand.vmem [shape: bf16[32,128], index: 1, kind: input, shape index: {}]
  %s2 = inlined_call_operand.vmem [shape: f32[1,128], index: 2, kind: input, shape index: {}]
  %s3 = inlined_call_operand.vmem [shape: bf16[128,256], index: 3, kind: input, shape index: {}]
  %s4 = inlined_call_operand.vmem [shape: f32[1,256], index: 4, kind: input, shape index: {}]
  %s5 = inlined_call_operand.vmem [shape: bf16[256,128], index: 5, kind: input, shape index: {}]
  %s6 = inlined_call_operand.vmem [shape: f32[1,128], index: 6, kind: input, shape index: {}]
  %s7 = inlined_call_operand.vmem [shape: bf16[128,128], index: 7, kind: input, shape index: {}]
  %s8 = inlined_call_operand.vmem [shape: f32[1,128], index: 8, kind: input, shape index: {}]
  %s9 = inlined_call_operand.hbm [shape: f32[1024,128], index: 9, kind: output, shape index: {}]
  %s10 = sld [smem:[#allocation0]]
  $region69: #{tpu_custom_call.1} parent=0
    _
  %s12 = ssub.s32 1, %s10
  %s13 = scalar_select 0, %s12, %s10
  $region1: #{tpu_custom_call.1} parent=0
    #allocation2 [shape = 'u8[524288]{0}', space=vmem, size = 0x80000, scoped, tag = 'output window, operand 0']
    #allocation3 [shape = 's32[2]{0}', space=sflag, size = 0x8, scoped, tag = 'scoped memory for tpu_custom_call.1']
    %14 = vsyncpa [#allocation3], 0
    %s15 = scalar_lea.sflag [#allocation3], 1
    %16 = vsyncpa %s15, 0
    loop: start=0, step=1, limit=4
    $region2: #{tpu_custom_call.1} parent=1 // loop_pre_header
      _
    $region3: #{tpu_custom_call.1} parent=1 // loop_header
      %s18 = sphi 0, %s22
      %p19 = scmp.ge.s32.totalorder %s18, 4
      %s28 = sphi 0, %s30
      %s31 = sphi 0, %s28
      %s32 = sphi 0, %s31
      %s48 = sphi 0, %s32
      %s52 = sphi 0, %s52
      %s54 = sphi 0, %s52
      %s55 = sphi 0, %s54
      %s69 = sphi 0, %s55
      %s73 = sphi 0, %s73
      %s75 = sphi 0, %s73
      %s76 = sphi 0, %s75
      %s90 = sphi 0, %s76
      %s94 = sphi 0, %s94
      %s96 = sphi 0, %s94
      %s97 = sphi 0, %s96
      %s111 = sphi 0, %s97
      %s115 = sphi 0, %s115
      %s117 = sphi 0, %s115
      %s118 = sphi 0, %s117
      %s132 = sphi 0, %s118
      %s136 = sphi 0, %s136
      %s138 = sphi 0, %s136
      %s139 = sphi 0, %s138
      %s153 = sphi 0, %s139
      %s157 = sphi 0, %s157
      %s159 = sphi 0, %s157
      %s160 = sphi 0, %s159
      %s174 = sphi 0, %s160
      %s178 = sphi 0, %s178
      %s180 = sphi 0, %s178
      %s181 = sphi 0, %s180
      %s195 = sphi 0, %s181
      %s199 = sphi 0, %s199
      %s201 = sphi 0, %s199
      %s202 = sphi 0, %s201
      %s216 = sphi 0, %s202
      %s222 = sphi 0, %s224
      %s225 = sphi 0, %s222
      %s226 = sphi 0, %s225
      %s242 = sphi 0, %s226
    $region4: #{tpu_custom_call.1} parent=1 // loop_header_branch
      %21 = sbr.rel (%p19) target = $region8
    $region5: #{tpu_custom_call.1} parent=1 // loop_body
      %s23 = ssub.s32 %s18, 1
      %s24 = ssub.s32 %s18, 2
      %s25 = sadd.s32 %s18, 1
      %s26 = ssub.s32 %s18, %s25
      %p27 = scmp.eq.s32.totalorder %s26, 0
      %s29 = sadd.s32 %s28, 1
      %s30 = scalar_select %p27, %s28, %s29
      %p33 = pneg %p27
      %p34 = scmp.eq.s32.totalorder %s18, 1
      %p35 = por %p33, %p34
      %p36 = scmp.ne.s32.totalorder %s28, %s31
      %p37 = scmp.eq.s32.totalorder %s18, 0
      %p38 = por %p36, %p37
      %p39 = scmp.ne.s32.totalorder %s28, %s31
      %p40 = scmp.eq.s32.totalorder %s23, 1
      %p41 = por %p39, %p40
      %p42 = scmp.ne.s32.totalorder %s31, %s32
      %p43 = scmp.eq.s32.totalorder %s23, 0
      %p44 = por %p42, %p43
      %p45 = scmp.ne.s32.totalorder %s31, %s32
      %p46 = scmp.eq.s32.totalorder %s24, 1
      %p47 = por %p45, %p46
      %p49 = scmp.ne.s32.totalorder %s32, %s48
      %p50 = scmp.eq.s32.totalorder %s24, 0
      %p51 = por %p49, %p50
      %s53 = sadd.s32 %s52, 1
      %p56 = scmp.eq.s32.totalorder %s18, 1
      %p57 = scmp.ne.s32.totalorder %s52, %s54
      %p58 = scmp.eq.s32.totalorder %s18, 0
      %p59 = por %p57, %p58
      %p60 = scmp.ne.s32.totalorder %s52, %s54
      %p61 = scmp.eq.s32.totalorder %s23, 1
      %p62 = por %p60, %p61
      %p63 = scmp.ne.s32.totalorder %s54, %s55
      %p64 = scmp.eq.s32.totalorder %s23, 0
      %p65 = por %p63, %p64
      %p66 = scmp.ne.s32.totalorder %s54, %s55
      %p67 = scmp.eq.s32.totalorder %s24, 1
      %p68 = por %p66, %p67
      %p70 = scmp.ne.s32.totalorder %s55, %s69
      %p71 = scmp.eq.s32.totalorder %s24, 0
      %p72 = por %p70, %p71
      %s74 = sadd.s32 %s73, 1
      %p77 = scmp.eq.s32.totalorder %s18, 1
      %p78 = scmp.ne.s32.totalorder %s73, %s75
      %p79 = scmp.eq.s32.totalorder %s18, 0
      %p80 = por %p78, %p79
      %p81 = scmp.ne.s32.totalorder %s73, %s75
      %p82 = scmp.eq.s32.totalorder %s23, 1
      %p83 = por %p81, %p82
      %p84 = scmp.ne.s32.totalorder %s75, %s76
      %p85 = scmp.eq.s32.totalorder %s23, 0
      %p86 = por %p84, %p85
      %p87 = scmp.ne.s32.totalorder %s75, %s76
      %p88 = scmp.eq.s32.totalorder %s24, 1
      %p89 = por %p87, %p88
      %p91 = scmp.ne.s32.totalorder %s76, %s90
      %p92 = scmp.eq.s32.totalorder %s24, 0
      %p93 = por %p91, %p92
      %s95 = sadd.s32 %s94, 1
      %p98 = scmp.eq.s32.totalorder %s18, 1
      %p99 = scmp.ne.s32.totalorder %s94, %s96
      %p100 = scmp.eq.s32.totalorder %s18, 0
      %p101 = por %p99, %p100
      %p102 = scmp.ne.s32.totalorder %s94, %s96
      %p103 = scmp.eq.s32.totalorder %s23, 1
      %p104 = por %p102, %p103
      %p105 = scmp.ne.s32.totalorder %s96, %s97
      %p106 = scmp.eq.s32.totalorder %s23, 0
      %p107 = por %p105, %p106
      %p108 = scmp.ne.s32.totalorder %s96, %s97
      %p109 = scmp.eq.s32.totalorder %s24, 1
      %p110 = por %p108, %p109
      %p112 = scmp.ne.s32.totalorder %s97, %s111
      %p113 = scmp.eq.s32.totalorder %s24, 0
      %p114 = por %p112, %p113
      %s116 = sadd.s32 %s115, 1
      %p119 = scmp.eq.s32.totalorder %s18, 1
      %p120 = scmp.ne.s32.totalorder %s115, %s117
      %p121 = scmp.eq.s32.totalorder %s18, 0
      %p122 = por %p120, %p121
      %p123 = scmp.ne.s32.totalorder %s115, %s117
      %p124 = scmp.eq.s32.totalorder %s23, 1
      %p125 = por %p123, %p124
      %p126 = scmp.ne.s32.totalorder %s117, %s118
      %p127 = scmp.eq.s32.totalorder %s23, 0
      %p128 = por %p126, %p127
      %p129 = scmp.ne.s32.totalorder %s117, %s118
      %p130 = scmp.eq.s32.totalorder %s24, 1
      %p131 = por %p129, %p130
      %p133 = scmp.ne.s32.totalorder %s118, %s132
      %p134 = scmp.eq.s32.totalorder %s24, 0
      %p135 = por %p133, %p134
      %s137 = sadd.s32 %s136, 1
      %p140 = scmp.eq.s32.totalorder %s18, 1
      %p141 = scmp.ne.s32.totalorder %s136, %s138
      %p142 = scmp.eq.s32.totalorder %s18, 0
      %p143 = por %p141, %p142
      %p144 = scmp.ne.s32.totalorder %s136, %s138
      %p145 = scmp.eq.s32.totalorder %s23, 1
      %p146 = por %p144, %p145
      %p147 = scmp.ne.s32.totalorder %s138, %s139
      %p148 = scmp.eq.s32.totalorder %s23, 0
      %p149 = por %p147, %p148
      %p150 = scmp.ne.s32.totalorder %s138, %s139
      %p151 = scmp.eq.s32.totalorder %s24, 1
      %p152 = por %p150, %p151
      %p154 = scmp.ne.s32.totalorder %s139, %s153
      %p155 = scmp.eq.s32.totalorder %s24, 0
      %p156 = por %p154, %p155
      %s158 = sadd.s32 %s157, 1
      %p161 = scmp.eq.s32.totalorder %s18, 1
      %p162 = scmp.ne.s32.totalorder %s157, %s159
      %p163 = scmp.eq.s32.totalorder %s18, 0
      %p164 = por %p162, %p163
      %p165 = scmp.ne.s32.totalorder %s157, %s159
      %p166 = scmp.eq.s32.totalorder %s23, 1
      %p167 = por %p165, %p166
      %p168 = scmp.ne.s32.totalorder %s159, %s160
      %p169 = scmp.eq.s32.totalorder %s23, 0
      %p170 = por %p168, %p169
      %p171 = scmp.ne.s32.totalorder %s159, %s160
      %p172 = scmp.eq.s32.totalorder %s24, 1
      %p173 = por %p171, %p172
      %p175 = scmp.ne.s32.totalorder %s160, %s174
      %p176 = scmp.eq.s32.totalorder %s24, 0
      %p177 = por %p175, %p176
      %s179 = sadd.s32 %s178, 1
      %p182 = scmp.eq.s32.totalorder %s18, 1
      %p183 = scmp.ne.s32.totalorder %s178, %s180
      %p184 = scmp.eq.s32.totalorder %s18, 0
      %p185 = por %p183, %p184
      %p186 = scmp.ne.s32.totalorder %s178, %s180
      %p187 = scmp.eq.s32.totalorder %s23, 1
      %p188 = por %p186, %p187
      %p189 = scmp.ne.s32.totalorder %s180, %s181
      %p190 = scmp.eq.s32.totalorder %s23, 0
      %p191 = por %p189, %p190
      %p192 = scmp.ne.s32.totalorder %s180, %s181
      %p193 = scmp.eq.s32.totalorder %s24, 1
      %p194 = por %p192, %p193
      %p196 = scmp.ne.s32.totalorder %s181, %s195
      %p197 = scmp.eq.s32.totalorder %s24, 0
      %p198 = por %p196, %p197
      %s200 = sadd.s32 %s199, 1
      %p203 = scmp.eq.s32.totalorder %s18, 1
      %p204 = scmp.ne.s32.totalorder %s199, %s201
      %p205 = scmp.eq.s32.totalorder %s18, 0
      %p206 = por %p204, %p205
      %p207 = scmp.ne.s32.totalorder %s199, %s201
      %p208 = scmp.eq.s32.totalorder %s23, 1
      %p209 = por %p207, %p208
      %p210 = scmp.ne.s32.totalorder %s201, %s202
      %p211 = scmp.eq.s32.totalorder %s23, 0
      %p212 = por %p210, %p211
      %p213 = scmp.ne.s32.totalorder %s201, %s202
      %p214 = scmp.eq.s32.totalorder %s24, 1
      %p215 = por %p213, %p214
      %p217 = scmp.ne.s32.totalorder %s202, %s216
      %p218 = scmp.eq.s32.totalorder %s24, 0
      %p219 = por %p217, %p218
      %s220 = ssub.s32 %s18, %s25
      %p221 = scmp.eq.s32.totalorder %s220, 0
      %s223 = sadd.s32 %s222, 1
      %s224 = scalar_select %p221, %s222, %s223
      %p227 = pneg %p221
      %p228 = scmp.eq.s32.totalorder %s18, 1
      %p229 = por %p227, %p228
      %p230 = scmp.ne.s32.totalorder %s222, %s225
      %p231 = scmp.eq.s32.totalorder %s18, 0
      %p232 = por %p230, %p231
      %p233 = scmp.ne.s32.totalorder %s222, %s225
      %p234 = scmp.eq.s32.totalorder %s23, 1
      %p235 = por %p233, %p234
      %p236 = scmp.ne.s32.totalorder %s225, %s226
      %p237 = scmp.eq.s32.totalorder %s23, 0
      %p238 = por %p236, %p237
      %p239 = scmp.ne.s32.totalorder %s225, %s226
      %p240 = scmp.eq.s32.totalorder %s24, 1
      %p241 = por %p239, %p240
      %p243 = scmp.ne.s32.totalorder %s226, %s242
      %p244 = scmp.eq.s32.totalorder %s24, 0
      %p245 = por %p243, %p244
      %p246 = scmp.le.s32.totalorder 1, %s18
      %p247 = scmp.lt.s32.totalorder %s18, 3
      %p248 = pnand %p246, %p247
      %p249 = pneg %p248
      // Predicated region
      $region9: #{tpu_custom_call.1} parent=5 // pred_check
        _
      $region10: #{tpu_custom_call.1} parent=5 // pred_check_branch
        %251 = sbr.rel (%p248) target = $region12
      $region11: #{tpu_custom_call.1} parent=5 // pred_region
        %s252 = ssub.s32 %s18, 1
        // Predicated region
        $region13: #{tpu_custom_call.1} parent=11 // pred_check
          %p253 = pneg %p65
        $region14: #{tpu_custom_call.1} parent=11 // pred_check_branch
          %255 = sbr.rel (%p253) target = $region16
        $region15: #{tpu_custom_call.1} parent=11 // pred_region
          _
        $region16: #{tpu_custom_call.1} parent=11 // pred_fallthru
          _
        // Predicated region
        $region17: #{tpu_custom_call.1} parent=11 // pred_check
          %p256 = pneg %p86
        $region18: #{tpu_custom_call.1} parent=11 // pred_check_branch
          %258 = sbr.rel (%p256) target = $region20
        $region19: #{tpu_custom_call.1} parent=11 // pred_region
          _
        $region20: #{tpu_custom_call.1} parent=11 // pred_fallthru
          _
        // Predicated region
        $region21: #{tpu_custom_call.1} parent=11 // pred_check
          %p259 = pneg %p107
        $region22: #{tpu_custom_call.1} parent=11 // pred_check_branch
          %261 = sbr.rel (%p259) target = $region24
        $region23: #{tpu_custom_call.1} parent=11 // pred_region
          _
        $region24: #{tpu_custom_call.1} parent=11 // pred_fallthru
          _
        // Predicated region
        $region25: #{tpu_custom_call.1} parent=11 // pred_check
          %p262 = pneg %p128
        $region26: #{tpu_custom_call.1} parent=11 // pred_check_branch
          %264 = sbr.rel (%p262) target = $region28
        $region27: #{tpu_custom_call.1} parent=11 // pred_region
          _
        $region28: #{tpu_custom_call.1} parent=11 // pred_fallthru
          _
        // Predicated region
        $region29: #{tpu_custom_call.1} parent=11 // pred_check
          %p265 = pneg %p149
        $region30: #{tpu_custom_call.1} parent=11 // pred_check_branch
          %267 = sbr.rel (%p265) target = $region32
        $region31: #{tpu_custom_call.1} parent=11 // pred_region
          _
        $region32: #{tpu_custom_call.1} parent=11 // pred_fallthru
          _
        // Predicated region
        $region33: #{tpu_custom_call.1} parent=11 // pred_check
          %p268 = pneg %p170
        $region34: #{tpu_custom_call.1} parent=11 // pred_check_branch
          %270 = sbr.rel (%p268) target = $region36
        $region35: #{tpu_custom_call.1} parent=11 // pred_region
          _
        $region36: #{tpu_custom_call.1} parent=11 // pred_fallthru
          _
        // Predicated region
        $region37: #{tpu_custom_call.1} parent=11 // pred_check
          %p271 = pneg %p191
        $region38: #{tpu_custom_call.1} parent=11 // pred_check_branch
          %273 = sbr.rel (%p271) target = $region40
        $region39: #{tpu_custom_call.1} parent=11 // pred_region
          _
        $region40: #{tpu_custom_call.1} parent=11 // pred_fallthru
          _
        // Predicated region
        $region41: #{tpu_custom_call.1} parent=11 // pred_check
          %p274 = pneg %p212
        $region42: #{tpu_custom_call.1} parent=11 // pred_check_branch
          %276 = sbr.rel (%p274) target = $region44
        $region43: #{tpu_custom_call.1} parent=11 // pred_region
          _
        $region44: #{tpu_custom_call.1} parent=11 // pred_fallthru
          _
      $region12: #{tpu_custom_call.1} parent=5 // pred_fallthru
        _
      %p277 = scmp.lt.s32.totalorder %s18, 2
      // Predicated region
      $region45: #{tpu_custom_call.1} parent=5 // pred_check
        %p278 = pneg %p277
      $region46: #{tpu_custom_call.1} parent=5 // pred_check_branch
        %280 = sbr.rel (%p278) target = $region48
      $region47: #{tpu_custom_call.1} parent=5 // pred_region
        // Predicated region
        $region49: #{tpu_custom_call.1} parent=47 // pred_check
          %p281 = pneg %p38
        $region50: #{tpu_custom_call.1} parent=47 // pred_check_branch
          %283 = sbr.rel (%p281) target = $region52
        $region51: #{tpu_custom_call.1} parent=47 // pred_region
          %s284 = smul.u32 64, %s18
          %p285 = scmp.lt.s32.totalorder %s284, 127
          %s286 = scalar_select %p285, %s284, 127
          %s287 = smul.addr %s286, 8
          %s288 = scalar_lea.vmem %s0, %s287
          %s289 = smul.u32 64, %s18
        $region52: #{tpu_custom_call.1} parent=47 // pred_fallthru
          _
      $region48: #{tpu_custom_call.1} parent=5 // pred_fallthru
        _
      %p290 = scmp.le.s32.totalorder 1, %s18
      %p291 = scmp.lt.s32.totalorder %s18, 3
      %p292 = pnand %p290, %p291
      %p293 = pneg %p292
      // Predicated region
      $region53: #{tpu_custom_call.1} parent=5 // pred_check
        _
      $region54: #{tpu_custom_call.1} parent=5 // pred_check_branch
        %295 = sbr.rel (%p292) target = $region56
      $region55: #{tpu_custom_call.1} parent=5 // pred_region
        %s296 = ssub.s32 %s18, 1
        %s297 = smul.u32 64, %s23
        %p298 = scmp.lt.s32.totalorder %s297, 127
        %s299 = scalar_select %p298, %s297, 127
        %s300 = smul.addr %s299, 8
        %s301 = scalar_lea.vmem %s0, %s300
        %p302 = pneg %p44
        %p303 = pneg %p41
        %p304 = pneg %p65
        %p305 = pneg %p62
        %p306 = pneg %p86
        %p307 = pneg %p83
        %p308 = pneg %p107
        %p309 = pneg %p104
        %p310 = pneg %p128
        %p311 = pneg %p125
        %p312 = pneg %p149
        %p313 = pneg %p146
        %p314 = pneg %p170
        %p315 = pneg %p167
        %p316 = pneg %p191
        %p317 = pneg %p188
        %p318 = pneg %p212
        %p319 = pneg %p209
        %p320 = pneg %p238
        %p321 = pneg %p235
        %s322 = sand.u32 %s225, 1
        %s323 = scalar_lea.sflag [#allocation3], %s322
        %s324 = sand.u32 %s225, 1
        %s325 = smul.addr %s324, 512
        %s326 = scalar_lea.vmem [#allocation2], %s325
        %s327 = smul.u32 64, %s23
        %p328 = scmp.lt.s32.totalorder %s327, 127
        %s329 = scalar_select %p328, %s327, 127
        %s330 = smul.addr %s329, 8
        %s331 = scalar_lea.vmem %s0, %s330
        %s332 = smul.u32 64, %s23
        %s333 = smul.u32 64, %s23
        %v335 = vld [vmem:[%s331] sm:$0xff]
        %v336 = vld [vmem:[%s331 + $0x8] sm:$0xff]
        %v337 = vld [vmem:[%s331 + $0x10] sm:$0xff]
        %v338 = vld [vmem:[%s331 + $0x18] sm:$0xff]
        %v339 = vld [vmem:[%s331 + $0x20] sm:$0xff]
        %v340 = vld [vmem:[%s331 + $0x28] sm:$0xff]
        %v341 = vld [vmem:[%s331 + $0x30] sm:$0xff]
        %v342 = vld [vmem:[%s331 + $0x38] sm:$0xff]
        %v343 = vld [vmem:[%s331 + $0x40] sm:$0xff]
        %v344 = vld [vmem:[%s331 + $0x48] sm:$0xff]
        %v345 = vld [vmem:[%s331 + $0x50] sm:$0xff]
        %v346 = vld [vmem:[%s331 + $0x58] sm:$0xff]
        %v347 = vld [vmem:[%s331 + $0x60] sm:$0xff]
        %v348 = vld [vmem:[%s331 + $0x68] sm:$0xff]
        %v349 = vld [vmem:[%s331 + $0x70] sm:$0xff]
        %v350 = vld [vmem:[%s331 + $0x78] sm:$0xff]
        %v351 = vld [vmem:[%s331 + $0x80] sm:$0xff]
        %v352 = vld [vmem:[%s331 + $0x88] sm:$0xff]
        %v353 = vld [vmem:[%s331 + $0x90] sm:$0xff]
        %v354 = vld [vmem:[%s331 + $0x98] sm:$0xff]
        %v355 = vld [vmem:[%s331 + $0xa0] sm:$0xff]
        %v356 = vld [vmem:[%s331 + $0xa8] sm:$0xff]
        %v357 = vld [vmem:[%s331 + $0xb0] sm:$0xff]
        %v358 = vld [vmem:[%s331 + $0xb8] sm:$0xff]
        %v359 = vld [vmem:[%s331 + $0xc0] sm:$0xff]
        %v360 = vld [vmem:[%s331 + $0xc8] sm:$0xff]
        %v361 = vld [vmem:[%s331 + $0xd0] sm:$0xff]
        %v362 = vld [vmem:[%s331 + $0xd8] sm:$0xff]
        %v363 = vld [vmem:[%s331 + $0xe0] sm:$0xff]
        %v364 = vld [vmem:[%s331 + $0xe8] sm:$0xff]
        %v365 = vld [vmem:[%s331 + $0xf0] sm:$0xff]
        %v366 = vld [vmem:[%s331 + $0xf8] sm:$0xff]
        %v367 = vld [vmem:[%s331 + $0x100] sm:$0xff]
        %v368 = vld [vmem:[%s331 + $0x108] sm:$0xff]
        %v369 = vld [vmem:[%s331 + $0x110] sm:$0xff]
        %v370 = vld [vmem:[%s331 + $0x118] sm:$0xff]
        %v371 = vld [vmem:[%s331 + $0x120] sm:$0xff]
        %v372 = vld [vmem:[%s331 + $0x128] sm:$0xff]
        %v373 = vld [vmem:[%s331 + $0x130] sm:$0xff]
        %v374 = vld [vmem:[%s331 + $0x138] sm:$0xff]
        %v375 = vld [vmem:[%s331 + $0x140] sm:$0xff]
        %v376 = vld [vmem:[%s331 + $0x148] sm:$0xff]
        %v377 = vld [vmem:[%s331 + $0x150] sm:$0xff]
        %v378 = vld [vmem:[%s331 + $0x158] sm:$0xff]
        %v379 = vld [vmem:[%s331 + $0x160] sm:$0xff]
        %v380 = vld [vmem:[%s331 + $0x168] sm:$0xff]
        %v381 = vld [vmem:[%s331 + $0x170] sm:$0xff]
        %v382 = vld [vmem:[%s331 + $0x178] sm:$0xff]
        %v383 = vld [vmem:[%s331 + $0x180] sm:$0xff]
        %v384 = vld [vmem:[%s331 + $0x188] sm:$0xff]
        %v385 = vld [vmem:[%s331 + $0x190] sm:$0xff]
        %v386 = vld [vmem:[%s331 + $0x198] sm:$0xff]
        %v387 = vld [vmem:[%s331 + $0x1a0] sm:$0xff]
        %v388 = vld [vmem:[%s331 + $0x1a8] sm:$0xff]
        %v389 = vld [vmem:[%s331 + $0x1b0] sm:$0xff]
        %v390 = vld [vmem:[%s331 + $0x1b8] sm:$0xff]
        %v391 = vld [vmem:[%s331 + $0x1c0] sm:$0xff]
        %v392 = vld [vmem:[%s331 + $0x1c8] sm:$0xff]
        %v393 = vld [vmem:[%s331 + $0x1d0] sm:$0xff]
        %v394 = vld [vmem:[%s331 + $0x1d8] sm:$0xff]
        %v395 = vld [vmem:[%s331 + $0x1e0] sm:$0xff]
        %v396 = vld [vmem:[%s331 + $0x1e8] sm:$0xff]
        %v397 = vld [vmem:[%s331 + $0x1f0] sm:$0xff]
        %v398 = vld [vmem:[%s331 + $0x1f8] sm:$0xff]
        %v399 = vpack.c.bf16 %v336, %v335
        %v400 = vpack.c.bf16 %v338, %v337
        %v401 = vpack.c.bf16 %v340, %v339
        %v402 = vpack.c.bf16 %v342, %v341
        %v403 = vpack.c.bf16 %v344, %v343
        %v404 = vpack.c.bf16 %v346, %v345
        %v405 = vpack.c.bf16 %v348, %v347
        %v406 = vpack.c.bf16 %v350, %v349
        %v407 = vpack.c.bf16 %v352, %v351
        %v408 = vpack.c.bf16 %v354, %v353
        %v409 = vpack.c.bf16 %v356, %v355
        %v410 = vpack.c.bf16 %v358, %v357
        %v411 = vpack.c.bf16 %v360, %v359
        %v412 = vpack.c.bf16 %v362, %v361
        %v413 = vpack.c.bf16 %v364, %v363
        %v414 = vpack.c.bf16 %v366, %v365
        %v415 = vpack.c.bf16 %v368, %v367
        %v416 = vpack.c.bf16 %v370, %v369
        %v417 = vpack.c.bf16 %v372, %v371
        %v418 = vpack.c.bf16 %v374, %v373
        %v419 = vpack.c.bf16 %v376, %v375
        %v420 = vpack.c.bf16 %v378, %v377
        %v421 = vpack.c.bf16 %v380, %v379
        %v422 = vpack.c.bf16 %v382, %v381
        %v423 = vpack.c.bf16 %v384, %v383
        %v424 = vpack.c.bf16 %v386, %v385
        %v425 = vpack.c.bf16 %v388, %v387
        %v426 = vpack.c.bf16 %v390, %v389
        %v427 = vpack.c.bf16 %v392, %v391
        %v428 = vpack.c.bf16 %v394, %v393
        %v429 = vpack.c.bf16 %v396, %v395
        %v430 = vpack.c.bf16 %v398, %v397
        %v431 = vld [vmem:[%s1] sm:$0xf]
        %v432 = vld [vmem:[%s1 + $0x4] sm:$0xf]
        %v433 = vld [vmem:[%s1 + $0x8] sm:$0xf]
        %v434 = vld [vmem:[%s1 + $0xc] sm:$0xf]
        %v435 = vld [vmem:[%s2] sm:$0x1]
        %v437 = vperm.slane %v435, 0
        %v443 = vunpack.c.l.b16 %v431
        %v444 = vunpack.c.l.b16 %v432
        %v445 = vunpack.c.l.b16 %v433
        %v446 = vunpack.c.l.b16 %v434
        %v447 = vpack.c.b16 %v444, %v443
        %v448 = vpack.c.b16 %v446, %v445
        %vm451 = vcmask 261120
        %v453 = vsel %vm451, %v399, 0
        %v456 = vsel %vm451, %v400, 0
        %v459 = vsel %vm451, %v401, 0
        %v462 = vsel %vm451, %v402, 0
        %v465 = vsel %vm451, %v403, 0
        %v468 = vsel %vm451, %v404, 0
        %v471 = vsel %vm451, %v405, 0
        %v474 = vsel %vm451, %v406, 0
        %v477 = vsel %vm451, %v407, 0
        %v480 = vsel %vm451, %v408, 0
        %v483 = vsel %vm451, %v409, 0
        %v486 = vsel %vm451, %v410, 0
        %v489 = vsel %vm451, %v411, 0
        %v492 = vsel %vm451, %v412, 0
        %v495 = vsel %vm451, %v413, 0
        %v498 = vsel %vm451, %v414, 0
        %v501 = vsel %vm451, %v415, 0
        %v504 = vsel %vm451, %v416, 0
        %v507 = vsel %vm451, %v417, 0
        %v510 = vsel %vm451, %v418, 0
        %v513 = vsel %vm451, %v419, 0
        %v516 = vsel %vm451, %v420, 0
        %v519 = vsel %vm451, %v421, 0
        %v522 = vsel %vm451, %v422, 0
        %v525 = vsel %vm451, %v423, 0
        %v528 = vsel %vm451, %v424, 0
        %v531 = vsel %vm451, %v425, 0
        %v534 = vsel %vm451, %v426, 0
        %v537 = vsel %vm451, %v427, 0
        %v540 = vsel %vm451, %v428, 0
        %v543 = vsel %vm451, %v429, 0
        %v546 = vsel %vm451, %v430, 0
        %548 = vmatpush.bf16.msra.mxu0 0
        %549 = vmatpush.bf16.msra.mxu0 0
        %550 = vmatpush.bf16.msra.mxu0 0
        %551 = vmatpush.bf16.msra.mxu0 0
        %552 = vmatpush.bf16.msra.mxu0 0
        %553 = vmatpush.bf16.msra.mxu0 0
        %554 = vmatpush.bf16.msra.mxu0 %v448
        %555 = vmatpush.bf16.msra.mxu0 %v447
        %556 = vmatmul.bf16.gmra.mxu0 %v453
        %v557 = vpop.f32.mrf.mxu0
        %v558 = vadd.f32 %v437, %v557
        %v559 = vpop.f32.mrf.mxu0
        %v560 = vadd.f32 %v437, %v559
        %561 = vmatmul.bf16.gmra.mxu0 %v456
        %v562 = vpop.f32.mrf.mxu0
        %v563 = vadd.f32 %v437, %v562
        %v564 = vpop.f32.mrf.mxu0
        %v565 = vadd.f32 %v437, %v564
        %566 = vmatmul.bf16.gmra.mxu0 %v459
        %v567 = vpop.f32.mrf.mxu0
        %v568 = vadd.f32 %v437, %v567
        %v569 = vpop.f32.mrf.mxu0
        %v570 = vadd.f32 %v437, %v569
        %571 = vmatmul.bf16.gmra.mxu0 %v462
        %v572 = vpop.f32.mrf.mxu0
        %v573 = vadd.f32 %v437, %v572
        %v574 = vpop.f32.mrf.mxu0
        %v575 = vadd.f32 %v437, %v574
        %576 = vmatmul.bf16.gmra.mxu0 %v465
        %v577 = vpop.f32.mrf.mxu0
        %v578 = vadd.f32 %v437, %v577
        %v579 = vpop.f32.mrf.mxu0
        %v580 = vadd.f32 %v437, %v579
        %581 = vmatmul.bf16.gmra.mxu0 %v468
        %v582 = vpop.f32.mrf.mxu0
        %v583 = vadd.f32 %v437, %v582
        %v584 = vpop.f32.mrf.mxu0
        %v585 = vadd.f32 %v437, %v584
        %586 = vmatmul.bf16.gmra.mxu0 %v471
        %v587 = vpop.f32.mrf.mxu0
        %v588 = vadd.f32 %v437, %v587
        %v589 = vpop.f32.mrf.mxu0
        %v590 = vadd.f32 %v437, %v589
        %591 = vmatmul.bf16.gmra.mxu0 %v474
        %v592 = vpop.f32.mrf.mxu0
        %v593 = vadd.f32 %v437, %v592
        %v594 = vpop.f32.mrf.mxu0
        %v595 = vadd.f32 %v437, %v594
        %596 = vmatmul.bf16.gmra.mxu0 %v477
        %v597 = vpop.f32.mrf.mxu0
        %v598 = vadd.f32 %v437, %v597
        %v599 = vpop.f32.mrf.mxu0
        %v600 = vadd.f32 %v437, %v599
        %601 = vmatmul.bf16.gmra.mxu0 %v480
        %v602 = vpop.f32.mrf.mxu0
        %v603 = vadd.f32 %v437, %v602
        %v604 = vpop.f32.mrf.mxu0
        %v605 = vadd.f32 %v437, %v604
        %606 = vmatmul.bf16.gmra.mxu0 %v483
        %v607 = vpop.f32.mrf.mxu0
        %v608 = vadd.f32 %v437, %v607
        %v609 = vpop.f32.mrf.mxu0
        %v610 = vadd.f32 %v437, %v609
        %611 = vmatmul.bf16.gmra.mxu0 %v486
        %v612 = vpop.f32.mrf.mxu0
        %v613 = vadd.f32 %v437, %v612
        %v614 = vpop.f32.mrf.mxu0
        %v615 = vadd.f32 %v437, %v614
        %616 = vmatmul.bf16.gmra.mxu0 %v489
        %v617 = vpop.f32.mrf.mxu0
        %v618 = vadd.f32 %v437, %v617
        %v619 = vpop.f32.mrf.mxu0
        %v620 = vadd.f32 %v437, %v619
        %621 = vmatmul.bf16.gmra.mxu0 %v492
        %v622 = vpop.f32.mrf.mxu0
        %v623 = vadd.f32 %v437, %v622
        %v624 = vpop.f32.mrf.mxu0
        %v625 = vadd.f32 %v437, %v624
        %626 = vmatmul.bf16.gmra.mxu0 %v495
        %v627 = vpop.f32.mrf.mxu0
        %v628 = vadd.f32 %v437, %v627
        %v629 = vpop.f32.mrf.mxu0
        %v630 = vadd.f32 %v437, %v629
        %631 = vmatmul.bf16.gmra.mxu0 %v498
        %v632 = vpop.f32.mrf.mxu0
        %v633 = vadd.f32 %v437, %v632
        %v634 = vpop.f32.mrf.mxu0
        %v635 = vadd.f32 %v437, %v634
        %636 = vmatmul.bf16.gmra.mxu0 %v501
        %v637 = vpop.f32.mrf.mxu0
        %v638 = vadd.f32 %v437, %v637
        %v639 = vpop.f32.mrf.mxu0
        %v640 = vadd.f32 %v437, %v639
        %641 = vmatmul.bf16.gmra.mxu0 %v504
        %v642 = vpop.f32.mrf.mxu0
        %v643 = vadd.f32 %v437, %v642
        %v644 = vpop.f32.mrf.mxu0
        %v645 = vadd.f32 %v437, %v644
        %646 = vmatmul.bf16.gmra.mxu0 %v507
        %v647 = vpop.f32.mrf.mxu0
        %v648 = vadd.f32 %v437, %v647
        %v649 = vpop.f32.mrf.mxu0
        %v650 = vadd.f32 %v437, %v649
        %651 = vmatmul.bf16.gmra.mxu0 %v510
        %v652 = vpop.f32.mrf.mxu0
        %v653 = vadd.f32 %v437, %v652
        %v654 = vpop.f32.mrf.mxu0
        %v655 = vadd.f32 %v437, %v654
        %656 = vmatmul.bf16.gmra.mxu0 %v513
        %v657 = vpop.f32.mrf.mxu0
        %v658 = vadd.f32 %v437, %v657
        %v659 = vpop.f32.mrf.mxu0
        %v660 = vadd.f32 %v437, %v659
        %661 = vmatmul.bf16.gmra.mxu0 %v516
        %v662 = vpop.f32.mrf.mxu0
        %v663 = vadd.f32 %v437, %v662
        %v664 = vpop.f32.mrf.mxu0
        %v665 = vadd.f32 %v437, %v664
        %666 = vmatmul.bf16.gmra.mxu0 %v519
        %v667 = vpop.f32.mrf.mxu0
        %v668 = vadd.f32 %v437, %v667
        %v669 = vpop.f32.mrf.mxu0
        %v670 = vadd.f32 %v437, %v669
        %671 = vmatmul.bf16.gmra.mxu0 %v522
        %v672 = vpop.f32.mrf.mxu0
        %v673 = vadd.f32 %v437, %v672
        %v674 = vpop.f32.mrf.mxu0
        %v675 = vadd.f32 %v437, %v674
        %676 = vmatmul.bf16.gmra.mxu0 %v525
        %v677 = vpop.f32.mrf.mxu0
        %v678 = vadd.f32 %v437, %v677
        %v679 = vpop.f32.mrf.mxu0
        %v680 = vadd.f32 %v437, %v679
        %681 = vmatmul.bf16.gmra.mxu0 %v528
        %v682 = vpop.f32.mrf.mxu0
        %v683 = vadd.f32 %v437, %v682
        %v684 = vpop.f32.mrf.mxu0
        %v685 = vadd.f32 %v437, %v684
        %686 = vmatmul.bf16.gmra.mxu0 %v531
        %v687 = vpop.f32.mrf.mxu0
        %v688 = vadd.f32 %v437, %v687
        %v689 = vpop.f32.mrf.mxu0
        %v690 = vadd.f32 %v437, %v689
        %691 = vmatmul.bf16.gmra.mxu0 %v534
        %v692 = vpop.f32.mrf.mxu0
        %v693 = vadd.f32 %v437, %v692
        %v694 = vpop.f32.mrf.mxu0
        %v695 = vadd.f32 %v437, %v694
        %696 = vmatmul.bf16.gmra.mxu0 %v537
        %v697 = vpop.f32.mrf.mxu0
        %v698 = vadd.f32 %v437, %v697
        %v699 = vpop.f32.mrf.mxu0
        %v700 = vadd.f32 %v437, %v699
        %701 = vmatmul.bf16.gmra.mxu0 %v540
        %v702 = vpop.f32.mrf.mxu0
        %v703 = vadd.f32 %v437, %v702
        %v704 = vpop.f32.mrf.mxu0
        %v705 = vadd.f32 %v437, %v704
        %706 = vmatmul.bf16.gmra.mxu0 %v543
        %v707 = vpop.f32.mrf.mxu0
        %v708 = vadd.f32 %v437, %v707
        %v709 = vpop.f32.mrf.mxu0
        %v710 = vadd.f32 %v437, %v709
        %711 = vmatmul.bf16.gmra.mxu0 %v546
        %v712 = vpop.f32.mrf.mxu0
        %v713 = vadd.f32 %v437, %v712
        %v714 = vpop.f32.mrf.mxu0
        %v715 = vadd.f32 %v437, %v714
        %716 = vdwg.mxu0
        %v717 = vmul.f32 %v558, 0.01
        %v718 = vmul.f32 %v560, 0.01
        %v719 = vmul.f32 %v563, 0.01
        %v720 = vmul.f32 %v565, 0.01
        %v721 = vmul.f32 %v568, 0.01
        %v722 = vmul.f32 %v570, 0.01
        %v723 = vmul.f32 %v573, 0.01
        %v724 = vmul.f32 %v575, 0.01
        %v725 = vmul.f32 %v578, 0.01
        %v726 = vmul.f32 %v580, 0.01
        %v727 = vmul.f32 %v583, 0.01
        %v728 = vmul.f32 %v585, 0.01
        %v729 = vmul.f32 %v588, 0.01
        %v730 = vmul.f32 %v590, 0.01
        %v731 = vmul.f32 %v593, 0.01
        %v732 = vmul.f32 %v595, 0.01
        %v733 = vmul.f32 %v598, 0.01
        %v734 = vmul.f32 %v600, 0.01
        %v735 = vmul.f32 %v603, 0.01
        %v736 = vmul.f32 %v605, 0.01
        %v737 = vmul.f32 %v608, 0.01
        %v738 = vmul.f32 %v610, 0.01
        %v739 = vmul.f32 %v613, 0.01
        %v740 = vmul.f32 %v615, 0.01
        %v741 = vmul.f32 %v618, 0.01
        %v742 = vmul.f32 %v620, 0.01
        %v743 = vmul.f32 %v623, 0.01
        %v744 = vmul.f32 %v625, 0.01
        %v745 = vmul.f32 %v628, 0.01
        %v746 = vmul.f32 %v630, 0.01
        %v747 = vmul.f32 %v633, 0.01
        %v748 = vmul.f32 %v635, 0.01
        %v749 = vmul.f32 %v638, 0.01
        %v750 = vmul.f32 %v640, 0.01
        %v751 = vmul.f32 %v643, 0.01
        %v752 = vmul.f32 %v645, 0.01
        %v753 = vmul.f32 %v648, 0.01
        %v754 = vmul.f32 %v650, 0.01
        %v755 = vmul.f32 %v653, 0.01
        %v756 = vmul.f32 %v655, 0.01
        %v757 = vmul.f32 %v658, 0.01
        %v758 = vmul.f32 %v660, 0.01
        %v759 = vmul.f32 %v663, 0.01
        %v760 = vmul.f32 %v665, 0.01
        %v761 = vmul.f32 %v668, 0.01
        %v762 = vmul.f32 %v670, 0.01
        %v763 = vmul.f32 %v673, 0.01
        %v764 = vmul.f32 %v675, 0.01
        %v765 = vmul.f32 %v678, 0.01
        %v766 = vmul.f32 %v680, 0.01
        %v767 = vmul.f32 %v683, 0.01
        %v768 = vmul.f32 %v685, 0.01
        %v769 = vmul.f32 %v688, 0.01
        %v770 = vmul.f32 %v690, 0.01
        %v771 = vmul.f32 %v693, 0.01
        %v772 = vmul.f32 %v695, 0.01
        %v773 = vmul.f32 %v698, 0.01
        %v774 = vmul.f32 %v700, 0.01
        %v775 = vmul.f32 %v703, 0.01
        %v776 = vmul.f32 %v705, 0.01
        %v777 = vmul.f32 %v708, 0.01
        %v778 = vmul.f32 %v710, 0.01
        %v779 = vmul.f32 %v713, 0.01
        %v780 = vmul.f32 %v715, 0.01
        %v781 = vmax.f32 %v558, %v717
        %v782 = vmax.f32 %v560, %v718
        %v783 = vmax.f32 %v563, %v719
        %v784 = vmax.f32 %v565, %v720
        %v785 = vmax.f32 %v568, %v721
        %v786 = vmax.f32 %v570, %v722
        %v787 = vmax.f32 %v573, %v723
        %v788 = vmax.f32 %v575, %v724
        %v789 = vmax.f32 %v578, %v725
        %v790 = vmax.f32 %v580, %v726
        %v791 = vmax.f32 %v583, %v727
        %v792 = vmax.f32 %v585, %v728
        %v793 = vmax.f32 %v588, %v729
        %v794 = vmax.f32 %v590, %v730
        %v795 = vmax.f32 %v593, %v731
        %v796 = vmax.f32 %v595, %v732
        %v797 = vmax.f32 %v598, %v733
        %v798 = vmax.f32 %v600, %v734
        %v799 = vmax.f32 %v603, %v735
        %v800 = vmax.f32 %v605, %v736
        %v801 = vmax.f32 %v608, %v737
        %v802 = vmax.f32 %v610, %v738
        %v803 = vmax.f32 %v613, %v739
        %v804 = vmax.f32 %v615, %v740
        %v805 = vmax.f32 %v618, %v741
        %v806 = vmax.f32 %v620, %v742
        %v807 = vmax.f32 %v623, %v743
        %v808 = vmax.f32 %v625, %v744
        %v809 = vmax.f32 %v628, %v745
        %v810 = vmax.f32 %v630, %v746
        %v811 = vmax.f32 %v633, %v747
        %v812 = vmax.f32 %v635, %v748
        %v813 = vmax.f32 %v638, %v749
        %v814 = vmax.f32 %v640, %v750
        %v815 = vmax.f32 %v643, %v751
        %v816 = vmax.f32 %v645, %v752
        %v817 = vmax.f32 %v648, %v753
        %v818 = vmax.f32 %v650, %v754
        %v819 = vmax.f32 %v653, %v755
        %v820 = vmax.f32 %v655, %v756
        %v821 = vmax.f32 %v658, %v757
        %v822 = vmax.f32 %v660, %v758
        %v823 = vmax.f32 %v663, %v759
        %v824 = vmax.f32 %v665, %v760
        %v825 = vmax.f32 %v668, %v761
        %v826 = vmax.f32 %v670, %v762
        %v827 = vmax.f32 %v673, %v763
        %v828 = vmax.f32 %v675, %v764
        %v829 = vmax.f32 %v678, %v765
        %v830 = vmax.f32 %v680, %v766
        %v831 = vmax.f32 %v683, %v767
        %v832 = vmax.f32 %v685, %v768
        %v833 = vmax.f32 %v688, %v769
        %v834 = vmax.f32 %v690, %v770
        %v835 = vmax.f32 %v693, %v771
        %v836 = vmax.f32 %v695, %v772
        %v837 = vmax.f32 %v698, %v773
        %v838 = vmax.f32 %v700, %v774
        %v839 = vmax.f32 %v703, %v775
        %v840 = vmax.f32 %v705, %v776
        %v841 = vmax.f32 %v708, %v777
        %v842 = vmax.f32 %v710, %v778
        %v843 = vmax.f32 %v713, %v779
        %v844 = vmax.f32 %v715, %v780
        %v845 = vpack.c.bf16 %v782, %v781
        %v846 = vpack.c.bf16 %v784, %v783
        %v847 = vpack.c.bf16 %v786, %v785
        %v848 = vpack.c.bf16 %v788, %v787
        %v849 = vpack.c.bf16 %v790, %v789
        %v850 = vpack.c.bf16 %v792, %v791
        %v851 = vpack.c.bf16 %v794, %v793
        %v852 = vpack.c.bf16 %v796, %v795
        %v853 = vpack.c.bf16 %v798, %v797
        %v854 = vpack.c.bf16 %v800, %v799
        %v855 = vpack.c.bf16 %v802, %v801
        %v856 = vpack.c.bf16 %v804, %v803
        %v857 = vpack.c.bf16 %v806, %v805
        %v858 = vpack.c.bf16 %v808, %v807
        %v859 = vpack.c.bf16 %v810, %v809
        %v860 = vpack.c.bf16 %v812, %v811
        %v861 = vpack.c.bf16 %v814, %v813
        %v862 = vpack.c.bf16 %v816, %v815
        %v863 = vpack.c.bf16 %v818, %v817
        %v864 = vpack.c.bf16 %v820, %v819
        %v865 = vpack.c.bf16 %v822, %v821
        %v866 = vpack.c.bf16 %v824, %v823
        %v867 = vpack.c.bf16 %v826, %v825
        %v868 = vpack.c.bf16 %v828, %v827
        %v869 = vpack.c.bf16 %v830, %v829
        %v870 = vpack.c.bf16 %v832, %v831
        %v871 = vpack.c.bf16 %v834, %v833
        %v872 = vpack.c.bf16 %v836, %v835
        %v873 = vpack.c.bf16 %v838, %v837
        %v874 = vpack.c.bf16 %v840, %v839
        %v875 = vpack.c.bf16 %v842, %v841
        %v876 = vpack.c.bf16 %v844, %v843
        %v877 = vld [vmem:[%s3] sm:$0xff]
        %v878 = vld [vmem:[%s3 + $0x8] sm:$0xff]
        %v879 = vld [vmem:[%s3 + $0x10] sm:$0xff]
        %v880 = vld [vmem:[%s3 + $0x18] sm:$0xff]
        %v881 = vld [vmem:[%s3 + $0x20] sm:$0xff]
        %v882 = vld [vmem:[%s3 + $0x28] sm:$0xff]
        %v883 = vld [vmem:[%s3 + $0x30] sm:$0xff]
        %v884 = vld [vmem:[%s3 + $0x38] sm:$0xff]
        %v885 = vld [vmem:[%s3 + $0x40] sm:$0xff]
        %v886 = vld [vmem:[%s3 + $0x48] sm:$0xff]
        %v887 = vld [vmem:[%s3 + $0x50] sm:$0xff]
        %v888 = vld [vmem:[%s3 + $0x58] sm:$0xff]
        %v889 = vld [vmem:[%s3 + $0x60] sm:$0xff]
        %v890 = vld [vmem:[%s3 + $0x68] sm:$0xff]
        %v891 = vld [vmem:[%s3 + $0x70] sm:$0xff]
        %v892 = vld [vmem:[%s3 + $0x78] sm:$0xff]
        %v893 = vld [vmem:[%s4] sm:$0x3]
        %v895 = vperm.slane %v893, 0
        %v896 = vperm.slane %v893, 1
        %v915 = vunpack.c.l.b16 %v877
        %v916 = vunpack.c.h.b16 %v877
        %v917 = vunpack.c.l.b16 %v878
        %v918 = vunpack.c.h.b16 %v878
        %v919 = vunpack.c.l.b16 %v879
        %v920 = vunpack.c.h.b16 %v879
        %v921 = vunpack.c.l.b16 %v880
        %v922 = vunpack.c.h.b16 %v880
        %v923 = vunpack.c.l.b16 %v881
        %v924 = vunpack.c.h.b16 %v881
        %v925 = vunpack.c.l.b16 %v882
        %v926 = vunpack.c.h.b16 %v882
        %v927 = vunpack.c.l.b16 %v883
        %v928 = vunpack.c.h.b16 %v883
        %v929 = vunpack.c.l.b16 %v884
        %v930 = vunpack.c.h.b16 %v884
        %v931 = vunpack.c.l.b16 %v885
        %v932 = vunpack.c.h.b16 %v885
        %v933 = vunpack.c.l.b16 %v886
        %v934 = vunpack.c.h.b16 %v886
        %v935 = vunpack.c.l.b16 %v887
        %v936 = vunpack.c.h.b16 %v887
        %v937 = vunpack.c.l.b16 %v888
        %v938 = vunpack.c.h.b16 %v888
        %v939 = vunpack.c.l.b16 %v889
        %v940 = vunpack.c.h.b16 %v889
        %v941 = vunpack.c.l.b16 %v890
        %v942 = vunpack.c.h.b16 %v890
        %v943 = vunpack.c.l.b16 %v891
        %v944 = vunpack.c.h.b16 %v891
        %v945 = vunpack.c.l.b16 %v892
        %v946 = vunpack.c.h.b16 %v892
        %v947 = vpack.c.b16 %v917, %v915
        %v948 = vpack.c.b16 %v918, %v916
        %v949 = vpack.c.b16 %v921, %v919
        %v950 = vpack.c.b16 %v922, %v920
        %v951 = vpack.c.b16 %v925, %v923
        %v952 = vpack.c.b16 %v926, %v924
        %v953 = vpack.c.b16 %v929, %v927
        %v954 = vpack.c.b16 %v930, %v928
        %v955 = vpack.c.b16 %v933, %v931
        %v956 = vpack.c.b16 %v934, %v932
        %v957 = vpack.c.b16 %v937, %v935
        %v958 = vpack.c.b16 %v938, %v936
        %v959 = vpack.c.b16 %v941, %v939
        %v960 = vpack.c.b16 %v942, %v940
        %v961 = vpack.c.b16 %v945, %v943
        %v962 = vpack.c.b16 %v946, %v944
        %979 = vmatpush.bf16.msra.mxu0 %v961
        %980 = vmatpush.bf16.msra.mxu0 %v959
        %981 = vmatpush.bf16.msra.mxu0 %v957
        %982 = vmatpush.bf16.msra.mxu0 %v955
        %983 = vmatpush.bf16.msra.mxu0 %v953
        %984 = vmatpush.bf16.msra.mxu0 %v951
        %985 = vmatpush.bf16.msra.mxu0 %v949
        %986 = vmatpush.bf16.msra.mxu0 %v947
        %987 = vmatmul.bf16.gmra.mxu0 %v845
        %v988 = vpop.f32.mrf.mxu0
        %v989 = vadd.f32 %v895, %v988
        %v990 = vpop.f32.mrf.mxu0
        %v991 = vadd.f32 %v895, %v990
        %992 = vmatmul.bf16.gmra.mxu0 %v846
        %v993 = vpop.f32.mrf.mxu0
        %v994 = vadd.f32 %v895, %v993
        %v995 = vpop.f32.mrf.mxu0
        %v996 = vadd.f32 %v895, %v995
        %997 = vmatmul.bf16.gmra.mxu0 %v847
        %v998 = vpop.f32.mrf.mxu0
        %v999 = vadd.f32 %v895, %v998
        %v1000 = vpop.f32.mrf.mxu0
        %v1001 = vadd.f32 %v895, %v1000
        %1002 = vmatmul.bf16.gmra.mxu0 %v848
        %v1003 = vpop.f32.mrf.mxu0
        %v1004 = vadd.f32 %v895, %v1003
        %v1005 = vpop.f32.mrf.mxu0
        %v1006 = vadd.f32 %v895, %v1005
        %1007 = vmatmul.bf16.gmra.mxu0 %v849
        %v1008 = vpop.f32.mrf.mxu0
        %v1009 = vadd.f32 %v895, %v1008
        %v1010 = vpop.f32.mrf.mxu0
        %v1011 = vadd.f32 %v895, %v1010
        %1012 = vmatmul.bf16.gmra.mxu0 %v850
        %v1013 = vpop.f32.mrf.mxu0
        %v1014 = vadd.f32 %v895, %v1013
        %v1015 = vpop.f32.mrf.mxu0
        %v1016 = vadd.f32 %v895, %v1015
        %1017 = vmatmul.bf16.gmra.mxu0 %v851
        %v1018 = vpop.f32.mrf.mxu0
        %v1019 = vadd.f32 %v895, %v1018
        %v1020 = vpop.f32.mrf.mxu0
        %v1021 = vadd.f32 %v895, %v1020
        %1022 = vmatmul.bf16.gmra.mxu0 %v852
        %v1023 = vpop.f32.mrf.mxu0
        %v1024 = vadd.f32 %v895, %v1023
        %v1025 = vpop.f32.mrf.mxu0
        %v1026 = vadd.f32 %v895, %v1025
        %1027 = vmatmul.bf16.gmra.mxu0 %v853
        %v1028 = vpop.f32.mrf.mxu0
        %v1029 = vadd.f32 %v895, %v1028
        %v1030 = vpop.f32.mrf.mxu0
        %v1031 = vadd.f32 %v895, %v1030
        %1032 = vmatmul.bf16.gmra.mxu0 %v854
        %v1033 = vpop.f32.mrf.mxu0
        %v1034 = vadd.f32 %v895, %v1033
        %v1035 = vpop.f32.mrf.mxu0
        %v1036 = vadd.f32 %v895, %v1035
        %1037 = vmatmul.bf16.gmra.mxu0 %v855
        %v1038 = vpop.f32.mrf.mxu0
        %v1039 = vadd.f32 %v895, %v1038
        %v1040 = vpop.f32.mrf.mxu0
        %v1041 = vadd.f32 %v895, %v1040
        %1042 = vmatmul.bf16.gmra.mxu0 %v856
        %v1043 = vpop.f32.mrf.mxu0
        %v1044 = vadd.f32 %v895, %v1043
        %v1045 = vpop.f32.mrf.mxu0
        %v1046 = vadd.f32 %v895, %v1045
        %1047 = vmatmul.bf16.gmra.mxu0 %v857
        %v1048 = vpop.f32.mrf.mxu0
        %v1049 = vadd.f32 %v895, %v1048
        %v1050 = vpop.f32.mrf.mxu0
        %v1051 = vadd.f32 %v895, %v1050
        %1052 = vmatmul.bf16.gmra.mxu0 %v858
        %v1053 = vpop.f32.mrf.mxu0
        %v1054 = vadd.f32 %v895, %v1053
        %v1055 = vpop.f32.mrf.mxu0
        %v1056 = vadd.f32 %v895, %v1055
        %1057 = vmatmul.bf16.gmra.mxu0 %v859
        %v1058 = vpop.f32.mrf.mxu0
        %v1059 = vadd.f32 %v895, %v1058
        %v1060 = vpop.f32.mrf.mxu0
        %v1061 = vadd.f32 %v895, %v1060
        %1062 = vmatmul.bf16.gmra.mxu0 %v860
        %v1063 = vpop.f32.mrf.mxu0
        %v1064 = vadd.f32 %v895, %v1063
        %v1065 = vpop.f32.mrf.mxu0
        %v1066 = vadd.f32 %v895, %v1065
        %1067 = vmatmul.bf16.gmra.mxu0 %v861
        %v1068 = vpop.f32.mrf.mxu0
        %v1069 = vadd.f32 %v895, %v1068
        %v1070 = vpop.f32.mrf.mxu0
        %v1071 = vadd.f32 %v895, %v1070
        %1072 = vmatmul.bf16.gmra.mxu0 %v862
        %v1073 = vpop.f32.mrf.mxu0
        %v1074 = vadd.f32 %v895, %v1073
        %v1075 = vpop.f32.mrf.mxu0
        %v1076 = vadd.f32 %v895, %v1075
        %1077 = vmatmul.bf16.gmra.mxu0 %v863
        %v1078 = vpop.f32.mrf.mxu0
        %v1079 = vadd.f32 %v895, %v1078
        %v1080 = vpop.f32.mrf.mxu0
        %v1081 = vadd.f32 %v895, %v1080
        %1082 = vmatmul.bf16.gmra.mxu0 %v864
        %v1083 = vpop.f32.mrf.mxu0
        %v1084 = vadd.f32 %v895, %v1083
        %v1085 = vpop.f32.mrf.mxu0
        %v1086 = vadd.f32 %v895, %v1085
        %1087 = vmatmul.bf16.gmra.mxu0 %v865
        %v1088 = vpop.f32.mrf.mxu0
        %v1089 = vadd.f32 %v895, %v1088
        %v1090 = vpop.f32.mrf.mxu0
        %v1091 = vadd.f32 %v895, %v1090
        %1092 = vmatmul.bf16.gmra.mxu0 %v866
        %v1093 = vpop.f32.mrf.mxu0
        %v1094 = vadd.f32 %v895, %v1093
        %v1095 = vpop.f32.mrf.mxu0
        %v1096 = vadd.f32 %v895, %v1095
        %1097 = vmatmul.bf16.gmra.mxu0 %v867
        %v1098 = vpop.f32.mrf.mxu0
        %v1099 = vadd.f32 %v895, %v1098
        %v1100 = vpop.f32.mrf.mxu0
        %v1101 = vadd.f32 %v895, %v1100
        %1102 = vmatmul.bf16.gmra.mxu0 %v868
        %v1103 = vpop.f32.mrf.mxu0
        %v1104 = vadd.f32 %v895, %v1103
        %v1105 = vpop.f32.mrf.mxu0
        %v1106 = vadd.f32 %v895, %v1105
        %1107 = vmatmul.bf16.gmra.mxu0 %v869
        %v1108 = vpop.f32.mrf.mxu0
        %v1109 = vadd.f32 %v895, %v1108
        %v1110 = vpop.f32.mrf.mxu0
        %v1111 = vadd.f32 %v895, %v1110
        %1112 = vmatmul.bf16.gmra.mxu0 %v870
        %v1113 = vpop.f32.mrf.mxu0
        %v1114 = vadd.f32 %v895, %v1113
        %v1115 = vpop.f32.mrf.mxu0
        %v1116 = vadd.f32 %v895, %v1115
        %1117 = vmatmul.bf16.gmra.mxu0 %v871
        %v1118 = vpop.f32.mrf.mxu0
        %v1119 = vadd.f32 %v895, %v1118
        %v1120 = vpop.f32.mrf.mxu0
        %v1121 = vadd.f32 %v895, %v1120
        %1122 = vmatmul.bf16.gmra.mxu0 %v872
        %v1123 = vpop.f32.mrf.mxu0
        %v1124 = vadd.f32 %v895, %v1123
        %v1125 = vpop.f32.mrf.mxu0
        %v1126 = vadd.f32 %v895, %v1125
        %1127 = vmatmul.bf16.gmra.mxu0 %v873
        %v1128 = vpop.f32.mrf.mxu0
        %v1129 = vadd.f32 %v895, %v1128
        %v1130 = vpop.f32.mrf.mxu0
        %v1131 = vadd.f32 %v895, %v1130
        %1132 = vmatmul.bf16.gmra.mxu0 %v874
        %v1133 = vpop.f32.mrf.mxu0
        %v1134 = vadd.f32 %v895, %v1133
        %v1135 = vpop.f32.mrf.mxu0
        %v1136 = vadd.f32 %v895, %v1135
        %1137 = vmatmul.bf16.gmra.mxu0 %v875
        %v1138 = vpop.f32.mrf.mxu0
        %v1139 = vadd.f32 %v895, %v1138
        %v1140 = vpop.f32.mrf.mxu0
        %v1141 = vadd.f32 %v895, %v1140
        %1142 = vmatmul.bf16.gmra.mxu0 %v876
        %v1143 = vpop.f32.mrf.mxu0
        %v1144 = vadd.f32 %v895, %v1143
        %v1145 = vpop.f32.mrf.mxu0
        %v1146 = vadd.f32 %v895, %v1145
        %1147 = vdwg.mxu0
        %1148 = vmatpush.bf16.msra.mxu0 %v962
        %1149 = vmatpush.bf16.msra.mxu0 %v960
        %1150 = vmatpush.bf16.msra.mxu0 %v958
        %1151 = vmatpush.bf16.msra.mxu0 %v956
        %1152 = vmatpush.bf16.msra.mxu0 %v954
        %1153 = vmatpush.bf16.msra.mxu0 %v952
        %1154 = vmatpush.bf16.msra.mxu0 %v950
        %1155 = vmatpush.bf16.msra.mxu0 %v948
        %1156 = vmatmul.bf16.gmra.mxu0 %v845
        %v1157 = vpop.f32.mrf.mxu0
        %v1158 = vadd.f32 %v896, %v1157
        %v1159 = vpop.f32.mrf.mxu0
        %v1160 = vadd.f32 %v896, %v1159
        %1161 = vmatmul.bf16.gmra.mxu0 %v846
        %v1162 = vpop.f32.mrf.mxu0
        %v1163 = vadd.f32 %v896, %v1162
        %v1164 = vpop.f32.mrf.mxu0
        %v1165 = vadd.f32 %v896, %v1164
        %1166 = vmatmul.bf16.gmra.mxu0 %v847
        %v1167 = vpop.f32.mrf.mxu0
        %v1168 = vadd.f32 %v896, %v1167
        %v1169 = vpop.f32.mrf.mxu0
        %v1170 = vadd.f32 %v896, %v1169
        %1171 = vmatmul.bf16.gmra.mxu0 %v848
        %v1172 = vpop.f32.mrf.mxu0
        %v1173 = vadd.f32 %v896, %v1172
        %v1174 = vpop.f32.mrf.mxu0
        %v1175 = vadd.f32 %v896, %v1174
        %1176 = vmatmul.bf16.gmra.mxu0 %v849
        %v1177 = vpop.f32.mrf.mxu0
        %v1178 = vadd.f32 %v896, %v1177
        %v1179 = vpop.f32.mrf.mxu0
        %v1180 = vadd.f32 %v896, %v1179
        %1181 = vmatmul.bf16.gmra.mxu0 %v850
        %v1182 = vpop.f32.mrf.mxu0
        %v1183 = vadd.f32 %v896, %v1182
        %v1184 = vpop.f32.mrf.mxu0
        %v1185 = vadd.f32 %v896, %v1184
        %1186 = vmatmul.bf16.gmra.mxu0 %v851
        %v1187 = vpop.f32.mrf.mxu0
        %v1188 = vadd.f32 %v896, %v1187
        %v1189 = vpop.f32.mrf.mxu0
        %v1190 = vadd.f32 %v896, %v1189
        %1191 = vmatmul.bf16.gmra.mxu0 %v852
        %v1192 = vpop.f32.mrf.mxu0
        %v1193 = vadd.f32 %v896, %v1192
        %v1194 = vpop.f32.mrf.mxu0
        %v1195 = vadd.f32 %v896, %v1194
        %1196 = vmatmul.bf16.gmra.mxu0 %v853
        %v1197 = vpop.f32.mrf.mxu0
        %v1198 = vadd.f32 %v896, %v1197
        %v1199 = vpop.f32.mrf.mxu0
        %v1200 = vadd.f32 %v896, %v1199
        %1201 = vmatmul.bf16.gmra.mxu0 %v854
        %v1202 = vpop.f32.mrf.mxu0
        %v1203 = vadd.f32 %v896, %v1202
        %v1204 = vpop.f32.mrf.mxu0
        %v1205 = vadd.f32 %v896, %v1204
        %1206 = vmatmul.bf16.gmra.mxu0 %v855
        %v1207 = vpop.f32.mrf.mxu0
        %v1208 = vadd.f32 %v896, %v1207
        %v1209 = vpop.f32.mrf.mxu0
        %v1210 = vadd.f32 %v896, %v1209
        %1211 = vmatmul.bf16.gmra.mxu0 %v856
        %v1212 = vpop.f32.mrf.mxu0
        %v1213 = vadd.f32 %v896, %v1212
        %v1214 = vpop.f32.mrf.mxu0
        %v1215 = vadd.f32 %v896, %v1214
        %1216 = vmatmul.bf16.gmra.mxu0 %v857
        %v1217 = vpop.f32.mrf.mxu0
        %v1218 = vadd.f32 %v896, %v1217
        %v1219 = vpop.f32.mrf.mxu0
        %v1220 = vadd.f32 %v896, %v1219
        %1221 = vmatmul.bf16.gmra.mxu0 %v858
        %v1222 = vpop.f32.mrf.mxu0
        %v1223 = vadd.f32 %v896, %v1222
        %v1224 = vpop.f32.mrf.mxu0
        %v1225 = vadd.f32 %v896, %v1224
        %1226 = vmatmul.bf16.gmra.mxu0 %v859
        %v1227 = vpop.f32.mrf.mxu0
        %v1228 = vadd.f32 %v896, %v1227
        %v1229 = vpop.f32.mrf.mxu0
        %v1230 = vadd.f32 %v896, %v1229
        %1231 = vmatmul.bf16.gmra.mxu0 %v860
        %v1232 = vpop.f32.mrf.mxu0
        %v1233 = vadd.f32 %v896, %v1232
        %v1234 = vpop.f32.mrf.mxu0
        %v1235 = vadd.f32 %v896, %v1234
        %1236 = vmatmul.bf16.gmra.mxu0 %v861
        %v1237 = vpop.f32.mrf.mxu0
        %v1238 = vadd.f32 %v896, %v1237
        %v1239 = vpop.f32.mrf.mxu0
        %v1240 = vadd.f32 %v896, %v1239
        %1241 = vmatmul.bf16.gmra.mxu0 %v862
        %v1242 = vpop.f32.mrf.mxu0
        %v1243 = vadd.f32 %v896, %v1242
        %v1244 = vpop.f32.mrf.mxu0
        %v1245 = vadd.f32 %v896, %v1244
        %1246 = vmatmul.bf16.gmra.mxu0 %v863
        %v1247 = vpop.f32.mrf.mxu0
        %v1248 = vadd.f32 %v896, %v1247
        %v1249 = vpop.f32.mrf.mxu0
        %v1250 = vadd.f32 %v896, %v1249
        %1251 = vmatmul.bf16.gmra.mxu0 %v864
        %v1252 = vpop.f32.mrf.mxu0
        %v1253 = vadd.f32 %v896, %v1252
        %v1254 = vpop.f32.mrf.mxu0
        %v1255 = vadd.f32 %v896, %v1254
        %1256 = vmatmul.bf16.gmra.mxu0 %v865
        %v1257 = vpop.f32.mrf.mxu0
        %v1258 = vadd.f32 %v896, %v1257
        %v1259 = vpop.f32.mrf.mxu0
        %v1260 = vadd.f32 %v896, %v1259
        %1261 = vmatmul.bf16.gmra.mxu0 %v866
        %v1262 = vpop.f32.mrf.mxu0
        %v1263 = vadd.f32 %v896, %v1262
        %v1264 = vpop.f32.mrf.mxu0
        %v1265 = vadd.f32 %v896, %v1264
        %1266 = vmatmul.bf16.gmra.mxu0 %v867
        %v1267 = vpop.f32.mrf.mxu0
        %v1268 = vadd.f32 %v896, %v1267
        %v1269 = vpop.f32.mrf.mxu0
        %v1270 = vadd.f32 %v896, %v1269
        %1271 = vmatmul.bf16.gmra.mxu0 %v868
        %v1272 = vpop.f32.mrf.mxu0
        %v1273 = vadd.f32 %v896, %v1272
        %v1274 = vpop.f32.mrf.mxu0
        %v1275 = vadd.f32 %v896, %v1274
        %1276 = vmatmul.bf16.gmra.mxu0 %v869
        %v1277 = vpop.f32.mrf.mxu0
        %v1278 = vadd.f32 %v896, %v1277
        %v1279 = vpop.f32.mrf.mxu0
        %v1280 = vadd.f32 %v896, %v1279
        %1281 = vmatmul.bf16.gmra.mxu0 %v870
        %v1282 = vpop.f32.mrf.mxu0
        %v1283 = vadd.f32 %v896, %v1282
        %v1284 = vpop.f32.mrf.mxu0
        %v1285 = vadd.f32 %v896, %v1284
        %1286 = vmatmul.bf16.gmra.mxu0 %v871
        %v1287 = vpop.f32.mrf.mxu0
        %v1288 = vadd.f32 %v896, %v1287
        %v1289 = vpop.f32.mrf.mxu0
        %v1290 = vadd.f32 %v896, %v1289
        %1291 = vmatmul.bf16.gmra.mxu0 %v872
        %v1292 = vpop.f32.mrf.mxu0
        %v1293 = vadd.f32 %v896, %v1292
        %v1294 = vpop.f32.mrf.mxu0
        %v1295 = vadd.f32 %v896, %v1294
        %1296 = vmatmul.bf16.gmra.mxu0 %v873
        %v1297 = vpop.f32.mrf.mxu0
        %v1298 = vadd.f32 %v896, %v1297
        %v1299 = vpop.f32.mrf.mxu0
        %v1300 = vadd.f32 %v896, %v1299
        %1301 = vmatmul.bf16.gmra.mxu0 %v874
        %v1302 = vpop.f32.mrf.mxu0
        %v1303 = vadd.f32 %v896, %v1302
        %v1304 = vpop.f32.mrf.mxu0
        %v1305 = vadd.f32 %v896, %v1304
        %1306 = vmatmul.bf16.gmra.mxu0 %v875
        %v1307 = vpop.f32.mrf.mxu0
        %v1308 = vadd.f32 %v896, %v1307
        %v1309 = vpop.f32.mrf.mxu0
        %v1310 = vadd.f32 %v896, %v1309
        %1311 = vmatmul.bf16.gmra.mxu0 %v876
        %v1312 = vpop.f32.mrf.mxu0
        %v1313 = vadd.f32 %v896, %v1312
        %v1314 = vpop.f32.mrf.mxu0
        %v1315 = vadd.f32 %v896, %v1314
        %1316 = vdwg.mxu0
        %v1317 = vmul.f32 %v989, 0.01
        %v1318 = vmul.f32 %v1158, 0.01
        %v1319 = vmul.f32 %v991, 0.01
        %v1320 = vmul.f32 %v1160, 0.01
        %v1321 = vmul.f32 %v994, 0.01
        %v1322 = vmul.f32 %v1163, 0.01
        %v1323 = vmul.f32 %v996, 0.01
        %v1324 = vmul.f32 %v1165, 0.01
        %v1325 = vmul.f32 %v999, 0.01
        %v1326 = vmul.f32 %v1168, 0.01
        %v1327 = vmul.f32 %v1001, 0.01
        %v1328 = vmul.f32 %v1170, 0.01
        %v1329 = vmul.f32 %v1004, 0.01
        %v1330 = vmul.f32 %v1173, 0.01
        %v1331 = vmul.f32 %v1006, 0.01
        %v1332 = vmul.f32 %v1175, 0.01
        %v1333 = vmul.f32 %v1009, 0.01
        %v1334 = vmul.f32 %v1178, 0.01
        %v1335 = vmul.f32 %v1011, 0.01
        %v1336 = vmul.f32 %v1180, 0.01
        %v1337 = vmul.f32 %v1014, 0.01
        %v1338 = vmul.f32 %v1183, 0.01
        %v1339 = vmul.f32 %v1016, 0.01
        %v1340 = vmul.f32 %v1185, 0.01
        %v1341 = vmul.f32 %v1019, 0.01
        %v1342 = vmul.f32 %v1188, 0.01
        %v1343 = vmul.f32 %v1021, 0.01
        %v1344 = vmul.f32 %v1190, 0.01
        %v1345 = vmul.f32 %v1024, 0.01
        %v1346 = vmul.f32 %v1193, 0.01
        %v1347 = vmul.f32 %v1026, 0.01
        %v1348 = vmul.f32 %v1195, 0.01
        %v1349 = vmul.f32 %v1029, 0.01
        %v1350 = vmul.f32 %v1198, 0.01
        %v1351 = vmul.f32 %v1031, 0.01
        %v1352 = vmul.f32 %v1200, 0.01
        %v1353 = vmul.f32 %v1034, 0.01
        %v1354 = vmul.f32 %v1203, 0.01
        %v1355 = vmul.f32 %v1036, 0.01
        %v1356 = vmul.f32 %v1205, 0.01
        %v1357 = vmul.f32 %v1039, 0.01
        %v1358 = vmul.f32 %v1208, 0.01
        %v1359 = vmul.f32 %v1041, 0.01
        %v1360 = vmul.f32 %v1210, 0.01
        %v1361 = vmul.f32 %v1044, 0.01
        %v1362 = vmul.f32 %v1213, 0.01
        %v1363 = vmul.f32 %v1046, 0.01
        %v1364 = vmul.f32 %v1215, 0.01
        %v1365 = vmul.f32 %v1049, 0.01
        %v1366 = vmul.f32 %v1218, 0.01
        %v1367 = vmul.f32 %v1051, 0.01
        %v1368 = vmul.f32 %v1220, 0.01
        %v1369 = vmul.f32 %v1054, 0.01
        %v1370 = vmul.f32 %v1223, 0.01
        %v1371 = vmul.f32 %v1056, 0.01
        %v1372 = vmul.f32 %v1225, 0.01
        %v1373 = vmul.f32 %v1059, 0.01
        %v1374 = vmul.f32 %v1228, 0.01
        %v1375 = vmul.f32 %v1061, 0.01
        %v1376 = vmul.f32 %v1230, 0.01
        %v1377 = vmul.f32 %v1064, 0.01
        %v1378 = vmul.f32 %v1233, 0.01
        %v1379 = vmul.f32 %v1066, 0.01
        %v1380 = vmul.f32 %v1235, 0.01
        %v1381 = vmul.f32 %v1069, 0.01
        %v1382 = vmul.f32 %v1238, 0.01
        %v1383 = vmul.f32 %v1071, 0.01
        %v1384 = vmul.f32 %v1240, 0.01
        %v1385 = vmul.f32 %v1074, 0.01
        %v1386 = vmul.f32 %v1243, 0.01
        %v1387 = vmul.f32 %v1076, 0.01
        %v1388 = vmul.f32 %v1245, 0.01
        %v1389 = vmul.f32 %v1079, 0.01
        %v1390 = vmul.f32 %v1248, 0.01
        %v1391 = vmul.f32 %v1081, 0.01
        %v1392 = vmul.f32 %v1250, 0.01
        %v1393 = vmul.f32 %v1084, 0.01
        %v1394 = vmul.f32 %v1253, 0.01
        %v1395 = vmul.f32 %v1086, 0.01
        %v1396 = vmul.f32 %v1255, 0.01
        %v1397 = vmul.f32 %v1089, 0.01
        %v1398 = vmul.f32 %v1258, 0.01
        %v1399 = vmul.f32 %v1091, 0.01
        %v1400 = vmul.f32 %v1260, 0.01
        %v1401 = vmul.f32 %v1094, 0.01
        %v1402 = vmul.f32 %v1263, 0.01
        %v1403 = vmul.f32 %v1096, 0.01
        %v1404 = vmul.f32 %v1265, 0.01
        %v1405 = vmul.f32 %v1099, 0.01
        %v1406 = vmul.f32 %v1268, 0.01
        %v1407 = vmul.f32 %v1101, 0.01
        %v1408 = vmul.f32 %v1270, 0.01
        %v1409 = vmul.f32 %v1104, 0.01
        %v1410 = vmul.f32 %v1273, 0.01
        %v1411 = vmul.f32 %v1106, 0.01
        %v1412 = vmul.f32 %v1275, 0.01
        %v1413 = vmul.f32 %v1109, 0.01
        %v1414 = vmul.f32 %v1278, 0.01
        %v1415 = vmul.f32 %v1111, 0.01
        %v1416 = vmul.f32 %v1280, 0.01
        %v1417 = vmul.f32 %v1114, 0.01
        %v1418 = vmul.f32 %v1283, 0.01
        %v1419 = vmul.f32 %v1116, 0.01
        %v1420 = vmul.f32 %v1285, 0.01
        %v1421 = vmul.f32 %v1119, 0.01
        %v1422 = vmul.f32 %v1288, 0.01
        %v1423 = vmul.f32 %v1121, 0.01
        %v1424 = vmul.f32 %v1290, 0.01
        %v1425 = vmul.f32 %v1124, 0.01
        %v1426 = vmul.f32 %v1293, 0.01
        %v1427 = vmul.f32 %v1126, 0.01
        %v1428 = vmul.f32 %v1295, 0.01
        %v1429 = vmul.f32 %v1129, 0.01
        %v1430 = vmul.f32 %v1298, 0.01
        %v1431 = vmul.f32 %v1131, 0.01
        %v1432 = vmul.f32 %v1300, 0.01
        %v1433 = vmul.f32 %v1134, 0.01
        %v1434 = vmul.f32 %v1303, 0.01
        %v1435 = vmul.f32 %v1136, 0.01
        %v1436 = vmul.f32 %v1305, 0.01
        %v1437 = vmul.f32 %v1139, 0.01
        %v1438 = vmul.f32 %v1308, 0.01
        %v1439 = vmul.f32 %v1141, 0.01
        %v1440 = vmul.f32 %v1310, 0.01
        %v1441 = vmul.f32 %v1144, 0.01
        %v1442 = vmul.f32 %v1313, 0.01
        %v1443 = vmul.f32 %v1146, 0.01
        %v1444 = vmul.f32 %v1315, 0.01
        %v1445 = vmax.f32 %v989, %v1317
        %v1446 = vmax.f32 %v1158, %v1318
        %v1447 = vmax.f32 %v991, %v1319
        %v1448 = vmax.f32 %v1160, %v1320
        %v1449 = vmax.f32 %v994, %v1321
        %v1450 = vmax.f32 %v1163, %v1322
        %v1451 = vmax.f32 %v996, %v1323
        %v1452 = vmax.f32 %v1165, %v1324
        %v1453 = vmax.f32 %v999, %v1325
        %v1454 = vmax.f32 %v1168, %v1326
        %v1455 = vmax.f32 %v1001, %v1327
        %v1456 = vmax.f32 %v1170, %v1328
        %v1457 = vmax.f32 %v1004, %v1329
        %v1458 = vmax.f32 %v1173, %v1330
        %v1459 = vmax.f32 %v1006, %v1331
        %v1460 = vmax.f32 %v1175, %v1332
        %v1461 = vmax.f32 %v1009, %v1333
        %v1462 = vmax.f32 %v1178, %v1334
        %v1463 = vmax.f32 %v1011, %v1335
        %v1464 = vmax.f32 %v1180, %v1336
        %v1465 = vmax.f32 %v1014, %v1337
        %v1466 = vmax.f32 %v1183, %v1338
        %v1467 = vmax.f32 %v1016, %v1339
        %v1468 = vmax.f32 %v1185, %v1340
        %v1469 = vmax.f32 %v1019, %v1341
        %v1470 = vmax.f32 %v1188, %v1342
        %v1471 = vmax.f32 %v1021, %v1343
        %v1472 = vmax.f32 %v1190, %v1344
        %v1473 = vmax.f32 %v1024, %v1345
        %v1474 = vmax.f32 %v1193, %v1346
        %v1475 = vmax.f32 %v1026, %v1347
        %v1476 = vmax.f32 %v1195, %v1348
        %v1477 = vmax.f32 %v1029, %v1349
        %v1478 = vmax.f32 %v1198, %v1350
        %v1479 = vmax.f32 %v1031, %v1351
        %v1480 = vmax.f32 %v1200, %v1352
        %v1481 = vmax.f32 %v1034, %v1353
        %v1482 = vmax.f32 %v1203, %v1354
        %v1483 = vmax.f32 %v1036, %v1355
        %v1484 = vmax.f32 %v1205, %v1356
        %v1485 = vmax.f32 %v1039, %v1357
        %v1486 = vmax.f32 %v1208, %v1358
        %v1487 = vmax.f32 %v1041, %v1359
        %v1488 = vmax.f32 %v1210, %v1360
        %v1489 = vmax.f32 %v1044, %v1361
        %v1490 = vmax.f32 %v1213, %v1362
        %v1491 = vmax.f32 %v1046, %v1363
        %v1492 = vmax.f32 %v1215, %v1364
        %v1493 = vmax.f32 %v1049, %v1365
        %v1494 = vmax.f32 %v1218, %v1366
        %v1495 = vmax.f32 %v1051, %v1367
        %v1496 = vmax.f32 %v1220, %v1368
        %v1497 = vmax.f32 %v1054, %v1369
        %v1498 = vmax.f32 %v1223, %v1370
        %v1499 = vmax.f32 %v1056, %v1371
        %v1500 = vmax.f32 %v1225, %v1372
        %v1501 = vmax.f32 %v1059, %v1373
        %v1502 = vmax.f32 %v1228, %v1374
        %v1503 = vmax.f32 %v1061, %v1375
        %v1504 = vmax.f32 %v1230, %v1376
        %v1505 = vmax.f32 %v1064, %v1377
        %v1506 = vmax.f32 %v1233, %v1378
        %v1507 = vmax.f32 %v1066, %v1379
        %v1508 = vmax.f32 %v1235, %v1380
        %v1509 = vmax.f32 %v1069, %v1381
        %v1510 = vmax.f32 %v1238, %v1382
        %v1511 = vmax.f32 %v1071, %v1383
        %v1512 = vmax.f32 %v1240, %v1384
        %v1513 = vmax.f32 %v1074, %v1385
        %v1514 = vmax.f32 %v1243, %v1386
        %v1515 = vmax.f32 %v1076, %v1387
        %v1516 = vmax.f32 %v1245, %v1388
        %v1517 = vmax.f32 %v1079, %v1389
        %v1518 = vmax.f32 %v1248, %v1390
        %v1519 = vmax.f32 %v1081, %v1391
        %v1520 = vmax.f32 %v1250, %v1392
        %v1521 = vmax.f32 %v1084, %v1393
        %v1522 = vmax.f32 %v1253, %v1394
        %v1523 = vmax.f32 %v1086, %v1395
        %v1524 = vmax.f32 %v1255, %v1396
        %v1525 = vmax.f32 %v1089, %v1397
        %v1526 = vmax.f32 %v1258, %v1398
        %v1527 = vmax.f32 %v1091, %v1399
        %v1528 = vmax.f32 %v1260, %v1400
        %v1529 = vmax.f32 %v1094, %v1401
        %v1530 = vmax.f32 %v1263, %v1402
        %v1531 = vmax.f32 %v1096, %v1403
        %v1532 = vmax.f32 %v1265, %v1404
        %v1533 = vmax.f32 %v1099, %v1405
        %v1534 = vmax.f32 %v1268, %v1406
        %v1535 = vmax.f32 %v1101, %v1407
        %v1536 = vmax.f32 %v1270, %v1408
        %v1537 = vmax.f32 %v1104, %v1409
        %v1538 = vmax.f32 %v1273, %v1410
        %v1539 = vmax.f32 %v1106, %v1411
        %v1540 = vmax.f32 %v1275, %v1412
        %v1541 = vmax.f32 %v1109, %v1413
        %v1542 = vmax.f32 %v1278, %v1414
        %v1543 = vmax.f32 %v1111, %v1415
        %v1544 = vmax.f32 %v1280, %v1416
        %v1545 = vmax.f32 %v1114, %v1417
        %v1546 = vmax.f32 %v1283, %v1418
        %v1547 = vmax.f32 %v1116, %v1419
        %v1548 = vmax.f32 %v1285, %v1420
        %v1549 = vmax.f32 %v1119, %v1421
        %v1550 = vmax.f32 %v1288, %v1422
        %v1551 = vmax.f32 %v1121, %v1423
        %v1552 = vmax.f32 %v1290, %v1424
        %v1553 = vmax.f32 %v1124, %v1425
        %v1554 = vmax.f32 %v1293, %v1426
        %v1555 = vmax.f32 %v1126, %v1427
        %v1556 = vmax.f32 %v1295, %v1428
        %v1557 = vmax.f32 %v1129, %v1429
        %v1558 = vmax.f32 %v1298, %v1430
        %v1559 = vmax.f32 %v1131, %v1431
        %v1560 = vmax.f32 %v1300, %v1432
        %v1561 = vmax.f32 %v1134, %v1433
        %v1562 = vmax.f32 %v1303, %v1434
        %v1563 = vmax.f32 %v1136, %v1435
        %v1564 = vmax.f32 %v1305, %v1436
        %v1565 = vmax.f32 %v1139, %v1437
        %v1566 = vmax.f32 %v1308, %v1438
        %v1567 = vmax.f32 %v1141, %v1439
        %v1568 = vmax.f32 %v1310, %v1440
        %v1569 = vmax.f32 %v1144, %v1441
        %v1570 = vmax.f32 %v1313, %v1442
        %v1571 = vmax.f32 %v1146, %v1443
        %v1572 = vmax.f32 %v1315, %v1444
        %v1573 = vpack.c.bf16 %v1447, %v1445
        %v1574 = vpack.c.bf16 %v1448, %v1446
        %v1575 = vpack.c.bf16 %v1451, %v1449
        %v1576 = vpack.c.bf16 %v1452, %v1450
        %v1577 = vpack.c.bf16 %v1455, %v1453
        %v1578 = vpack.c.bf16 %v1456, %v1454
        %v1579 = vpack.c.bf16 %v1459, %v1457
        %v1580 = vpack.c.bf16 %v1460, %v1458
        %v1581 = vpack.c.bf16 %v1463, %v1461
        %v1582 = vpack.c.bf16 %v1464, %v1462
        %v1583 = vpack.c.bf16 %v1467, %v1465
        %v1584 = vpack.c.bf16 %v1468, %v1466
        %v1585 = vpack.c.bf16 %v1471, %v1469
        %v1586 = vpack.c.bf16 %v1472, %v1470
        %v1587 = vpack.c.bf16 %v1475, %v1473
        %v1588 = vpack.c.bf16 %v1476, %v1474
        %v1589 = vpack.c.bf16 %v1479, %v1477
        %v1590 = vpack.c.bf16 %v1480, %v1478
        %v1591 = vpack.c.bf16 %v1483, %v1481
        %v1592 = vpack.c.bf16 %v1484, %v1482
        %v1593 = vpack.c.bf16 %v1487, %v1485
        %v1594 = vpack.c.bf16 %v1488, %v1486
        %v1595 = vpack.c.bf16 %v1491, %v1489
        %v1596 = vpack.c.bf16 %v1492, %v1490
        %v1597 = vpack.c.bf16 %v1495, %v1493
        %v1598 = vpack.c.bf16 %v1496, %v1494
        %v1599 = vpack.c.bf16 %v1499, %v1497
        %v1600 = vpack.c.bf16 %v1500, %v1498
        %v1601 = vpack.c.bf16 %v1503, %v1501
        %v1602 = vpack.c.bf16 %v1504, %v1502
        %v1603 = vpack.c.bf16 %v1507, %v1505
        %v1604 = vpack.c.bf16 %v1508, %v1506
        %v1605 = vpack.c.bf16 %v1511, %v1509
        %v1606 = vpack.c.bf16 %v1512, %v1510
        %v1607 = vpack.c.bf16 %v1515, %v1513
        %v1608 = vpack.c.bf16 %v1516, %v1514
        %v1609 = vpack.c.bf16 %v1519, %v1517
        %v1610 = vpack.c.bf16 %v1520, %v1518
        %v1611 = vpack.c.bf16 %v1523, %v1521
        %v1612 = vpack.c.bf16 %v1524, %v1522
        %v1613 = vpack.c.bf16 %v1527, %v1525
        %v1614 = vpack.c.bf16 %v1528, %v1526
        %v1615 = vpack.c.bf16 %v1531, %v1529
        %v1616 = vpack.c.bf16 %v1532, %v1530
        %v1617 = vpack.c.bf16 %v1535, %v1533
        %v1618 = vpack.c.bf16 %v1536, %v1534
        %v1619 = vpack.c.bf16 %v1539, %v1537
        %v1620 = vpack.c.bf16 %v1540, %v1538
        %v1621 = vpack.c.bf16 %v1543, %v1541
        %v1622 = vpack.c.bf16 %v1544, %v1542
        %v1623 = vpack.c.bf16 %v1547, %v1545
        %v1624 = vpack.c.bf16 %v1548, %v1546
        %v1625 = vpack.c.bf16 %v1551, %v1549
        %v1626 = vpack.c.bf16 %v1552, %v1550
        %v1627 = vpack.c.bf16 %v1555, %v1553
        %v1628 = vpack.c.bf16 %v1556, %v1554
        %v1629 = vpack.c.bf16 %v1559, %v1557
        %v1630 = vpack.c.bf16 %v1560, %v1558
        %v1631 = vpack.c.bf16 %v1563, %v1561
        %v1632 = vpack.c.bf16 %v1564, %v1562
        %v1633 = vpack.c.bf16 %v1567, %v1565
        %v1634 = vpack.c.bf16 %v1568, %v1566
        %v1635 = vpack.c.bf16 %v1571, %v1569
        %v1636 = vpack.c.bf16 %v1572, %v1570
        %v1637 = vld [vmem:[%s5] sm:$0xf]
        %v1638 = vld [vmem:[%s5 + $0x4] sm:$0xf]
        %v1639 = vld [vmem:[%s5 + $0x8] sm:$0xf]
        %v1640 = vld [vmem:[%s5 + $0xc] sm:$0xf]
        %v1641 = vld [vmem:[%s5 + $0x10] sm:$0xf]
        %v1642 = vld [vmem:[%s5 + $0x14] sm:$0xf]
        %v1643 = vld [vmem:[%s5 + $0x18] sm:$0xf]
        %v1644 = vld [vmem:[%s5 + $0x1c] sm:$0xf]
        %v1645 = vld [vmem:[%s5 + $0x20] sm:$0xf]
        %v1646 = vld [vmem:[%s5 + $0x24] sm:$0xf]
        %v1647 = vld [vmem:[%s5 + $0x28] sm:$0xf]
        %v1648 = vld [vmem:[%s5 + $0x2c] sm:$0xf]
        %v1649 = vld [vmem:[%s5 + $0x30] sm:$0xf]
        %v1650 = vld [vmem:[%s5 + $0x34] sm:$0xf]
        %v1651 = vld [vmem:[%s5 + $0x38] sm:$0xf]
        %v1652 = vld [vmem:[%s5 + $0x3c] sm:$0xf]
        %v1653 = vld [vmem:[%s5 + $0x40] sm:$0xf]
        %v1654 = vld [vmem:[%s5 + $0x44] sm:$0xf]
        %v1655 = vld [vmem:[%s5 + $0x48] sm:$0xf]
        %v1656 = vld [vmem:[%s5 + $0x4c] sm:$0xf]
        %v1657 = vld [vmem:[%s5 + $0x50] sm:$0xf]
        %v1658 = vld [vmem:[%s5 + $0x54] sm:$0xf]
        %v1659 = vld [vmem:[%s5 + $0x58] sm:$0xf]
        %v1660 = vld [vmem:[%s5 + $0x5c] sm:$0xf]
        %v1661 = vld [vmem:[%s5 + $0x60] sm:$0xf]
        %v1662 = vld [vmem:[%s5 + $0x64] sm:$0xf]
        %v1663 = vld [vmem:[%s5 + $0x68] sm:$0xf]
        %v1664 = vld [vmem:[%s5 + $0x6c] sm:$0xf]
        %v1665 = vld [vmem:[%s5 + $0x70] sm:$0xf]
        %v1666 = vld [vmem:[%s5 + $0x74] sm:$0xf]
        %v1667 = vld [vmem:[%s5 + $0x78] sm:$0xf]
        %v1668 = vld [vmem:[%s5 + $0x7c] sm:$0xf]
        %v1669 = vld [vmem:[%s6] sm:$0x1]
        %v1671 = vperm.slane %v1669, 0
        %v1705 = vunpack.c.l.b16 %v1637
        %v1706 = vunpack.c.l.b16 %v1638
        %v1707 = vunpack.c.l.b16 %v1639
        %v1708 = vunpack.c.l.b16 %v1640
        %v1709 = vunpack.c.l.b16 %v1641
        %v1710 = vunpack.c.l.b16 %v1642
        %v1711 = vunpack.c.l.b16 %v1643
        %v1712 = vunpack.c.l.b16 %v1644
        %v1713 = vunpack.c.l.b16 %v1645
        %v1714 = vunpack.c.l.b16 %v1646
        %v1715 = vunpack.c.l.b16 %v1647
        %v1716 = vunpack.c.l.b16 %v1648
        %v1717 = vunpack.c.l.b16 %v1649
        %v1718 = vunpack.c.l.b16 %v1650
        %v1719 = vunpack.c.l.b16 %v1651
        %v1720 = vunpack.c.l.b16 %v1652
        %v1721 = vunpack.c.l.b16 %v1653
        %v1722 = vunpack.c.l.b16 %v1654
        %v1723 = vunpack.c.l.b16 %v1655
        %v1724 = vunpack.c.l.b16 %v1656
        %v1725 = vunpack.c.l.b16 %v1657
        %v1726 = vunpack.c.l.b16 %v1658
        %v1727 = vunpack.c.l.b16 %v1659
        %v1728 = vunpack.c.l.b16 %v1660
        %v1729 = vunpack.c.l.b16 %v1661
        %v1730 = vunpack.c.l.b16 %v1662
        %v1731 = vunpack.c.l.b16 %v1663
        %v1732 = vunpack.c.l.b16 %v1664
        %v1733 = vunpack.c.l.b16 %v1665
        %v1734 = vunpack.c.l.b16 %v1666
        %v1735 = vunpack.c.l.b16 %v1667
        %v1736 = vunpack.c.l.b16 %v1668
        %v1737 = vpack.c.b16 %v1706, %v1705
        %v1738 = vpack.c.b16 %v1708, %v1707
        %v1739 = vpack.c.b16 %v1710, %v1709
        %v1740 = vpack.c.b16 %v1712, %v1711
        %v1741 = vpack.c.b16 %v1714, %v1713
        %v1742 = vpack.c.b16 %v1716, %v1715
        %v1743 = vpack.c.b16 %v1718, %v1717
        %v1744 = vpack.c.b16 %v1720, %v1719
        %v1745 = vpack.c.b16 %v1722, %v1721
        %v1746 = vpack.c.b16 %v1724, %v1723
        %v1747 = vpack.c.b16 %v1726, %v1725
        %v1748 = vpack.c.b16 %v1728, %v1727
        %v1749 = vpack.c.b16 %v1730, %v1729
        %v1750 = vpack.c.b16 %v1732, %v1731
        %v1751 = vpack.c.b16 %v1734, %v1733
        %v1752 = vpack.c.b16 %v1736, %v1735
        %1769 = vmatpush.bf16.msra.mxu0 %v1744
        %1770 = vmatpush.bf16.msra.mxu0 %v1743
        %1771 = vmatpush.bf16.msra.mxu0 %v1742
        %1772 = vmatpush.bf16.msra.mxu0 %v1741
        %1773 = vmatpush.bf16.msra.mxu0 %v1740
        %1774 = vmatpush.bf16.msra.mxu0 %v1739
        %1775 = vmatpush.bf16.msra.mxu0 %v1738
        %1776 = vmatpush.bf16.msra.mxu0 %v1737
        %1777 = vmatmul.bf16.gmra.mxu0 %v1573
        %v1778 = vpop.f32.mrf.mxu0
        %v1779 = vadd.f32 %v1671, %v1778
        %v1780 = vpop.f32.mrf.mxu0
        %v1781 = vadd.f32 %v1671, %v1780
        %1782 = vmatmul.bf16.gmra.mxu0 %v1575
        %v1783 = vpop.f32.mrf.mxu0
        %v1784 = vadd.f32 %v1671, %v1783
        %v1785 = vpop.f32.mrf.mxu0
        %v1786 = vadd.f32 %v1671, %v1785
        %1787 = vmatmul.bf16.gmra.mxu0 %v1577
        %v1788 = vpop.f32.mrf.mxu0
        %v1789 = vadd.f32 %v1671, %v1788
        %v1790 = vpop.f32.mrf.mxu0
        %v1791 = vadd.f32 %v1671, %v1790
        %1792 = vmatmul.bf16.gmra.mxu0 %v1579
        %v1793 = vpop.f32.mrf.mxu0
        %v1794 = vadd.f32 %v1671, %v1793
        %v1795 = vpop.f32.mrf.mxu0
        %v1796 = vadd.f32 %v1671, %v1795
        %1797 = vmatmul.bf16.gmra.mxu0 %v1581
        %v1798 = vpop.f32.mrf.mxu0
        %v1799 = vadd.f32 %v1671, %v1798
        %v1800 = vpop.f32.mrf.mxu0
        %v1801 = vadd.f32 %v1671, %v1800
        %1802 = vmatmul.bf16.gmra.mxu0 %v1583
        %v1803 = vpop.f32.mrf.mxu0
        %v1804 = vadd.f32 %v1671, %v1803
        %v1805 = vpop.f32.mrf.mxu0
        %v1806 = vadd.f32 %v1671, %v1805
        %1807 = vmatmul.bf16.gmra.mxu0 %v1585
        %v1808 = vpop.f32.mrf.mxu0
        %v1809 = vadd.f32 %v1671, %v1808
        %v1810 = vpop.f32.mrf.mxu0
        %v1811 = vadd.f32 %v1671, %v1810
        %1812 = vmatmul.bf16.gmra.mxu0 %v1587
        %v1813 = vpop.f32.mrf.mxu0
        %v1814 = vadd.f32 %v1671, %v1813
        %v1815 = vpop.f32.mrf.mxu0
        %v1816 = vadd.f32 %v1671, %v1815
        %1817 = vmatmul.bf16.gmra.mxu0 %v1589
        %v1818 = vpop.f32.mrf.mxu0
        %v1819 = vadd.f32 %v1671, %v1818
        %v1820 = vpop.f32.mrf.mxu0
        %v1821 = vadd.f32 %v1671, %v1820
        %1822 = vmatmul.bf16.gmra.mxu0 %v1591
        %v1823 = vpop.f32.mrf.mxu0
        %v1824 = vadd.f32 %v1671, %v1823
        %v1825 = vpop.f32.mrf.mxu0
        %v1826 = vadd.f32 %v1671, %v1825
        %1827 = vmatmul.bf16.gmra.mxu0 %v1593
        %v1828 = vpop.f32.mrf.mxu0
        %v1829 = vadd.f32 %v1671, %v1828
        %v1830 = vpop.f32.mrf.mxu0
        %v1831 = vadd.f32 %v1671, %v1830
        %1832 = vmatmul.bf16.gmra.mxu0 %v1595
        %v1833 = vpop.f32.mrf.mxu0
        %v1834 = vadd.f32 %v1671, %v1833
        %v1835 = vpop.f32.mrf.mxu0
        %v1836 = vadd.f32 %v1671, %v1835
        %1837 = vmatmul.bf16.gmra.mxu0 %v1597
        %v1838 = vpop.f32.mrf.mxu0
        %v1839 = vadd.f32 %v1671, %v1838
        %v1840 = vpop.f32.mrf.mxu0
        %v1841 = vadd.f32 %v1671, %v1840
        %1842 = vmatmul.bf16.gmra.mxu0 %v1599
        %v1843 = vpop.f32.mrf.mxu0
        %v1844 = vadd.f32 %v1671, %v1843
        %v1845 = vpop.f32.mrf.mxu0
        %v1846 = vadd.f32 %v1671, %v1845
        %1847 = vmatmul.bf16.gmra.mxu0 %v1601
        %v1848 = vpop.f32.mrf.mxu0
        %v1849 = vadd.f32 %v1671, %v1848
        %v1850 = vpop.f32.mrf.mxu0
        %v1851 = vadd.f32 %v1671, %v1850
        %1852 = vmatmul.bf16.gmra.mxu0 %v1603
        %v1853 = vpop.f32.mrf.mxu0
        %v1854 = vadd.f32 %v1671, %v1853
        %v1855 = vpop.f32.mrf.mxu0
        %v1856 = vadd.f32 %v1671, %v1855
        %1857 = vmatmul.bf16.gmra.mxu0 %v1605
        %v1858 = vpop.f32.mrf.mxu0
        %v1859 = vadd.f32 %v1671, %v1858
        %v1860 = vpop.f32.mrf.mxu0
        %v1861 = vadd.f32 %v1671, %v1860
        %1862 = vmatmul.bf16.gmra.mxu0 %v1607
        %v1863 = vpop.f32.mrf.mxu0
        %v1864 = vadd.f32 %v1671, %v1863
        %v1865 = vpop.f32.mrf.mxu0
        %v1866 = vadd.f32 %v1671, %v1865
        %1867 = vmatmul.bf16.gmra.mxu0 %v1609
        %v1868 = vpop.f32.mrf.mxu0
        %v1869 = vadd.f32 %v1671, %v1868
        %v1870 = vpop.f32.mrf.mxu0
        %v1871 = vadd.f32 %v1671, %v1870
        %1872 = vmatmul.bf16.gmra.mxu0 %v1611
        %v1873 = vpop.f32.mrf.mxu0
        %v1874 = vadd.f32 %v1671, %v1873
        %v1875 = vpop.f32.mrf.mxu0
        %v1876 = vadd.f32 %v1671, %v1875
        %1877 = vmatmul.bf16.gmra.mxu0 %v1613
        %v1878 = vpop.f32.mrf.mxu0
        %v1879 = vadd.f32 %v1671, %v1878
        %v1880 = vpop.f32.mrf.mxu0
        %v1881 = vadd.f32 %v1671, %v1880
        %1882 = vmatmul.bf16.gmra.mxu0 %v1615
        %v1883 = vpop.f32.mrf.mxu0
        %v1884 = vadd.f32 %v1671, %v1883
        %v1885 = vpop.f32.mrf.mxu0
        %v1886 = vadd.f32 %v1671, %v1885
        %1887 = vmatmul.bf16.gmra.mxu0 %v1617
        %v1888 = vpop.f32.mrf.mxu0
        %v1889 = vadd.f32 %v1671, %v1888
        %v1890 = vpop.f32.mrf.mxu0
        %v1891 = vadd.f32 %v1671, %v1890
        %1892 = vmatmul.bf16.gmra.mxu0 %v1619
        %v1893 = vpop.f32.mrf.mxu0
        %v1894 = vadd.f32 %v1671, %v1893
        %v1895 = vpop.f32.mrf.mxu0
        %v1896 = vadd.f32 %v1671, %v1895
        %1897 = vmatmul.bf16.gmra.mxu0 %v1621
        %v1898 = vpop.f32.mrf.mxu0
        %v1899 = vadd.f32 %v1671, %v1898
        %v1900 = vpop.f32.mrf.mxu0
        %v1901 = vadd.f32 %v1671, %v1900
        %1902 = vmatmul.bf16.gmra.mxu0 %v1623
        %v1903 = vpop.f32.mrf.mxu0
        %v1904 = vadd.f32 %v1671, %v1903
        %v1905 = vpop.f32.mrf.mxu0
        %v1906 = vadd.f32 %v1671, %v1905
        %1907 = vmatmul.bf16.gmra.mxu0 %v1625
        %v1908 = vpop.f32.mrf.mxu0
        %v1909 = vadd.f32 %v1671, %v1908
        %v1910 = vpop.f32.mrf.mxu0
        %v1911 = vadd.f32 %v1671, %v1910
        %1912 = vmatmul.bf16.gmra.mxu0 %v1627
        %v1913 = vpop.f32.mrf.mxu0
        %v1914 = vadd.f32 %v1671, %v1913
        %v1915 = vpop.f32.mrf.mxu0
        %v1916 = vadd.f32 %v1671, %v1915
        %1917 = vmatmul.bf16.gmra.mxu0 %v1629
        %v1918 = vpop.f32.mrf.mxu0
        %v1919 = vadd.f32 %v1671, %v1918
        %v1920 = vpop.f32.mrf.mxu0
        %v1921 = vadd.f32 %v1671, %v1920
        %1922 = vmatmul.bf16.gmra.mxu0 %v1631
        %v1923 = vpop.f32.mrf.mxu0
        %v1924 = vadd.f32 %v1671, %v1923
        %v1925 = vpop.f32.mrf.mxu0
        %v1926 = vadd.f32 %v1671, %v1925
        %1927 = vmatmul.bf16.gmra.mxu0 %v1633
        %v1928 = vpop.f32.mrf.mxu0
        %v1929 = vadd.f32 %v1671, %v1928
        %v1930 = vpop.f32.mrf.mxu0
        %v1931 = vadd.f32 %v1671, %v1930
        %1932 = vmatmul.bf16.gmra.mxu0 %v1635
        %v1933 = vpop.f32.mrf.mxu0
        %v1934 = vadd.f32 %v1671, %v1933
        %v1935 = vpop.f32.mrf.mxu0
        %v1936 = vadd.f32 %v1671, %v1935
        %1937 = vdwg.mxu0
        %1938 = vmatpush.bf16.msra.mxu0 %v1752
        %1939 = vmatpush.bf16.msra.mxu0 %v1751
        %1940 = vmatpush.bf16.msra.mxu0 %v1750
        %1941 = vmatpush.bf16.msra.mxu0 %v1749
        %1942 = vmatpush.bf16.msra.mxu0 %v1748
        %1943 = vmatpush.bf16.msra.mxu0 %v1747
        %1944 = vmatpush.bf16.msra.mxu0 %v1746
        %1945 = vmatpush.bf16.msra.mxu0 %v1745
        %1946 = vmatmul.bf16.gmra.mxu0 %v1574
        %v1947 = vpop.f32.mrf.mxu0
        %v1948 = vadd.f32 %v1779, %v1947
        %v1949 = vpop.f32.mrf.mxu0
        %v1950 = vadd.f32 %v1781, %v1949
        %1951 = vmatmul.bf16.gmra.mxu0 %v1576
        %v1952 = vpop.f32.mrf.mxu0
        %v1953 = vadd.f32 %v1784, %v1952
        %v1954 = vpop.f32.mrf.mxu0
        %v1955 = vadd.f32 %v1786, %v1954
        %1956 = vmatmul.bf16.gmra.mxu0 %v1578
        %v1957 = vpop.f32.mrf.mxu0
        %v1958 = vadd.f32 %v1789, %v1957
        %v1959 = vpop.f32.mrf.mxu0
        %v1960 = vadd.f32 %v1791, %v1959
        %1961 = vmatmul.bf16.gmra.mxu0 %v1580
        %v1962 = vpop.f32.mrf.mxu0
        %v1963 = vadd.f32 %v1794, %v1962
        %v1964 = vpop.f32.mrf.mxu0
        %v1965 = vadd.f32 %v1796, %v1964
        %1966 = vmatmul.bf16.gmra.mxu0 %v1582
        %v1967 = vpop.f32.mrf.mxu0
        %v1968 = vadd.f32 %v1799, %v1967
        %v1969 = vpop.f32.mrf.mxu0
        %v1970 = vadd.f32 %v1801, %v1969
        %1971 = vmatmul.bf16.gmra.mxu0 %v1584
        %v1972 = vpop.f32.mrf.mxu0
        %v1973 = vadd.f32 %v1804, %v1972
        %v1974 = vpop.f32.mrf.mxu0
        %v1975 = vadd.f32 %v1806, %v1974
        %1976 = vmatmul.bf16.gmra.mxu0 %v1586
        %v1977 = vpop.f32.mrf.mxu0
        %v1978 = vadd.f32 %v1809, %v1977
        %v1979 = vpop.f32.mrf.mxu0
        %v1980 = vadd.f32 %v1811, %v1979
        %1981 = vmatmul.bf16.gmra.mxu0 %v1588
        %v1982 = vpop.f32.mrf.mxu0
        %v1983 = vadd.f32 %v1814, %v1982
        %v1984 = vpop.f32.mrf.mxu0
        %v1985 = vadd.f32 %v1816, %v1984
        %1986 = vmatmul.bf16.gmra.mxu0 %v1590
        %v1987 = vpop.f32.mrf.mxu0
        %v1988 = vadd.f32 %v1819, %v1987
        %v1989 = vpop.f32.mrf.mxu0
        %v1990 = vadd.f32 %v1821, %v1989
        %1991 = vmatmul.bf16.gmra.mxu0 %v1592
        %v1992 = vpop.f32.mrf.mxu0
        %v1993 = vadd.f32 %v1824, %v1992
        %v1994 = vpop.f32.mrf.mxu0
        %v1995 = vadd.f32 %v1826, %v1994
        %1996 = vmatmul.bf16.gmra.mxu0 %v1594
        %v1997 = vpop.f32.mrf.mxu0
        %v1998 = vadd.f32 %v1829, %v1997
        %v1999 = vpop.f32.mrf.mxu0
        %v2000 = vadd.f32 %v1831, %v1999
        %2001 = vmatmul.bf16.gmra.mxu0 %v1596
        %v2002 = vpop.f32.mrf.mxu0
        %v2003 = vadd.f32 %v1834, %v2002
        %v2004 = vpop.f32.mrf.mxu0
        %v2005 = vadd.f32 %v1836, %v2004
        %2006 = vmatmul.bf16.gmra.mxu0 %v1598
        %v2007 = vpop.f32.mrf.mxu0
        %v2008 = vadd.f32 %v1839, %v2007
        %v2009 = vpop.f32.mrf.mxu0
        %v2010 = vadd.f32 %v1841, %v2009
        %2011 = vmatmul.bf16.gmra.mxu0 %v1600
        %v2012 = vpop.f32.mrf.mxu0
        %v2013 = vadd.f32 %v1844, %v2012
        %v2014 = vpop.f32.mrf.mxu0
        %v2015 = vadd.f32 %v1846, %v2014
        %2016 = vmatmul.bf16.gmra.mxu0 %v1602
        %v2017 = vpop.f32.mrf.mxu0
        %v2018 = vadd.f32 %v1849, %v2017
        %v2019 = vpop.f32.mrf.mxu0
        %v2020 = vadd.f32 %v1851, %v2019
        %2021 = vmatmul.bf16.gmra.mxu0 %v1604
        %v2022 = vpop.f32.mrf.mxu0
        %v2023 = vadd.f32 %v1854, %v2022
        %v2024 = vpop.f32.mrf.mxu0
        %v2025 = vadd.f32 %v1856, %v2024
        %2026 = vmatmul.bf16.gmra.mxu0 %v1606
        %v2027 = vpop.f32.mrf.mxu0
        %v2028 = vadd.f32 %v1859, %v2027
        %v2029 = vpop.f32.mrf.mxu0
        %v2030 = vadd.f32 %v1861, %v2029
        %2031 = vmatmul.bf16.gmra.mxu0 %v1608
        %v2032 = vpop.f32.mrf.mxu0
        %v2033 = vadd.f32 %v1864, %v2032
        %v2034 = vpop.f32.mrf.mxu0
        %v2035 = vadd.f32 %v1866, %v2034
        %2036 = vmatmul.bf16.gmra.mxu0 %v1610
        %v2037 = vpop.f32.mrf.mxu0
        %v2038 = vadd.f32 %v1869, %v2037
        %v2039 = vpop.f32.mrf.mxu0
        %v2040 = vadd.f32 %v1871, %v2039
        %2041 = vmatmul.bf16.gmra.mxu0 %v1612
        %v2042 = vpop.f32.mrf.mxu0
        %v2043 = vadd.f32 %v1874, %v2042
        %v2044 = vpop.f32.mrf.mxu0
        %v2045 = vadd.f32 %v1876, %v2044
        %2046 = vmatmul.bf16.gmra.mxu0 %v1614
        %v2047 = vpop.f32.mrf.mxu0
        %v2048 = vadd.f32 %v1879, %v2047
        %v2049 = vpop.f32.mrf.mxu0
        %v2050 = vadd.f32 %v1881, %v2049
        %2051 = vmatmul.bf16.gmra.mxu0 %v1616
        %v2052 = vpop.f32.mrf.mxu0
        %v2053 = vadd.f32 %v1884, %v2052
        %v2054 = vpop.f32.mrf.mxu0
        %v2055 = vadd.f32 %v1886, %v2054
        %2056 = vmatmul.bf16.gmra.mxu0 %v1618
        %v2057 = vpop.f32.mrf.mxu0
        %v2058 = vadd.f32 %v1889, %v2057
        %v2059 = vpop.f32.mrf.mxu0
        %v2060 = vadd.f32 %v1891, %v2059
        %2061 = vmatmul.bf16.gmra.mxu0 %v1620
        %v2062 = vpop.f32.mrf.mxu0
        %v2063 = vadd.f32 %v1894, %v2062
        %v2064 = vpop.f32.mrf.mxu0
        %v2065 = vadd.f32 %v1896, %v2064
        %2066 = vmatmul.bf16.gmra.mxu0 %v1622
        %v2067 = vpop.f32.mrf.mxu0
        %v2068 = vadd.f32 %v1899, %v2067
        %v2069 = vpop.f32.mrf.mxu0
        %v2070 = vadd.f32 %v1901, %v2069
        %2071 = vmatmul.bf16.gmra.mxu0 %v1624
        %v2072 = vpop.f32.mrf.mxu0
        %v2073 = vadd.f32 %v1904, %v2072
        %v2074 = vpop.f32.mrf.mxu0
        %v2075 = vadd.f32 %v1906, %v2074
        %2076 = vmatmul.bf16.gmra.mxu0 %v1626
        %v2077 = vpop.f32.mrf.mxu0
        %v2078 = vadd.f32 %v1909, %v2077
        %v2079 = vpop.f32.mrf.mxu0
        %v2080 = vadd.f32 %v1911, %v2079
        %2081 = vmatmul.bf16.gmra.mxu0 %v1628
        %v2082 = vpop.f32.mrf.mxu0
        %v2083 = vadd.f32 %v1914, %v2082
        %v2084 = vpop.f32.mrf.mxu0
        %v2085 = vadd.f32 %v1916, %v2084
        %2086 = vmatmul.bf16.gmra.mxu0 %v1630
        %v2087 = vpop.f32.mrf.mxu0
        %v2088 = vadd.f32 %v1919, %v2087
        %v2089 = vpop.f32.mrf.mxu0
        %v2090 = vadd.f32 %v1921, %v2089
        %2091 = vmatmul.bf16.gmra.mxu0 %v1632
        %v2092 = vpop.f32.mrf.mxu0
        %v2093 = vadd.f32 %v1924, %v2092
        %v2094 = vpop.f32.mrf.mxu0
        %v2095 = vadd.f32 %v1926, %v2094
        %2096 = vmatmul.bf16.gmra.mxu0 %v1634
        %v2097 = vpop.f32.mrf.mxu0
        %v2098 = vadd.f32 %v1929, %v2097
        %v2099 = vpop.f32.mrf.mxu0
        %v2100 = vadd.f32 %v1931, %v2099
        %2101 = vmatmul.bf16.gmra.mxu0 %v1636
        %v2102 = vpop.f32.mrf.mxu0
        %v2103 = vadd.f32 %v1934, %v2102
        %v2104 = vpop.f32.mrf.mxu0
        %v2105 = vadd.f32 %v1936, %v2104
        %2106 = vdwg.mxu0
        %v2107 = vmul.f32 %v1948, 0.01
        %v2108 = vmul.f32 %v1950, 0.01
        %v2109 = vmul.f32 %v1953, 0.01
        %v2110 = vmul.f32 %v1955, 0.01
        %v2111 = vmul.f32 %v1958, 0.01
        %v2112 = vmul.f32 %v1960, 0.01
        %v2113 = vmul.f32 %v1963, 0.01
        %v2114 = vmul.f32 %v1965, 0.01
        %v2115 = vmul.f32 %v1968, 0.01
        %v2116 = vmul.f32 %v1970, 0.01
        %v2117 = vmul.f32 %v1973, 0.01
        %v2118 = vmul.f32 %v1975, 0.01
        %v2119 = vmul.f32 %v1978, 0.01
        %v2120 = vmul.f32 %v1980, 0.01
        %v2121 = vmul.f32 %v1983, 0.01
        %v2122 = vmul.f32 %v1985, 0.01
        %v2123 = vmul.f32 %v1988, 0.01
        %v2124 = vmul.f32 %v1990, 0.01
        %v2125 = vmul.f32 %v1993, 0.01
        %v2126 = vmul.f32 %v1995, 0.01
        %v2127 = vmul.f32 %v1998, 0.01
        %v2128 = vmul.f32 %v2000, 0.01
        %v2129 = vmul.f32 %v2003, 0.01
        %v2130 = vmul.f32 %v2005, 0.01
        %v2131 = vmul.f32 %v2008, 0.01
        %v2132 = vmul.f32 %v2010, 0.01
        %v2133 = vmul.f32 %v2013, 0.01
        %v2134 = vmul.f32 %v2015, 0.01
        %v2135 = vmul.f32 %v2018, 0.01
        %v2136 = vmul.f32 %v2020, 0.01
        %v2137 = vmul.f32 %v2023, 0.01
        %v2138 = vmul.f32 %v2025, 0.01
        %v2139 = vmul.f32 %v2028, 0.01
        %v2140 = vmul.f32 %v2030, 0.01
        %v2141 = vmul.f32 %v2033, 0.01
        %v2142 = vmul.f32 %v2035, 0.01
        %v2143 = vmul.f32 %v2038, 0.01
        %v2144 = vmul.f32 %v2040, 0.01
        %v2145 = vmul.f32 %v2043, 0.01
        %v2146 = vmul.f32 %v2045, 0.01
        %v2147 = vmul.f32 %v2048, 0.01
        %v2148 = vmul.f32 %v2050, 0.01
        %v2149 = vmul.f32 %v2053, 0.01
        %v2150 = vmul.f32 %v2055, 0.01
        %v2151 = vmul.f32 %v2058, 0.01
        %v2152 = vmul.f32 %v2060, 0.01
        %v2153 = vmul.f32 %v2063, 0.01
        %v2154 = vmul.f32 %v2065, 0.01
        %v2155 = vmul.f32 %v2068, 0.01
        %v2156 = vmul.f32 %v2070, 0.01
        %v2157 = vmul.f32 %v2073, 0.01
        %v2158 = vmul.f32 %v2075, 0.01
        %v2159 = vmul.f32 %v2078, 0.01
        %v2160 = vmul.f32 %v2080, 0.01
        %v2161 = vmul.f32 %v2083, 0.01
        %v2162 = vmul.f32 %v2085, 0.01
        %v2163 = vmul.f32 %v2088, 0.01
        %v2164 = vmul.f32 %v2090, 0.01
        %v2165 = vmul.f32 %v2093, 0.01
        %v2166 = vmul.f32 %v2095, 0.01
        %v2167 = vmul.f32 %v2098, 0.01
        %v2168 = vmul.f32 %v2100, 0.01
        %v2169 = vmul.f32 %v2103, 0.01
        %v2170 = vmul.f32 %v2105, 0.01
        %v2171 = vmax.f32 %v1948, %v2107
        %v2172 = vmax.f32 %v1950, %v2108
        %v2173 = vmax.f32 %v1953, %v2109
        %v2174 = vmax.f32 %v1955, %v2110
        %v2175 = vmax.f32 %v1958, %v2111
        %v2176 = vmax.f32 %v1960, %v2112
        %v2177 = vmax.f32 %v1963, %v2113
        %v2178 = vmax.f32 %v1965, %v2114
        %v2179 = vmax.f32 %v1968, %v2115
        %v2180 = vmax.f32 %v1970, %v2116
        %v2181 = vmax.f32 %v1973, %v2117
        %v2182 = vmax.f32 %v1975, %v2118
        %v2183 = vmax.f32 %v1978, %v2119
        %v2184 = vmax.f32 %v1980, %v2120
        %v2185 = vmax.f32 %v1983, %v2121
        %v2186 = vmax.f32 %v1985, %v2122
        %v2187 = vmax.f32 %v1988, %v2123
        %v2188 = vmax.f32 %v1990, %v2124
        %v2189 = vmax.f32 %v1993, %v2125
        %v2190 = vmax.f32 %v1995, %v2126
        %v2191 = vmax.f32 %v1998, %v2127
        %v2192 = vmax.f32 %v2000, %v2128
        %v2193 = vmax.f32 %v2003, %v2129
        %v2194 = vmax.f32 %v2005, %v2130
        %v2195 = vmax.f32 %v2008, %v2131
        %v2196 = vmax.f32 %v2010, %v2132
        %v2197 = vmax.f32 %v2013, %v2133
        %v2198 = vmax.f32 %v2015, %v2134
        %v2199 = vmax.f32 %v2018, %v2135
        %v2200 = vmax.f32 %v2020, %v2136
        %v2201 = vmax.f32 %v2023, %v2137
        %v2202 = vmax.f32 %v2025, %v2138
        %v2203 = vmax.f32 %v2028, %v2139
        %v2204 = vmax.f32 %v2030, %v2140
        %v2205 = vmax.f32 %v2033, %v2141
        %v2206 = vmax.f32 %v2035, %v2142
        %v2207 = vmax.f32 %v2038, %v2143
        %v2208 = vmax.f32 %v2040, %v2144
        %v2209 = vmax.f32 %v2043, %v2145
        %v2210 = vmax.f32 %v2045, %v2146
        %v2211 = vmax.f32 %v2048, %v2147
        %v2212 = vmax.f32 %v2050, %v2148
        %v2213 = vmax.f32 %v2053, %v2149
        %v2214 = vmax.f32 %v2055, %v2150
        %v2215 = vmax.f32 %v2058, %v2151
        %v2216 = vmax.f32 %v2060, %v2152
        %v2217 = vmax.f32 %v2063, %v2153
        %v2218 = vmax.f32 %v2065, %v2154
        %v2219 = vmax.f32 %v2068, %v2155
        %v2220 = vmax.f32 %v2070, %v2156
        %v2221 = vmax.f32 %v2073, %v2157
        %v2222 = vmax.f32 %v2075, %v2158
        %v2223 = vmax.f32 %v2078, %v2159
        %v2224 = vmax.f32 %v2080, %v2160
        %v2225 = vmax.f32 %v2083, %v2161
        %v2226 = vmax.f32 %v2085, %v2162
        %v2227 = vmax.f32 %v2088, %v2163
        %v2228 = vmax.f32 %v2090, %v2164
        %v2229 = vmax.f32 %v2093, %v2165
        %v2230 = vmax.f32 %v2095, %v2166
        %v2231 = vmax.f32 %v2098, %v2167
        %v2232 = vmax.f32 %v2100, %v2168
        %v2233 = vmax.f32 %v2103, %v2169
        %v2234 = vmax.f32 %v2105, %v2170
        %v2235 = vpack.c.bf16 %v2172, %v2171
        %v2236 = vpack.c.bf16 %v2174, %v2173
        %v2237 = vpack.c.bf16 %v2176, %v2175
        %v2238 = vpack.c.bf16 %v2178, %v2177
        %v2239 = vpack.c.bf16 %v2180, %v2179
        %v2240 = vpack.c.bf16 %v2182, %v2181
        %v2241 = vpack.c.bf16 %v2184, %v2183
        %v2242 = vpack.c.bf16 %v2186, %v2185
        %v2243 = vpack.c.bf16 %v2188, %v2187
        %v2244 = vpack.c.bf16 %v2190, %v2189
        %v2245 = vpack.c.bf16 %v2192, %v2191
        %v2246 = vpack.c.bf16 %v2194, %v2193
        %v2247 = vpack.c.bf16 %v2196, %v2195
        %v2248 = vpack.c.bf16 %v2198, %v2197
        %v2249 = vpack.c.bf16 %v2200, %v2199
        %v2250 = vpack.c.bf16 %v2202, %v2201
        %v2251 = vpack.c.bf16 %v2204, %v2203
        %v2252 = vpack.c.bf16 %v2206, %v2205
        %v2253 = vpack.c.bf16 %v2208, %v2207
        %v2254 = vpack.c.bf16 %v2210, %v2209
        %v2255 = vpack.c.bf16 %v2212, %v2211
        %v2256 = vpack.c.bf16 %v2214, %v2213
        %v2257 = vpack.c.bf16 %v2216, %v2215
        %v2258 = vpack.c.bf16 %v2218, %v2217
        %v2259 = vpack.c.bf16 %v2220, %v2219
        %v2260 = vpack.c.bf16 %v2222, %v2221
        %v2261 = vpack.c.bf16 %v2224, %v2223
        %v2262 = vpack.c.bf16 %v2226, %v2225
        %v2263 = vpack.c.bf16 %v2228, %v2227
        %v2264 = vpack.c.bf16 %v2230, %v2229
        %v2265 = vpack.c.bf16 %v2232, %v2231
        %v2266 = vpack.c.bf16 %v2234, %v2233
        %v2267 = vld [vmem:[%s7] sm:$0xf]
        %v2268 = vld [vmem:[%s7 + $0x4] sm:$0xf]
        %v2269 = vld [vmem:[%s7 + $0x8] sm:$0xf]
        %v2270 = vld [vmem:[%s7 + $0xc] sm:$0xf]
        %v2271 = vld [vmem:[%s7 + $0x10] sm:$0xf]
        %v2272 = vld [vmem:[%s7 + $0x14] sm:$0xf]
        %v2273 = vld [vmem:[%s7 + $0x18] sm:$0xf]
        %v2274 = vld [vmem:[%s7 + $0x1c] sm:$0xf]
        %v2275 = vld [vmem:[%s7 + $0x20] sm:$0xf]
        %v2276 = vld [vmem:[%s7 + $0x24] sm:$0xf]
        %v2277 = vld [vmem:[%s7 + $0x28] sm:$0xf]
        %v2278 = vld [vmem:[%s7 + $0x2c] sm:$0xf]
        %v2279 = vld [vmem:[%s7 + $0x30] sm:$0xf]
        %v2280 = vld [vmem:[%s7 + $0x34] sm:$0xf]
        %v2281 = vld [vmem:[%s7 + $0x38] sm:$0xf]
        %v2282 = vld [vmem:[%s7 + $0x3c] sm:$0xf]
        %v2283 = vld [vmem:[%s8] sm:$0x1]
        %v2285 = vperm.slane %v2283, 0
        %v2303 = vunpack.c.l.b16 %v2267
        %v2304 = vunpack.c.l.b16 %v2268
        %v2305 = vunpack.c.l.b16 %v2269
        %v2306 = vunpack.c.l.b16 %v2270
        %v2307 = vunpack.c.l.b16 %v2271
        %v2308 = vunpack.c.l.b16 %v2272
        %v2309 = vunpack.c.l.b16 %v2273
        %v2310 = vunpack.c.l.b16 %v2274
        %v2311 = vunpack.c.l.b16 %v2275
        %v2312 = vunpack.c.l.b16 %v2276
        %v2313 = vunpack.c.l.b16 %v2277
        %v2314 = vunpack.c.l.b16 %v2278
        %v2315 = vunpack.c.l.b16 %v2279
        %v2316 = vunpack.c.l.b16 %v2280
        %v2317 = vunpack.c.l.b16 %v2281
        %v2318 = vunpack.c.l.b16 %v2282
        %v2319 = vpack.c.b16 %v2304, %v2303
        %v2320 = vpack.c.b16 %v2306, %v2305
        %v2321 = vpack.c.b16 %v2308, %v2307
        %v2322 = vpack.c.b16 %v2310, %v2309
        %v2323 = vpack.c.b16 %v2312, %v2311
        %v2324 = vpack.c.b16 %v2314, %v2313
        %v2325 = vpack.c.b16 %v2316, %v2315
        %v2326 = vpack.c.b16 %v2318, %v2317
        %2335 = vmatpush.bf16.msra.mxu0 %v2326
        %2336 = vmatpush.bf16.msra.mxu0 %v2325
        %2337 = vmatpush.bf16.msra.mxu0 %v2324
        %2338 = vmatpush.bf16.msra.mxu0 %v2323
        %2339 = vmatpush.bf16.msra.mxu0 %v2322
        %2340 = vmatpush.bf16.msra.mxu0 %v2321
        %2341 = vmatpush.bf16.msra.mxu0 %v2320
        %2342 = vmatpush.bf16.msra.mxu0 %v2319
        %2343 = vmatmul.bf16.gmra.mxu0 %v2235
        %v2344 = vpop.f32.mrf.mxu0
        %v2345 = vadd.f32 %v2285, %v2344
        %v2346 = vpop.f32.mrf.mxu0
        %v2347 = vadd.f32 %v2285, %v2346
        %2348 = vmatmul.bf16.gmra.mxu0 %v2236
        %v2349 = vpop.f32.mrf.mxu0
        %v2350 = vadd.f32 %v2285, %v2349
        %v2351 = vpop.f32.mrf.mxu0
        %v2352 = vadd.f32 %v2285, %v2351
        %2353 = vmatmul.bf16.gmra.mxu0 %v2237
        %v2354 = vpop.f32.mrf.mxu0
        %v2355 = vadd.f32 %v2285, %v2354
        %v2356 = vpop.f32.mrf.mxu0
        %v2357 = vadd.f32 %v2285, %v2356
        %2358 = vmatmul.bf16.gmra.mxu0 %v2238
        %v2359 = vpop.f32.mrf.mxu0
        %v2360 = vadd.f32 %v2285, %v2359
        %v2361 = vpop.f32.mrf.mxu0
        %v2362 = vadd.f32 %v2285, %v2361
        %2363 = vmatmul.bf16.gmra.mxu0 %v2239
        %v2364 = vpop.f32.mrf.mxu0
        %v2365 = vadd.f32 %v2285, %v2364
        %v2366 = vpop.f32.mrf.mxu0
        %v2367 = vadd.f32 %v2285, %v2366
        %2368 = vmatmul.bf16.gmra.mxu0 %v2240
        %v2369 = vpop.f32.mrf.mxu0
        %v2370 = vadd.f32 %v2285, %v2369
        %v2371 = vpop.f32.mrf.mxu0
        %v2372 = vadd.f32 %v2285, %v2371
        %2373 = vmatmul.bf16.gmra.mxu0 %v2241
        %v2374 = vpop.f32.mrf.mxu0
        %v2375 = vadd.f32 %v2285, %v2374
        %v2376 = vpop.f32.mrf.mxu0
        %v2377 = vadd.f32 %v2285, %v2376
        %2378 = vmatmul.bf16.gmra.mxu0 %v2242
        %v2379 = vpop.f32.mrf.mxu0
        %v2380 = vadd.f32 %v2285, %v2379
        %v2381 = vpop.f32.mrf.mxu0
        %v2382 = vadd.f32 %v2285, %v2381
        %2383 = vmatmul.bf16.gmra.mxu0 %v2243
        %v2384 = vpop.f32.mrf.mxu0
        %v2385 = vadd.f32 %v2285, %v2384
        %v2386 = vpop.f32.mrf.mxu0
        %v2387 = vadd.f32 %v2285, %v2386
        %2388 = vmatmul.bf16.gmra.mxu0 %v2244
        %v2389 = vpop.f32.mrf.mxu0
        %v2390 = vadd.f32 %v2285, %v2389
        %v2391 = vpop.f32.mrf.mxu0
        %v2392 = vadd.f32 %v2285, %v2391
        %2393 = vmatmul.bf16.gmra.mxu0 %v2245
        %v2394 = vpop.f32.mrf.mxu0
        %v2395 = vadd.f32 %v2285, %v2394
        %v2396 = vpop.f32.mrf.mxu0
        %v2397 = vadd.f32 %v2285, %v2396
        %2398 = vmatmul.bf16.gmra.mxu0 %v2246
        %v2399 = vpop.f32.mrf.mxu0
        %v2400 = vadd.f32 %v2285, %v2399
        %v2401 = vpop.f32.mrf.mxu0
        %v2402 = vadd.f32 %v2285, %v2401
        %2403 = vmatmul.bf16.gmra.mxu0 %v2247
        %v2404 = vpop.f32.mrf.mxu0
        %v2405 = vadd.f32 %v2285, %v2404
        %v2406 = vpop.f32.mrf.mxu0
        %v2407 = vadd.f32 %v2285, %v2406
        %2408 = vmatmul.bf16.gmra.mxu0 %v2248
        %v2409 = vpop.f32.mrf.mxu0
        %v2410 = vadd.f32 %v2285, %v2409
        %v2411 = vpop.f32.mrf.mxu0
        %v2412 = vadd.f32 %v2285, %v2411
        %2413 = vmatmul.bf16.gmra.mxu0 %v2249
        %v2414 = vpop.f32.mrf.mxu0
        %v2415 = vadd.f32 %v2285, %v2414
        %v2416 = vpop.f32.mrf.mxu0
        %v2417 = vadd.f32 %v2285, %v2416
        %2418 = vmatmul.bf16.gmra.mxu0 %v2250
        %v2419 = vpop.f32.mrf.mxu0
        %v2420 = vadd.f32 %v2285, %v2419
        %v2421 = vpop.f32.mrf.mxu0
        %v2422 = vadd.f32 %v2285, %v2421
        %2423 = vmatmul.bf16.gmra.mxu0 %v2251
        %v2424 = vpop.f32.mrf.mxu0
        %v2425 = vadd.f32 %v2285, %v2424
        %v2426 = vpop.f32.mrf.mxu0
        %v2427 = vadd.f32 %v2285, %v2426
        %2428 = vmatmul.bf16.gmra.mxu0 %v2252
        %v2429 = vpop.f32.mrf.mxu0
        %v2430 = vadd.f32 %v2285, %v2429
        %v2431 = vpop.f32.mrf.mxu0
        %v2432 = vadd.f32 %v2285, %v2431
        %2433 = vmatmul.bf16.gmra.mxu0 %v2253
        %v2434 = vpop.f32.mrf.mxu0
        %v2435 = vadd.f32 %v2285, %v2434
        %v2436 = vpop.f32.mrf.mxu0
        %v2437 = vadd.f32 %v2285, %v2436
        %2438 = vmatmul.bf16.gmra.mxu0 %v2254
        %v2439 = vpop.f32.mrf.mxu0
        %v2440 = vadd.f32 %v2285, %v2439
        %v2441 = vpop.f32.mrf.mxu0
        %v2442 = vadd.f32 %v2285, %v2441
        %2443 = vmatmul.bf16.gmra.mxu0 %v2255
        %v2444 = vpop.f32.mrf.mxu0
        %v2445 = vadd.f32 %v2285, %v2444
        %v2446 = vpop.f32.mrf.mxu0
        %v2447 = vadd.f32 %v2285, %v2446
        %2448 = vmatmul.bf16.gmra.mxu0 %v2256
        %v2449 = vpop.f32.mrf.mxu0
        %v2450 = vadd.f32 %v2285, %v2449
        %v2451 = vpop.f32.mrf.mxu0
        %v2452 = vadd.f32 %v2285, %v2451
        %2453 = vmatmul.bf16.gmra.mxu0 %v2257
        %v2454 = vpop.f32.mrf.mxu0
        %v2455 = vadd.f32 %v2285, %v2454
        %v2456 = vpop.f32.mrf.mxu0
        %v2457 = vadd.f32 %v2285, %v2456
        %2458 = vmatmul.bf16.gmra.mxu0 %v2258
        %v2459 = vpop.f32.mrf.mxu0
        %v2460 = vadd.f32 %v2285, %v2459
        %v2461 = vpop.f32.mrf.mxu0
        %v2462 = vadd.f32 %v2285, %v2461
        %2463 = vmatmul.bf16.gmra.mxu0 %v2259
        %v2464 = vpop.f32.mrf.mxu0
        %v2465 = vadd.f32 %v2285, %v2464
        %v2466 = vpop.f32.mrf.mxu0
        %v2467 = vadd.f32 %v2285, %v2466
        %2468 = vmatmul.bf16.gmra.mxu0 %v2260
        %v2469 = vpop.f32.mrf.mxu0
        %v2470 = vadd.f32 %v2285, %v2469
        %v2471 = vpop.f32.mrf.mxu0
        %v2472 = vadd.f32 %v2285, %v2471
        %2473 = vmatmul.bf16.gmra.mxu0 %v2261
        %v2474 = vpop.f32.mrf.mxu0
        %v2475 = vadd.f32 %v2285, %v2474
        %v2476 = vpop.f32.mrf.mxu0
        %v2477 = vadd.f32 %v2285, %v2476
        %2478 = vmatmul.bf16.gmra.mxu0 %v2262
        %v2479 = vpop.f32.mrf.mxu0
        %v2480 = vadd.f32 %v2285, %v2479
        %v2481 = vpop.f32.mrf.mxu0
        %v2482 = vadd.f32 %v2285, %v2481
        %2483 = vmatmul.bf16.gmra.mxu0 %v2263
        %v2484 = vpop.f32.mrf.mxu0
        %v2485 = vadd.f32 %v2285, %v2484
        %v2486 = vpop.f32.mrf.mxu0
        %v2487 = vadd.f32 %v2285, %v2486
        %2488 = vmatmul.bf16.gmra.mxu0 %v2264
        %v2489 = vpop.f32.mrf.mxu0
        %v2490 = vadd.f32 %v2285, %v2489
        %v2491 = vpop.f32.mrf.mxu0
        %v2492 = vadd.f32 %v2285, %v2491
        %2493 = vmatmul.bf16.gmra.mxu0 %v2265
        %v2494 = vpop.f32.mrf.mxu0
        %v2495 = vadd.f32 %v2285, %v2494
        %v2496 = vpop.f32.mrf.mxu0
        %v2497 = vadd.f32 %v2285, %v2496
        %2498 = vmatmul.bf16.gmra.mxu0 %v2266
        %v2499 = vpop.f32.mrf.mxu0
        %v2500 = vadd.f32 %v2285, %v2499
        %v2501 = vpop.f32.mrf.mxu0
        %v2502 = vadd.f32 %v2285, %v2501
        %2503 = vdwg.mxu0
        %v2504 = vxor.u32 %v2345, 2147483648
        %v2505 = vxor.u32 %v2347, 2147483648
        %v2506 = vxor.u32 %v2350, 2147483648
        %v2507 = vxor.u32 %v2352, 2147483648
        %v2508 = vxor.u32 %v2355, 2147483648
        %v2509 = vxor.u32 %v2357, 2147483648
        %v2510 = vxor.u32 %v2360, 2147483648
        %v2511 = vxor.u32 %v2362, 2147483648
        %v2512 = vxor.u32 %v2365, 2147483648
        %v2513 = vxor.u32 %v2367, 2147483648
        %v2514 = vxor.u32 %v2370, 2147483648
        %v2515 = vxor.u32 %v2372, 2147483648
        %v2516 = vxor.u32 %v2375, 2147483648
        %v2517 = vxor.u32 %v2377, 2147483648
        %v2518 = vxor.u32 %v2380, 2147483648
        %v2519 = vxor.u32 %v2382, 2147483648
        %v2520 = vxor.u32 %v2385, 2147483648
        %v2521 = vxor.u32 %v2387, 2147483648
        %v2522 = vxor.u32 %v2390, 2147483648
        %v2523 = vxor.u32 %v2392, 2147483648
        %v2524 = vxor.u32 %v2395, 2147483648
        %v2525 = vxor.u32 %v2397, 2147483648
        %v2526 = vxor.u32 %v2400, 2147483648
        %v2527 = vxor.u32 %v2402, 2147483648
        %v2528 = vxor.u32 %v2405, 2147483648
        %v2529 = vxor.u32 %v2407, 2147483648
        %v2530 = vxor.u32 %v2410, 2147483648
        %v2531 = vxor.u32 %v2412, 2147483648
        %v2532 = vxor.u32 %v2415, 2147483648
        %v2533 = vxor.u32 %v2417, 2147483648
        %v2534 = vxor.u32 %v2420, 2147483648
        %v2535 = vxor.u32 %v2422, 2147483648
        %v2536 = vxor.u32 %v2425, 2147483648
        %v2537 = vxor.u32 %v2427, 2147483648
        %v2538 = vxor.u32 %v2430, 2147483648
        %v2539 = vxor.u32 %v2432, 2147483648
        %v2540 = vxor.u32 %v2435, 2147483648
        %v2541 = vxor.u32 %v2437, 2147483648
        %v2542 = vxor.u32 %v2440, 2147483648
        %v2543 = vxor.u32 %v2442, 2147483648
        %v2544 = vxor.u32 %v2445, 2147483648
        %v2545 = vxor.u32 %v2447, 2147483648
        %v2546 = vxor.u32 %v2450, 2147483648
        %v2547 = vxor.u32 %v2452, 2147483648
        %v2548 = vxor.u32 %v2455, 2147483648
        %v2549 = vxor.u32 %v2457, 2147483648
        %v2550 = vxor.u32 %v2460, 2147483648
        %v2551 = vxor.u32 %v2462, 2147483648
        %v2552 = vxor.u32 %v2465, 2147483648
        %v2553 = vxor.u32 %v2467, 2147483648
        %v2554 = vxor.u32 %v2470, 2147483648
        %v2555 = vxor.u32 %v2472, 2147483648
        %v2556 = vxor.u32 %v2475, 2147483648
        %v2557 = vxor.u32 %v2477, 2147483648
        %v2558 = vxor.u32 %v2480, 2147483648
        %v2559 = vxor.u32 %v2482, 2147483648
        %v2560 = vxor.u32 %v2485, 2147483648
        %v2561 = vxor.u32 %v2487, 2147483648
        %v2562 = vxor.u32 %v2490, 2147483648
        %v2563 = vxor.u32 %v2492, 2147483648
        %v2564 = vxor.u32 %v2495, 2147483648
        %v2565 = vxor.u32 %v2497, 2147483648
        %v2566 = vxor.u32 %v2500, 2147483648
        %v2567 = vxor.u32 %v2502, 2147483648
        %v2568 = vmul.f32 %v2504, 1.442695
        %v2569 = vpow.pop %v2568
        %v2570 = vmul.f32 %v2505, 1.442695
        %v2571 = vpow.pop %v2570
        %v2572 = vmul.f32 %v2506, 1.442695
        %v2573 = vpow.pop %v2572
        %v2574 = vmul.f32 %v2507, 1.442695
        %v2575 = vpow.pop %v2574
        %v2576 = vmul.f32 %v2508, 1.442695
        %v2577 = vpow.pop %v2576
        %v2578 = vmul.f32 %v2509, 1.442695
        %v2579 = vpow.pop %v2578
        %v2580 = vmul.f32 %v2510, 1.442695
        %v2581 = vpow.pop %v2580
        %v2582 = vmul.f32 %v2511, 1.442695
        %v2583 = vpow.pop %v2582
        %v2584 = vmul.f32 %v2512, 1.442695
        %v2585 = vpow.pop %v2584
        %v2586 = vmul.f32 %v2513, 1.442695
        %v2587 = vpow.pop %v2586
        %v2588 = vmul.f32 %v2514, 1.442695
        %v2589 = vpow.pop %v2588
        %v2590 = vmul.f32 %v2515, 1.442695
        %v2591 = vpow.pop %v2590
        %v2592 = vmul.f32 %v2516, 1.442695
        %v2593 = vpow.pop %v2592
        %v2594 = vmul.f32 %v2517, 1.442695
        %v2595 = vpow.pop %v2594
        %v2596 = vmul.f32 %v2518, 1.442695
        %v2597 = vpow.pop %v2596
        %v2598 = vmul.f32 %v2519, 1.442695
        %v2599 = vpow.pop %v2598
        %v2600 = vmul.f32 %v2520, 1.442695
        %v2601 = vpow.pop %v2600
        %v2602 = vmul.f32 %v2521, 1.442695
        %v2603 = vpow.pop %v2602
        %v2604 = vmul.f32 %v2522, 1.442695
        %v2605 = vpow.pop %v2604
        %v2606 = vmul.f32 %v2523, 1.442695
        %v2607 = vpow.pop %v2606
        %v2608 = vmul.f32 %v2524, 1.442695
        %v2609 = vpow.pop %v2608
        %v2610 = vmul.f32 %v2525, 1.442695
        %v2611 = vpow.pop %v2610
        %v2612 = vmul.f32 %v2526, 1.442695
        %v2613 = vpow.pop %v2612
        %v2614 = vmul.f32 %v2527, 1.442695
        %v2615 = vpow.pop %v2614
        %v2616 = vmul.f32 %v2528, 1.442695
        %v2617 = vpow.pop %v2616
        %v2618 = vmul.f32 %v2529, 1.442695
        %v2619 = vpow.pop %v2618
        %v2620 = vmul.f32 %v2530, 1.442695
        %v2621 = vpow.pop %v2620
        %v2622 = vmul.f32 %v2531, 1.442695
        %v2623 = vpow.pop %v2622
        %v2624 = vmul.f32 %v2532, 1.442695
        %v2625 = vpow.pop %v2624
        %v2626 = vmul.f32 %v2533, 1.442695
        %v2627 = vpow.pop %v2626
        %v2628 = vmul.f32 %v2534, 1.442695
        %v2629 = vpow.pop %v2628
        %v2630 = vmul.f32 %v2535, 1.442695
        %v2631 = vpow.pop %v2630
        %v2632 = vmul.f32 %v2536, 1.442695
        %v2633 = vpow.pop %v2632
        %v2634 = vmul.f32 %v2537, 1.442695
        %v2635 = vpow.pop %v2634
        %v2636 = vmul.f32 %v2538, 1.442695
        %v2637 = vpow.pop %v2636
        %v2638 = vmul.f32 %v2539, 1.442695
        %v2639 = vpow.pop %v2638
        %v2640 = vmul.f32 %v2540, 1.442695
        %v2641 = vpow.pop %v2640
        %v2642 = vmul.f32 %v2541, 1.442695
        %v2643 = vpow.pop %v2642
        %v2644 = vmul.f32 %v2542, 1.442695
        %v2645 = vpow.pop %v2644
        %v2646 = vmul.f32 %v2543, 1.442695
        %v2647 = vpow.pop %v2646
        %v2648 = vmul.f32 %v2544, 1.442695
        %v2649 = vpow.pop %v2648
        %v2650 = vmul.f32 %v2545, 1.442695
        %v2651 = vpow.pop %v2650
        %v2652 = vmul.f32 %v2546, 1.442695
        %v2653 = vpow.pop %v2652
        %v2654 = vmul.f32 %v2547, 1.442695
        %v2655 = vpow.pop %v2654
        %v2656 = vmul.f32 %v2548, 1.442695
        %v2657 = vpow.pop %v2656
        %v2658 = vmul.f32 %v2549, 1.442695
        %v2659 = vpow.pop %v2658
        %v2660 = vmul.f32 %v2550, 1.442695
        %v2661 = vpow.pop %v2660
        %v2662 = vmul.f32 %v2551, 1.442695
        %v2663 = vpow.pop %v2662
        %v2664 = vmul.f32 %v2552, 1.442695
        %v2665 = vpow.pop %v2664
        %v2666 = vmul.f32 %v2553, 1.442695
        %v2667 = vpow.pop %v2666
        %v2668 = vmul.f32 %v2554, 1.442695
        %v2669 = vpow.pop %v2668
        %v2670 = vmul.f32 %v2555, 1.442695
        %v2671 = vpow.pop %v2670
        %v2672 = vmul.f32 %v2556, 1.442695
        %v2673 = vpow.pop %v2672
        %v2674 = vmul.f32 %v2557, 1.442695
        %v2675 = vpow.pop %v2674
        %v2676 = vmul.f32 %v2558, 1.442695
        %v2677 = vpow.pop %v2676
        %v2678 = vmul.f32 %v2559, 1.442695
        %v2679 = vpow.pop %v2678
        %v2680 = vmul.f32 %v2560, 1.442695
        %v2681 = vpow.pop %v2680
        %v2682 = vmul.f32 %v2561, 1.442695
        %v2683 = vpow.pop %v2682
        %v2684 = vmul.f32 %v2562, 1.442695
        %v2685 = vpow.pop %v2684
        %v2686 = vmul.f32 %v2563, 1.442695
        %v2687 = vpow.pop %v2686
        %v2688 = vmul.f32 %v2564, 1.442695
        %v2689 = vpow.pop %v2688
        %v2690 = vmul.f32 %v2565, 1.442695
        %v2691 = vpow.pop %v2690
        %v2692 = vmul.f32 %v2566, 1.442695
        %v2693 = vpow.pop %v2692
        %v2694 = vmul.f32 %v2567, 1.442695
        %v2695 = vpow.pop %v2694
        %v2696 = vadd.f32 %v2569, 1.0
        %v2697 = vadd.f32 %v2571, 1.0
        %v2698 = vadd.f32 %v2573, 1.0
        %v2699 = vadd.f32 %v2575, 1.0
        %v2700 = vadd.f32 %v2577, 1.0
        %v2701 = vadd.f32 %v2579, 1.0
        %v2702 = vadd.f32 %v2581, 1.0
        %v2703 = vadd.f32 %v2583, 1.0
        %v2704 = vadd.f32 %v2585, 1.0
        %v2705 = vadd.f32 %v2587, 1.0
        %v2706 = vadd.f32 %v2589, 1.0
        %v2707 = vadd.f32 %v2591, 1.0
        %v2708 = vadd.f32 %v2593, 1.0
        %v2709 = vadd.f32 %v2595, 1.0
        %v2710 = vadd.f32 %v2597, 1.0
        %v2711 = vadd.f32 %v2599, 1.0
        %v2712 = vadd.f32 %v2601, 1.0
        %v2713 = vadd.f32 %v2603, 1.0
        %v2714 = vadd.f32 %v2605, 1.0
        %v2715 = vadd.f32 %v2607, 1.0
        %v2716 = vadd.f32 %v2609, 1.0
        %v2717 = vadd.f32 %v2611, 1.0
        %v2718 = vadd.f32 %v2613, 1.0
        %v2719 = vadd.f32 %v2615, 1.0
        %v2720 = vadd.f32 %v2617, 1.0
        %v2721 = vadd.f32 %v2619, 1.0
        %v2722 = vadd.f32 %v2621, 1.0
        %v2723 = vadd.f32 %v2623, 1.0
        %v2724 = vadd.f32 %v2625, 1.0
        %v2725 = vadd.f32 %v2627, 1.0
        %v2726 = vadd.f32 %v2629, 1.0
        %v2727 = vadd.f32 %v2631, 1.0
        %v2728 = vadd.f32 %v2633, 1.0
        %v2729 = vadd.f32 %v2635, 1.0
        %v2730 = vadd.f32 %v2637, 1.0
        %v2731 = vadd.f32 %v2639, 1.0
        %v2732 = vadd.f32 %v2641, 1.0
        %v2733 = vadd.f32 %v2643, 1.0
        %v2734 = vadd.f32 %v2645, 1.0
        %v2735 = vadd.f32 %v2647, 1.0
        %v2736 = vadd.f32 %v2649, 1.0
        %v2737 = vadd.f32 %v2651, 1.0
        %v2738 = vadd.f32 %v2653, 1.0
        %v2739 = vadd.f32 %v2655, 1.0
        %v2740 = vadd.f32 %v2657, 1.0
        %v2741 = vadd.f32 %v2659, 1.0
        %v2742 = vadd.f32 %v2661, 1.0
        %v2743 = vadd.f32 %v2663, 1.0
        %v2744 = vadd.f32 %v2665, 1.0
        %v2745 = vadd.f32 %v2667, 1.0
        %v2746 = vadd.f32 %v2669, 1.0
        %v2747 = vadd.f32 %v2671, 1.0
        %v2748 = vadd.f32 %v2673, 1.0
        %v2749 = vadd.f32 %v2675, 1.0
        %v2750 = vadd.f32 %v2677, 1.0
        %v2751 = vadd.f32 %v2679, 1.0
        %v2752 = vadd.f32 %v2681, 1.0
        %v2753 = vadd.f32 %v2683, 1.0
        %v2754 = vadd.f32 %v2685, 1.0
        %v2755 = vadd.f32 %v2687, 1.0
        %v2756 = vadd.f32 %v2689, 1.0
        %v2757 = vadd.f32 %v2691, 1.0
        %v2758 = vadd.f32 %v2693, 1.0
        %v2759 = vadd.f32 %v2695, 1.0
        %v2760 = vrcp.pop %v2696
        %v2761 = vmul.f32 %v2696, %v2760
        %v2762 = vsub.f32 1.0, %v2761
        %v2763 = vmul.f32 %v2760, %v2762
        %v2764 = vadd.f32 %v2760, %v2763
        %vm2765 = vweird.f32 %v2696
        %vm2766 = vweird.f32 %v2760
        %vm2767 = vmor %vm2765, %vm2766
        %v2768 = vsel %vm2767, %v2760, %v2764
        %v2769 = vand.u32 2147483647, %v2696
        %vm2770 = vcmp.eq.f32.partialorder %v2769, 8.507059e+37
        %v2771 = vand.u32 %v2696, 2147483648
        %v2772 = vor.u32 1.1754944e-38, %v2771
        %v2773 = vsel %vm2770, %v2772, %v2768
        %v2774 = vmul.f32 1.0, %v2773
        %v2775 = vrcp.pop %v2697
        %v2776 = vmul.f32 %v2697, %v2775
        %v2777 = vsub.f32 1.0, %v2776
        %v2778 = vmul.f32 %v2775, %v2777
        %v2779 = vadd.f32 %v2775, %v2778
        %vm2780 = vweird.f32 %v2697
        %vm2781 = vweird.f32 %v2775
        %vm2782 = vmor %vm2780, %vm2781
        %v2783 = vsel %vm2782, %v2775, %v2779
        %v2784 = vand.u32 2147483647, %v2697
        %vm2785 = vcmp.eq.f32.partialorder %v2784, 8.507059e+37
        %v2786 = vand.u32 %v2697, 2147483648
        %v2787 = vor.u32 1.1754944e-38, %v2786
        %v2788 = vsel %vm2785, %v2787, %v2783
        %v2789 = vmul.f32 1.0, %v2788
        %v2790 = vrcp.pop %v2698
        %v2791 = vmul.f32 %v2698, %v2790
        %v2792 = vsub.f32 1.0, %v2791
        %v2793 = vmul.f32 %v2790, %v2792
        %v2794 = vadd.f32 %v2790, %v2793
        %vm2795 = vweird.f32 %v2698
        %vm2796 = vweird.f32 %v2790
        %vm2797 = vmor %vm2795, %vm2796
        %v2798 = vsel %vm2797, %v2790, %v2794
        %v2799 = vand.u32 2147483647, %v2698
        %vm2800 = vcmp.eq.f32.partialorder %v2799, 8.507059e+37
        %v2801 = vand.u32 %v2698, 2147483648
        %v2802 = vor.u32 1.1754944e-38, %v2801
        %v2803 = vsel %vm2800, %v2802, %v2798
        %v2804 = vmul.f32 1.0, %v2803
        %v2805 = vrcp.pop %v2699
        %v2806 = vmul.f32 %v2699, %v2805
        %v2807 = vsub.f32 1.0, %v2806
        %v2808 = vmul.f32 %v2805, %v2807
        %v2809 = vadd.f32 %v2805, %v2808
        %vm2810 = vweird.f32 %v2699
        %vm2811 = vweird.f32 %v2805
        %vm2812 = vmor %vm2810, %vm2811
        %v2813 = vsel %vm2812, %v2805, %v2809
        %v2814 = vand.u32 2147483647, %v2699
        %vm2815 = vcmp.eq.f32.partialorder %v2814, 8.507059e+37
        %v2816 = vand.u32 %v2699, 2147483648
        %v2817 = vor.u32 1.1754944e-38, %v2816
        %v2818 = vsel %vm2815, %v2817, %v2813
        %v2819 = vmul.f32 1.0, %v2818
        %v2820 = vrcp.pop %v2700
        %v2821 = vmul.f32 %v2700, %v2820
        %v2822 = vsub.f32 1.0, %v2821
        %v2823 = vmul.f32 %v2820, %v2822
        %v2824 = vadd.f32 %v2820, %v2823
        %vm2825 = vweird.f32 %v2700
        %vm2826 = vweird.f32 %v2820
        %vm2827 = vmor %vm2825, %vm2826
        %v2828 = vsel %vm2827, %v2820, %v2824
        %v2829 = vand.u32 2147483647, %v2700
        %vm2830 = vcmp.eq.f32.partialorder %v2829, 8.507059e+37
        %v2831 = vand.u32 %v2700, 2147483648
        %v2832 = vor.u32 1.1754944e-38, %v2831
        %v2833 = vsel %vm2830, %v2832, %v2828
        %v2834 = vmul.f32 1.0, %v2833
        %v2835 = vrcp.pop %v2701
        %v2836 = vmul.f32 %v2701, %v2835
        %v2837 = vsub.f32 1.0, %v2836
        %v2838 = vmul.f32 %v2835, %v2837
        %v2839 = vadd.f32 %v2835, %v2838
        %vm2840 = vweird.f32 %v2701
        %vm2841 = vweird.f32 %v2835
        %vm2842 = vmor %vm2840, %vm2841
        %v2843 = vsel %vm2842, %v2835, %v2839
        %v2844 = vand.u32 2147483647, %v2701
        %vm2845 = vcmp.eq.f32.partialorder %v2844, 8.507059e+37
        %v2846 = vand.u32 %v2701, 2147483648
        %v2847 = vor.u32 1.1754944e-38, %v2846
        %v2848 = vsel %vm2845, %v2847, %v2843
        %v2849 = vmul.f32 1.0, %v2848
        %v2850 = vrcp.pop %v2702
        %v2851 = vmul.f32 %v2702, %v2850
        %v2852 = vsub.f32 1.0, %v2851
        %v2853 = vmul.f32 %v2850, %v2852
        %v2854 = vadd.f32 %v2850, %v2853
        %vm2855 = vweird.f32 %v2702
        %vm2856 = vweird.f32 %v2850
        %vm2857 = vmor %vm2855, %vm2856
        %v2858 = vsel %vm2857, %v2850, %v2854
        %v2859 = vand.u32 2147483647, %v2702
        %vm2860 = vcmp.eq.f32.partialorder %v2859, 8.507059e+37
        %v2861 = vand.u32 %v2702, 2147483648
        %v2862 = vor.u32 1.1754944e-38, %v2861
        %v2863 = vsel %vm2860, %v2862, %v2858
        %v2864 = vmul.f32 1.0, %v2863
        %v2865 = vrcp.pop %v2703
        %v2866 = vmul.f32 %v2703, %v2865
        %v2867 = vsub.f32 1.0, %v2866
        %v2868 = vmul.f32 %v2865, %v2867
        %v2869 = vadd.f32 %v2865, %v2868
        %vm2870 = vweird.f32 %v2703
        %vm2871 = vweird.f32 %v2865
        %vm2872 = vmor %vm2870, %vm2871
        %v2873 = vsel %vm2872, %v2865, %v2869
        %v2874 = vand.u32 2147483647, %v2703
        %vm2875 = vcmp.eq.f32.partialorder %v2874, 8.507059e+37
        %v2876 = vand.u32 %v2703, 2147483648
        %v2877 = vor.u32 1.1754944e-38, %v2876
        %v2878 = vsel %vm2875, %v2877, %v2873
        %v2879 = vmul.f32 1.0, %v2878
        %v2880 = vrcp.pop %v2704
        %v2881 = vmul.f32 %v2704, %v2880
        %v2882 = vsub.f32 1.0, %v2881
        %v2883 = vmul.f32 %v2880, %v2882
        %v2884 = vadd.f32 %v2880, %v2883
        %vm2885 = vweird.f32 %v2704
        %vm2886 = vweird.f32 %v2880
        %vm2887 = vmor %vm2885, %vm2886
        %v2888 = vsel %vm2887, %v2880, %v2884
        %v2889 = vand.u32 2147483647, %v2704
        %vm2890 = vcmp.eq.f32.partialorder %v2889, 8.507059e+37
        %v2891 = vand.u32 %v2704, 2147483648
        %v2892 = vor.u32 1.1754944e-38, %v2891
        %v2893 = vsel %vm2890, %v2892, %v2888
        %v2894 = vmul.f32 1.0, %v2893
        %v2895 = vrcp.pop %v2705
        %v2896 = vmul.f32 %v2705, %v2895
        %v2897 = vsub.f32 1.0, %v2896
        %v2898 = vmul.f32 %v2895, %v2897
        %v2899 = vadd.f32 %v2895, %v2898
        %vm2900 = vweird.f32 %v2705
        %vm2901 = vweird.f32 %v2895
        %vm2902 = vmor %vm2900, %vm2901
        %v2903 = vsel %vm2902, %v2895, %v2899
        %v2904 = vand.u32 2147483647, %v2705
        %vm2905 = vcmp.eq.f32.partialorder %v2904, 8.507059e+37
        %v2906 = vand.u32 %v2705, 2147483648
        %v2907 = vor.u32 1.1754944e-38, %v2906
        %v2908 = vsel %vm2905, %v2907, %v2903
        %v2909 = vmul.f32 1.0, %v2908
        %v2910 = vrcp.pop %v2706
        %v2911 = vmul.f32 %v2706, %v2910
        %v2912 = vsub.f32 1.0, %v2911
        %v2913 = vmul.f32 %v2910, %v2912
        %v2914 = vadd.f32 %v2910, %v2913
        %vm2915 = vweird.f32 %v2706
        %vm2916 = vweird.f32 %v2910
        %vm2917 = vmor %vm2915, %vm2916
        %v2918 = vsel %vm2917, %v2910, %v2914
        %v2919 = vand.u32 2147483647, %v2706
        %vm2920 = vcmp.eq.f32.partialorder %v2919, 8.507059e+37
        %v2921 = vand.u32 %v2706, 2147483648
        %v2922 = vor.u32 1.1754944e-38, %v2921
        %v2923 = vsel %vm2920, %v2922, %v2918
        %v2924 = vmul.f32 1.0, %v2923
        %v2925 = vrcp.pop %v2707
        %v2926 = vmul.f32 %v2707, %v2925
        %v2927 = vsub.f32 1.0, %v2926
        %v2928 = vmul.f32 %v2925, %v2927
        %v2929 = vadd.f32 %v2925, %v2928
        %vm2930 = vweird.f32 %v2707
        %vm2931 = vweird.f32 %v2925
        %vm2932 = vmor %vm2930, %vm2931
        %v2933 = vsel %vm2932, %v2925, %v2929
        %v2934 = vand.u32 2147483647, %v2707
        %vm2935 = vcmp.eq.f32.partialorder %v2934, 8.507059e+37
        %v2936 = vand.u32 %v2707, 2147483648
        %v2937 = vor.u32 1.1754944e-38, %v2936
        %v2938 = vsel %vm2935, %v2937, %v2933
        %v2939 = vmul.f32 1.0, %v2938
        %v2940 = vrcp.pop %v2708
        %v2941 = vmul.f32 %v2708, %v2940
        %v2942 = vsub.f32 1.0, %v2941
        %v2943 = vmul.f32 %v2940, %v2942
        %v2944 = vadd.f32 %v2940, %v2943
        %vm2945 = vweird.f32 %v2708
        %vm2946 = vweird.f32 %v2940
        %vm2947 = vmor %vm2945, %vm2946
        %v2948 = vsel %vm2947, %v2940, %v2944
        %v2949 = vand.u32 2147483647, %v2708
        %vm2950 = vcmp.eq.f32.partialorder %v2949, 8.507059e+37
        %v2951 = vand.u32 %v2708, 2147483648
        %v2952 = vor.u32 1.1754944e-38, %v2951
        %v2953 = vsel %vm2950, %v2952, %v2948
        %v2954 = vmul.f32 1.0, %v2953
        %v2955 = vrcp.pop %v2709
        %v2956 = vmul.f32 %v2709, %v2955
        %v2957 = vsub.f32 1.0, %v2956
        %v2958 = vmul.f32 %v2955, %v2957
        %v2959 = vadd.f32 %v2955, %v2958
        %vm2960 = vweird.f32 %v2709
        %vm2961 = vweird.f32 %v2955
        %vm2962 = vmor %vm2960, %vm2961
        %v2963 = vsel %vm2962, %v2955, %v2959
        %v2964 = vand.u32 2147483647, %v2709
        %vm2965 = vcmp.eq.f32.partialorder %v2964, 8.507059e+37
        %v2966 = vand.u32 %v2709, 2147483648
        %v2967 = vor.u32 1.1754944e-38, %v2966
        %v2968 = vsel %vm2965, %v2967, %v2963
        %v2969 = vmul.f32 1.0, %v2968
        %v2970 = vrcp.pop %v2710
        %v2971 = vmul.f32 %v2710, %v2970
        %v2972 = vsub.f32 1.0, %v2971
        %v2973 = vmul.f32 %v2970, %v2972
        %v2974 = vadd.f32 %v2970, %v2973
        %vm2975 = vweird.f32 %v2710
        %vm2976 = vweird.f32 %v2970
        %vm2977 = vmor %vm2975, %vm2976
        %v2978 = vsel %vm2977, %v2970, %v2974
        %v2979 = vand.u32 2147483647, %v2710
        %vm2980 = vcmp.eq.f32.partialorder %v2979, 8.507059e+37
        %v2981 = vand.u32 %v2710, 2147483648
        %v2982 = vor.u32 1.1754944e-38, %v2981
        %v2983 = vsel %vm2980, %v2982, %v2978
        %v2984 = vmul.f32 1.0, %v2983
        %v2985 = vrcp.pop %v2711
        %v2986 = vmul.f32 %v2711, %v2985
        %v2987 = vsub.f32 1.0, %v2986
        %v2988 = vmul.f32 %v2985, %v2987
        %v2989 = vadd.f32 %v2985, %v2988
        %vm2990 = vweird.f32 %v2711
        %vm2991 = vweird.f32 %v2985
        %vm2992 = vmor %vm2990, %vm2991
        %v2993 = vsel %vm2992, %v2985, %v2989
        %v2994 = vand.u32 2147483647, %v2711
        %vm2995 = vcmp.eq.f32.partialorder %v2994, 8.507059e+37
        %v2996 = vand.u32 %v2711, 2147483648
        %v2997 = vor.u32 1.1754944e-38, %v2996
        %v2998 = vsel %vm2995, %v2997, %v2993
        %v2999 = vmul.f32 1.0, %v2998
        %v3000 = vrcp.pop %v2712
        %v3001 = vmul.f32 %v2712, %v3000
        %v3002 = vsub.f32 1.0, %v3001
        %v3003 = vmul.f32 %v3000, %v3002
        %v3004 = vadd.f32 %v3000, %v3003
        %vm3005 = vweird.f32 %v2712
        %vm3006 = vweird.f32 %v3000
        %vm3007 = vmor %vm3005, %vm3006
        %v3008 = vsel %vm3007, %v3000, %v3004
        %v3009 = vand.u32 2147483647, %v2712
        %vm3010 = vcmp.eq.f32.partialorder %v3009, 8.507059e+37
        %v3011 = vand.u32 %v2712, 2147483648
        %v3012 = vor.u32 1.1754944e-38, %v3011
        %v3013 = vsel %vm3010, %v3012, %v3008
        %v3014 = vmul.f32 1.0, %v3013
        %v3015 = vrcp.pop %v2713
        %v3016 = vmul.f32 %v2713, %v3015
        %v3017 = vsub.f32 1.0, %v3016
        %v3018 = vmul.f32 %v3015, %v3017
        %v3019 = vadd.f32 %v3015, %v3018
        %vm3020 = vweird.f32 %v2713
        %vm3021 = vweird.f32 %v3015
        %vm3022 = vmor %vm3020, %vm3021
        %v3023 = vsel %vm3022, %v3015, %v3019
        %v3024 = vand.u32 2147483647, %v2713
        %vm3025 = vcmp.eq.f32.partialorder %v3024, 8.507059e+37
        %v3026 = vand.u32 %v2713, 2147483648
        %v3027 = vor.u32 1.1754944e-38, %v3026
        %v3028 = vsel %vm3025, %v3027, %v3023
        %v3029 = vmul.f32 1.0, %v3028
        %v3030 = vrcp.pop %v2714
        %v3031 = vmul.f32 %v2714, %v3030
        %v3032 = vsub.f32 1.0, %v3031
        %v3033 = vmul.f32 %v3030, %v3032
        %v3034 = vadd.f32 %v3030, %v3033
        %vm3035 = vweird.f32 %v2714
        %vm3036 = vweird.f32 %v3030
        %vm3037 = vmor %vm3035, %vm3036
        %v3038 = vsel %vm3037, %v3030, %v3034
        %v3039 = vand.u32 2147483647, %v2714
        %vm3040 = vcmp.eq.f32.partialorder %v3039, 8.507059e+37
        %v3041 = vand.u32 %v2714, 2147483648
        %v3042 = vor.u32 1.1754944e-38, %v3041
        %v3043 = vsel %vm3040, %v3042, %v3038
        %v3044 = vmul.f32 1.0, %v3043
        %v3045 = vrcp.pop %v2715
        %v3046 = vmul.f32 %v2715, %v3045
        %v3047 = vsub.f32 1.0, %v3046
        %v3048 = vmul.f32 %v3045, %v3047
        %v3049 = vadd.f32 %v3045, %v3048
        %vm3050 = vweird.f32 %v2715
        %vm3051 = vweird.f32 %v3045
        %vm3052 = vmor %vm3050, %vm3051
        %v3053 = vsel %vm3052, %v3045, %v3049
        %v3054 = vand.u32 2147483647, %v2715
        %vm3055 = vcmp.eq.f32.partialorder %v3054, 8.507059e+37
        %v3056 = vand.u32 %v2715, 2147483648
        %v3057 = vor.u32 1.1754944e-38, %v3056
        %v3058 = vsel %vm3055, %v3057, %v3053
        %v3059 = vmul.f32 1.0, %v3058
        %v3060 = vrcp.pop %v2716
        %v3061 = vmul.f32 %v2716, %v3060
        %v3062 = vsub.f32 1.0, %v3061
        %v3063 = vmul.f32 %v3060, %v3062
        %v3064 = vadd.f32 %v3060, %v3063
        %vm3065 = vweird.f32 %v2716
        %vm3066 = vweird.f32 %v3060
        %vm3067 = vmor %vm3065, %vm3066
        %v3068 = vsel %vm3067, %v3060, %v3064
        %v3069 = vand.u32 2147483647, %v2716
        %vm3070 = vcmp.eq.f32.partialorder %v3069, 8.507059e+37
        %v3071 = vand.u32 %v2716, 2147483648
        %v3072 = vor.u32 1.1754944e-38, %v3071
        %v3073 = vsel %vm3070, %v3072, %v3068
        %v3074 = vmul.f32 1.0, %v3073
        %v3075 = vrcp.pop %v2717
        %v3076 = vmul.f32 %v2717, %v3075
        %v3077 = vsub.f32 1.0, %v3076
        %v3078 = vmul.f32 %v3075, %v3077
        %v3079 = vadd.f32 %v3075, %v3078
        %vm3080 = vweird.f32 %v2717
        %vm3081 = vweird.f32 %v3075
        %vm3082 = vmor %vm3080, %vm3081
        %v3083 = vsel %vm3082, %v3075, %v3079
        %v3084 = vand.u32 2147483647, %v2717
        %vm3085 = vcmp.eq.f32.partialorder %v3084, 8.507059e+37
        %v3086 = vand.u32 %v2717, 2147483648
        %v3087 = vor.u32 1.1754944e-38, %v3086
        %v3088 = vsel %vm3085, %v3087, %v3083
        %v3089 = vmul.f32 1.0, %v3088
        %v3090 = vrcp.pop %v2718
        %v3091 = vmul.f32 %v2718, %v3090
        %v3092 = vsub.f32 1.0, %v3091
        %v3093 = vmul.f32 %v3090, %v3092
        %v3094 = vadd.f32 %v3090, %v3093
        %vm3095 = vweird.f32 %v2718
        %vm3096 = vweird.f32 %v3090
        %vm3097 = vmor %vm3095, %vm3096
        %v3098 = vsel %vm3097, %v3090, %v3094
        %v3099 = vand.u32 2147483647, %v2718
        %vm3100 = vcmp.eq.f32.partialorder %v3099, 8.507059e+37
        %v3101 = vand.u32 %v2718, 2147483648
        %v3102 = vor.u32 1.1754944e-38, %v3101
        %v3103 = vsel %vm3100, %v3102, %v3098
        %v3104 = vmul.f32 1.0, %v3103
        %v3105 = vrcp.pop %v2719
        %v3106 = vmul.f32 %v2719, %v3105
        %v3107 = vsub.f32 1.0, %v3106
        %v3108 = vmul.f32 %v3105, %v3107
        %v3109 = vadd.f32 %v3105, %v3108
        %vm3110 = vweird.f32 %v2719
        %vm3111 = vweird.f32 %v3105
        %vm3112 = vmor %vm3110, %vm3111
        %v3113 = vsel %vm3112, %v3105, %v3109
        %v3114 = vand.u32 2147483647, %v2719
        %vm3115 = vcmp.eq.f32.partialorder %v3114, 8.507059e+37
        %v3116 = vand.u32 %v2719, 2147483648
        %v3117 = vor.u32 1.1754944e-38, %v3116
        %v3118 = vsel %vm3115, %v3117, %v3113
        %v3119 = vmul.f32 1.0, %v3118
        %v3120 = vrcp.pop %v2720
        %v3121 = vmul.f32 %v2720, %v3120
        %v3122 = vsub.f32 1.0, %v3121
        %v3123 = vmul.f32 %v3120, %v3122
        %v3124 = vadd.f32 %v3120, %v3123
        %vm3125 = vweird.f32 %v2720
        %vm3126 = vweird.f32 %v3120
        %vm3127 = vmor %vm3125, %vm3126
        %v3128 = vsel %vm3127, %v3120, %v3124
        %v3129 = vand.u32 2147483647, %v2720
        %vm3130 = vcmp.eq.f32.partialorder %v3129, 8.507059e+37
        %v3131 = vand.u32 %v2720, 2147483648
        %v3132 = vor.u32 1.1754944e-38, %v3131
        %v3133 = vsel %vm3130, %v3132, %v3128
        %v3134 = vmul.f32 1.0, %v3133
        %v3135 = vrcp.pop %v2721
        %v3136 = vmul.f32 %v2721, %v3135
        %v3137 = vsub.f32 1.0, %v3136
        %v3138 = vmul.f32 %v3135, %v3137
        %v3139 = vadd.f32 %v3135, %v3138
        %vm3140 = vweird.f32 %v2721
        %vm3141 = vweird.f32 %v3135
        %vm3142 = vmor %vm3140, %vm3141
        %v3143 = vsel %vm3142, %v3135, %v3139
        %v3144 = vand.u32 2147483647, %v2721
        %vm3145 = vcmp.eq.f32.partialorder %v3144, 8.507059e+37
        %v3146 = vand.u32 %v2721, 2147483648
        %v3147 = vor.u32 1.1754944e-38, %v3146
        %v3148 = vsel %vm3145, %v3147, %v3143
        %v3149 = vmul.f32 1.0, %v3148
        %v3150 = vrcp.pop %v2722
        %v3151 = vmul.f32 %v2722, %v3150
        %v3152 = vsub.f32 1.0, %v3151
        %v3153 = vmul.f32 %v3150, %v3152
        %v3154 = vadd.f32 %v3150, %v3153
        %vm3155 = vweird.f32 %v2722
        %vm3156 = vweird.f32 %v3150
        %vm3157 = vmor %vm3155, %vm3156
        %v3158 = vsel %vm3157, %v3150, %v3154
        %v3159 = vand.u32 2147483647, %v2722
        %vm3160 = vcmp.eq.f32.partialorder %v3159, 8.507059e+37
        %v3161 = vand.u32 %v2722, 2147483648
        %v3162 = vor.u32 1.1754944e-38, %v3161
        %v3163 = vsel %vm3160, %v3162, %v3158
        %v3164 = vmul.f32 1.0, %v3163
        %v3165 = vrcp.pop %v2723
        %v3166 = vmul.f32 %v2723, %v3165
        %v3167 = vsub.f32 1.0, %v3166
        %v3168 = vmul.f32 %v3165, %v3167
        %v3169 = vadd.f32 %v3165, %v3168
        %vm3170 = vweird.f32 %v2723
        %vm3171 = vweird.f32 %v3165
        %vm3172 = vmor %vm3170, %vm3171
        %v3173 = vsel %vm3172, %v3165, %v3169
        %v3174 = vand.u32 2147483647, %v2723
        %vm3175 = vcmp.eq.f32.partialorder %v3174, 8.507059e+37
        %v3176 = vand.u32 %v2723, 2147483648
        %v3177 = vor.u32 1.1754944e-38, %v3176
        %v3178 = vsel %vm3175, %v3177, %v3173
        %v3179 = vmul.f32 1.0, %v3178
        %v3180 = vrcp.pop %v2724
        %v3181 = vmul.f32 %v2724, %v3180
        %v3182 = vsub.f32 1.0, %v3181
        %v3183 = vmul.f32 %v3180, %v3182
        %v3184 = vadd.f32 %v3180, %v3183
        %vm3185 = vweird.f32 %v2724
        %vm3186 = vweird.f32 %v3180
        %vm3187 = vmor %vm3185, %vm3186
        %v3188 = vsel %vm3187, %v3180, %v3184
        %v3189 = vand.u32 2147483647, %v2724
        %vm3190 = vcmp.eq.f32.partialorder %v3189, 8.507059e+37
        %v3191 = vand.u32 %v2724, 2147483648
        %v3192 = vor.u32 1.1754944e-38, %v3191
        %v3193 = vsel %vm3190, %v3192, %v3188
        %v3194 = vmul.f32 1.0, %v3193
        %v3195 = vrcp.pop %v2725
        %v3196 = vmul.f32 %v2725, %v3195
        %v3197 = vsub.f32 1.0, %v3196
        %v3198 = vmul.f32 %v3195, %v3197
        %v3199 = vadd.f32 %v3195, %v3198
        %vm3200 = vweird.f32 %v2725
        %vm3201 = vweird.f32 %v3195
        %vm3202 = vmor %vm3200, %vm3201
        %v3203 = vsel %vm3202, %v3195, %v3199
        %v3204 = vand.u32 2147483647, %v2725
        %vm3205 = vcmp.eq.f32.partialorder %v3204, 8.507059e+37
        %v3206 = vand.u32 %v2725, 2147483648
        %v3207 = vor.u32 1.1754944e-38, %v3206
        %v3208 = vsel %vm3205, %v3207, %v3203
        %v3209 = vmul.f32 1.0, %v3208
        %v3210 = vrcp.pop %v2726
        %v3211 = vmul.f32 %v2726, %v3210
        %v3212 = vsub.f32 1.0, %v3211
        %v3213 = vmul.f32 %v3210, %v3212
        %v3214 = vadd.f32 %v3210, %v3213
        %vm3215 = vweird.f32 %v2726
        %vm3216 = vweird.f32 %v3210
        %vm3217 = vmor %vm3215, %vm3216
        %v3218 = vsel %vm3217, %v3210, %v3214
        %v3219 = vand.u32 2147483647, %v2726
        %vm3220 = vcmp.eq.f32.partialorder %v3219, 8.507059e+37
        %v3221 = vand.u32 %v2726, 2147483648
        %v3222 = vor.u32 1.1754944e-38, %v3221
        %v3223 = vsel %vm3220, %v3222, %v3218
        %v3224 = vmul.f32 1.0, %v3223
        %v3225 = vrcp.pop %v2727
        %v3226 = vmul.f32 %v2727, %v3225
        %v3227 = vsub.f32 1.0, %v3226
        %v3228 = vmul.f32 %v3225, %v3227
        %v3229 = vadd.f32 %v3225, %v3228
        %vm3230 = vweird.f32 %v2727
        %vm3231 = vweird.f32 %v3225
        %vm3232 = vmor %vm3230, %vm3231
        %v3233 = vsel %vm3232, %v3225, %v3229
        %v3234 = vand.u32 2147483647, %v2727
        %vm3235 = vcmp.eq.f32.partialorder %v3234, 8.507059e+37
        %v3236 = vand.u32 %v2727, 2147483648
        %v3237 = vor.u32 1.1754944e-38, %v3236
        %v3238 = vsel %vm3235, %v3237, %v3233
        %v3239 = vmul.f32 1.0, %v3238
        %v3240 = vrcp.pop %v2728
        %v3241 = vmul.f32 %v2728, %v3240
        %v3242 = vsub.f32 1.0, %v3241
        %v3243 = vmul.f32 %v3240, %v3242
        %v3244 = vadd.f32 %v3240, %v3243
        %vm3245 = vweird.f32 %v2728
        %vm3246 = vweird.f32 %v3240
        %vm3247 = vmor %vm3245, %vm3246
        %v3248 = vsel %vm3247, %v3240, %v3244
        %v3249 = vand.u32 2147483647, %v2728
        %vm3250 = vcmp.eq.f32.partialorder %v3249, 8.507059e+37
        %v3251 = vand.u32 %v2728, 2147483648
        %v3252 = vor.u32 1.1754944e-38, %v3251
        %v3253 = vsel %vm3250, %v3252, %v3248
        %v3254 = vmul.f32 1.0, %v3253
        %v3255 = vrcp.pop %v2729
        %v3256 = vmul.f32 %v2729, %v3255
        %v3257 = vsub.f32 1.0, %v3256
        %v3258 = vmul.f32 %v3255, %v3257
        %v3259 = vadd.f32 %v3255, %v3258
        %vm3260 = vweird.f32 %v2729
        %vm3261 = vweird.f32 %v3255
        %vm3262 = vmor %vm3260, %vm3261
        %v3263 = vsel %vm3262, %v3255, %v3259
        %v3264 = vand.u32 2147483647, %v2729
        %vm3265 = vcmp.eq.f32.partialorder %v3264, 8.507059e+37
        %v3266 = vand.u32 %v2729, 2147483648
        %v3267 = vor.u32 1.1754944e-38, %v3266
        %v3268 = vsel %vm3265, %v3267, %v3263
        %v3269 = vmul.f32 1.0, %v3268
        %v3270 = vrcp.pop %v2730
        %v3271 = vmul.f32 %v2730, %v3270
        %v3272 = vsub.f32 1.0, %v3271
        %v3273 = vmul.f32 %v3270, %v3272
        %v3274 = vadd.f32 %v3270, %v3273
        %vm3275 = vweird.f32 %v2730
        %vm3276 = vweird.f32 %v3270
        %vm3277 = vmor %vm3275, %vm3276
        %v3278 = vsel %vm3277, %v3270, %v3274
        %v3279 = vand.u32 2147483647, %v2730
        %vm3280 = vcmp.eq.f32.partialorder %v3279, 8.507059e+37
        %v3281 = vand.u32 %v2730, 2147483648
        %v3282 = vor.u32 1.1754944e-38, %v3281
        %v3283 = vsel %vm3280, %v3282, %v3278
        %v3284 = vmul.f32 1.0, %v3283
        %v3285 = vrcp.pop %v2731
        %v3286 = vmul.f32 %v2731, %v3285
        %v3287 = vsub.f32 1.0, %v3286
        %v3288 = vmul.f32 %v3285, %v3287
        %v3289 = vadd.f32 %v3285, %v3288
        %vm3290 = vweird.f32 %v2731
        %vm3291 = vweird.f32 %v3285
        %vm3292 = vmor %vm3290, %vm3291
        %v3293 = vsel %vm3292, %v3285, %v3289
        %v3294 = vand.u32 2147483647, %v2731
        %vm3295 = vcmp.eq.f32.partialorder %v3294, 8.507059e+37
        %v3296 = vand.u32 %v2731, 2147483648
        %v3297 = vor.u32 1.1754944e-38, %v3296
        %v3298 = vsel %vm3295, %v3297, %v3293
        %v3299 = vmul.f32 1.0, %v3298
        %v3300 = vrcp.pop %v2732
        %v3301 = vmul.f32 %v2732, %v3300
        %v3302 = vsub.f32 1.0, %v3301
        %v3303 = vmul.f32 %v3300, %v3302
        %v3304 = vadd.f32 %v3300, %v3303
        %vm3305 = vweird.f32 %v2732
        %vm3306 = vweird.f32 %v3300
        %vm3307 = vmor %vm3305, %vm3306
        %v3308 = vsel %vm3307, %v3300, %v3304
        %v3309 = vand.u32 2147483647, %v2732
        %vm3310 = vcmp.eq.f32.partialorder %v3309, 8.507059e+37
        %v3311 = vand.u32 %v2732, 2147483648
        %v3312 = vor.u32 1.1754944e-38, %v3311
        %v3313 = vsel %vm3310, %v3312, %v3308
        %v3314 = vmul.f32 1.0, %v3313
        %v3315 = vrcp.pop %v2733
        %v3316 = vmul.f32 %v2733, %v3315
        %v3317 = vsub.f32 1.0, %v3316
        %v3318 = vmul.f32 %v3315, %v3317
        %v3319 = vadd.f32 %v3315, %v3318
        %vm3320 = vweird.f32 %v2733
        %vm3321 = vweird.f32 %v3315
        %vm3322 = vmor %vm3320, %vm3321
        %v3323 = vsel %vm3322, %v3315, %v3319
        %v3324 = vand.u32 2147483647, %v2733
        %vm3325 = vcmp.eq.f32.partialorder %v3324, 8.507059e+37
        %v3326 = vand.u32 %v2733, 2147483648
        %v3327 = vor.u32 1.1754944e-38, %v3326
        %v3328 = vsel %vm3325, %v3327, %v3323
        %v3329 = vmul.f32 1.0, %v3328
        %v3330 = vrcp.pop %v2734
        %v3331 = vmul.f32 %v2734, %v3330
        %v3332 = vsub.f32 1.0, %v3331
        %v3333 = vmul.f32 %v3330, %v3332
        %v3334 = vadd.f32 %v3330, %v3333
        %vm3335 = vweird.f32 %v2734
        %vm3336 = vweird.f32 %v3330
        %vm3337 = vmor %vm3335, %vm3336
        %v3338 = vsel %vm3337, %v3330, %v3334
        %v3339 = vand.u32 2147483647, %v2734
        %vm3340 = vcmp.eq.f32.partialorder %v3339, 8.507059e+37
        %v3341 = vand.u32 %v2734, 2147483648
        %v3342 = vor.u32 1.1754944e-38, %v3341
        %v3343 = vsel %vm3340, %v3342, %v3338
        %v3344 = vmul.f32 1.0, %v3343
        %v3345 = vrcp.pop %v2735
        %v3346 = vmul.f32 %v2735, %v3345
        %v3347 = vsub.f32 1.0, %v3346
        %v3348 = vmul.f32 %v3345, %v3347
        %v3349 = vadd.f32 %v3345, %v3348
        %vm3350 = vweird.f32 %v2735
        %vm3351 = vweird.f32 %v3345
        %vm3352 = vmor %vm3350, %vm3351
        %v3353 = vsel %vm3352, %v3345, %v3349
        %v3354 = vand.u32 2147483647, %v2735
        %vm3355 = vcmp.eq.f32.partialorder %v3354, 8.507059e+37
        %v3356 = vand.u32 %v2735, 2147483648
        %v3357 = vor.u32 1.1754944e-38, %v3356
        %v3358 = vsel %vm3355, %v3357, %v3353
        %v3359 = vmul.f32 1.0, %v3358
        %v3360 = vrcp.pop %v2736
        %v3361 = vmul.f32 %v2736, %v3360
        %v3362 = vsub.f32 1.0, %v3361
        %v3363 = vmul.f32 %v3360, %v3362
        %v3364 = vadd.f32 %v3360, %v3363
        %vm3365 = vweird.f32 %v2736
        %vm3366 = vweird.f32 %v3360
        %vm3367 = vmor %vm3365, %vm3366
        %v3368 = vsel %vm3367, %v3360, %v3364
        %v3369 = vand.u32 2147483647, %v2736
        %vm3370 = vcmp.eq.f32.partialorder %v3369, 8.507059e+37
        %v3371 = vand.u32 %v2736, 2147483648
        %v3372 = vor.u32 1.1754944e-38, %v3371
        %v3373 = vsel %vm3370, %v3372, %v3368
        %v3374 = vmul.f32 1.0, %v3373
        %v3375 = vrcp.pop %v2737
        %v3376 = vmul.f32 %v2737, %v3375
        %v3377 = vsub.f32 1.0, %v3376
        %v3378 = vmul.f32 %v3375, %v3377
        %v3379 = vadd.f32 %v3375, %v3378
        %vm3380 = vweird.f32 %v2737
        %vm3381 = vweird.f32 %v3375
        %vm3382 = vmor %vm3380, %vm3381
        %v3383 = vsel %vm3382, %v3375, %v3379
        %v3384 = vand.u32 2147483647, %v2737
        %vm3385 = vcmp.eq.f32.partialorder %v3384, 8.507059e+37
        %v3386 = vand.u32 %v2737, 2147483648
        %v3387 = vor.u32 1.1754944e-38, %v3386
        %v3388 = vsel %vm3385, %v3387, %v3383
        %v3389 = vmul.f32 1.0, %v3388
        %v3390 = vrcp.pop %v2738
        %v3391 = vmul.f32 %v2738, %v3390
        %v3392 = vsub.f32 1.0, %v3391
        %v3393 = vmul.f32 %v3390, %v3392
        %v3394 = vadd.f32 %v3390, %v3393
        %vm3395 = vweird.f32 %v2738
        %vm3396 = vweird.f32 %v3390
        %vm3397 = vmor %vm3395, %vm3396
        %v3398 = vsel %vm3397, %v3390, %v3394
        %v3399 = vand.u32 2147483647, %v2738
        %vm3400 = vcmp.eq.f32.partialorder %v3399, 8.507059e+37
        %v3401 = vand.u32 %v2738, 2147483648
        %v3402 = vor.u32 1.1754944e-38, %v3401
        %v3403 = vsel %vm3400, %v3402, %v3398
        %v3404 = vmul.f32 1.0, %v3403
        %v3405 = vrcp.pop %v2739
        %v3406 = vmul.f32 %v2739, %v3405
        %v3407 = vsub.f32 1.0, %v3406
        %v3408 = vmul.f32 %v3405, %v3407
        %v3409 = vadd.f32 %v3405, %v3408
        %vm3410 = vweird.f32 %v2739
        %vm3411 = vweird.f32 %v3405
        %vm3412 = vmor %vm3410, %vm3411
        %v3413 = vsel %vm3412, %v3405, %v3409
        %v3414 = vand.u32 2147483647, %v2739
        %vm3415 = vcmp.eq.f32.partialorder %v3414, 8.507059e+37
        %v3416 = vand.u32 %v2739, 2147483648
        %v3417 = vor.u32 1.1754944e-38, %v3416
        %v3418 = vsel %vm3415, %v3417, %v3413
        %v3419 = vmul.f32 1.0, %v3418
        %v3420 = vrcp.pop %v2740
        %v3421 = vmul.f32 %v2740, %v3420
        %v3422 = vsub.f32 1.0, %v3421
        %v3423 = vmul.f32 %v3420, %v3422
        %v3424 = vadd.f32 %v3420, %v3423
        %vm3425 = vweird.f32 %v2740
        %vm3426 = vweird.f32 %v3420
        %vm3427 = vmor %vm3425, %vm3426
        %v3428 = vsel %vm3427, %v3420, %v3424
        %v3429 = vand.u32 2147483647, %v2740
        %vm3430 = vcmp.eq.f32.partialorder %v3429, 8.507059e+37
        %v3431 = vand.u32 %v2740, 2147483648
        %v3432 = vor.u32 1.1754944e-38, %v3431
        %v3433 = vsel %vm3430, %v3432, %v3428
        %v3434 = vmul.f32 1.0, %v3433
        %v3435 = vrcp.pop %v2741
        %v3436 = vmul.f32 %v2741, %v3435
        %v3437 = vsub.f32 1.0, %v3436
        %v3438 = vmul.f32 %v3435, %v3437
        %v3439 = vadd.f32 %v3435, %v3438
        %vm3440 = vweird.f32 %v2741
        %vm3441 = vweird.f32 %v3435
        %vm3442 = vmor %vm3440, %vm3441
        %v3443 = vsel %vm3442, %v3435, %v3439
        %v3444 = vand.u32 2147483647, %v2741
        %vm3445 = vcmp.eq.f32.partialorder %v3444, 8.507059e+37
        %v3446 = vand.u32 %v2741, 2147483648
        %v3447 = vor.u32 1.1754944e-38, %v3446
        %v3448 = vsel %vm3445, %v3447, %v3443
        %v3449 = vmul.f32 1.0, %v3448
        %v3450 = vrcp.pop %v2742
        %v3451 = vmul.f32 %v2742, %v3450
        %v3452 = vsub.f32 1.0, %v3451
        %v3453 = vmul.f32 %v3450, %v3452
        %v3454 = vadd.f32 %v3450, %v3453
        %vm3455 = vweird.f32 %v2742
        %vm3456 = vweird.f32 %v3450
        %vm3457 = vmor %vm3455, %vm3456
        %v3458 = vsel %vm3457, %v3450, %v3454
        %v3459 = vand.u32 2147483647, %v2742
        %vm3460 = vcmp.eq.f32.partialorder %v3459, 8.507059e+37
        %v3461 = vand.u32 %v2742, 2147483648
        %v3462 = vor.u32 1.1754944e-38, %v3461
        %v3463 = vsel %vm3460, %v3462, %v3458
        %v3464 = vmul.f32 1.0, %v3463
        %v3465 = vrcp.pop %v2743
        %v3466 = vmul.f32 %v2743, %v3465
        %v3467 = vsub.f32 1.0, %v3466
        %v3468 = vmul.f32 %v3465, %v3467
        %v3469 = vadd.f32 %v3465, %v3468
        %vm3470 = vweird.f32 %v2743
        %vm3471 = vweird.f32 %v3465
        %vm3472 = vmor %vm3470, %vm3471
        %v3473 = vsel %vm3472, %v3465, %v3469
        %v3474 = vand.u32 2147483647, %v2743
        %vm3475 = vcmp.eq.f32.partialorder %v3474, 8.507059e+37
        %v3476 = vand.u32 %v2743, 2147483648
        %v3477 = vor.u32 1.1754944e-38, %v3476
        %v3478 = vsel %vm3475, %v3477, %v3473
        %v3479 = vmul.f32 1.0, %v3478
        %v3480 = vrcp.pop %v2744
        %v3481 = vmul.f32 %v2744, %v3480
        %v3482 = vsub.f32 1.0, %v3481
        %v3483 = vmul.f32 %v3480, %v3482
        %v3484 = vadd.f32 %v3480, %v3483
        %vm3485 = vweird.f32 %v2744
        %vm3486 = vweird.f32 %v3480
        %vm3487 = vmor %vm3485, %vm3486
        %v3488 = vsel %vm3487, %v3480, %v3484
        %v3489 = vand.u32 2147483647, %v2744
        %vm3490 = vcmp.eq.f32.partialorder %v3489, 8.507059e+37
        %v3491 = vand.u32 %v2744, 2147483648
        %v3492 = vor.u32 1.1754944e-38, %v3491
        %v3493 = vsel %vm3490, %v3492, %v3488
        %v3494 = vmul.f32 1.0, %v3493
        %v3495 = vrcp.pop %v2745
        %v3496 = vmul.f32 %v2745, %v3495
        %v3497 = vsub.f32 1.0, %v3496
        %v3498 = vmul.f32 %v3495, %v3497
        %v3499 = vadd.f32 %v3495, %v3498
        %vm3500 = vweird.f32 %v2745
        %vm3501 = vweird.f32 %v3495
        %vm3502 = vmor %vm3500, %vm3501
        %v3503 = vsel %vm3502, %v3495, %v3499
        %v3504 = vand.u32 2147483647, %v2745
        %vm3505 = vcmp.eq.f32.partialorder %v3504, 8.507059e+37
        %v3506 = vand.u32 %v2745, 2147483648
        %v3507 = vor.u32 1.1754944e-38, %v3506
        %v3508 = vsel %vm3505, %v3507, %v3503
        %v3509 = vmul.f32 1.0, %v3508
        %v3510 = vrcp.pop %v2746
        %v3511 = vmul.f32 %v2746, %v3510
        %v3512 = vsub.f32 1.0, %v3511
        %v3513 = vmul.f32 %v3510, %v3512
        %v3514 = vadd.f32 %v3510, %v3513
        %vm3515 = vweird.f32 %v2746
        %vm3516 = vweird.f32 %v3510
        %vm3517 = vmor %vm3515, %vm3516
        %v3518 = vsel %vm3517, %v3510, %v3514
        %v3519 = vand.u32 2147483647, %v2746
        %vm3520 = vcmp.eq.f32.partialorder %v3519, 8.507059e+37
        %v3521 = vand.u32 %v2746, 2147483648
        %v3522 = vor.u32 1.1754944e-38, %v3521
        %v3523 = vsel %vm3520, %v3522, %v3518
        %v3524 = vmul.f32 1.0, %v3523
        %v3525 = vrcp.pop %v2747
        %v3526 = vmul.f32 %v2747, %v3525
        %v3527 = vsub.f32 1.0, %v3526
        %v3528 = vmul.f32 %v3525, %v3527
        %v3529 = vadd.f32 %v3525, %v3528
        %vm3530 = vweird.f32 %v2747
        %vm3531 = vweird.f32 %v3525
        %vm3532 = vmor %vm3530, %vm3531
        %v3533 = vsel %vm3532, %v3525, %v3529
        %v3534 = vand.u32 2147483647, %v2747
        %vm3535 = vcmp.eq.f32.partialorder %v3534, 8.507059e+37
        %v3536 = vand.u32 %v2747, 2147483648
        %v3537 = vor.u32 1.1754944e-38, %v3536
        %v3538 = vsel %vm3535, %v3537, %v3533
        %v3539 = vmul.f32 1.0, %v3538
        %v3540 = vrcp.pop %v2748
        %v3541 = vmul.f32 %v2748, %v3540
        %v3542 = vsub.f32 1.0, %v3541
        %v3543 = vmul.f32 %v3540, %v3542
        %v3544 = vadd.f32 %v3540, %v3543
        %vm3545 = vweird.f32 %v2748
        %vm3546 = vweird.f32 %v3540
        %vm3547 = vmor %vm3545, %vm3546
        %v3548 = vsel %vm3547, %v3540, %v3544
        %v3549 = vand.u32 2147483647, %v2748
        %vm3550 = vcmp.eq.f32.partialorder %v3549, 8.507059e+37
        %v3551 = vand.u32 %v2748, 2147483648
        %v3552 = vor.u32 1.1754944e-38, %v3551
        %v3553 = vsel %vm3550, %v3552, %v3548
        %v3554 = vmul.f32 1.0, %v3553
        %v3555 = vrcp.pop %v2749
        %v3556 = vmul.f32 %v2749, %v3555
        %v3557 = vsub.f32 1.0, %v3556
        %v3558 = vmul.f32 %v3555, %v3557
        %v3559 = vadd.f32 %v3555, %v3558
        %vm3560 = vweird.f32 %v2749
        %vm3561 = vweird.f32 %v3555
        %vm3562 = vmor %vm3560, %vm3561
        %v3563 = vsel %vm3562, %v3555, %v3559
        %v3564 = vand.u32 2147483647, %v2749
        %vm3565 = vcmp.eq.f32.partialorder %v3564, 8.507059e+37
        %v3566 = vand.u32 %v2749, 2147483648
        %v3567 = vor.u32 1.1754944e-38, %v3566
        %v3568 = vsel %vm3565, %v3567, %v3563
        %v3569 = vmul.f32 1.0, %v3568
        %v3570 = vrcp.pop %v2750
        %v3571 = vmul.f32 %v2750, %v3570
        %v3572 = vsub.f32 1.0, %v3571
        %v3573 = vmul.f32 %v3570, %v3572
        %v3574 = vadd.f32 %v3570, %v3573
        %vm3575 = vweird.f32 %v2750
        %vm3576 = vweird.f32 %v3570
        %vm3577 = vmor %vm3575, %vm3576
        %v3578 = vsel %vm3577, %v3570, %v3574
        %v3579 = vand.u32 2147483647, %v2750
        %vm3580 = vcmp.eq.f32.partialorder %v3579, 8.507059e+37
        %v3581 = vand.u32 %v2750, 2147483648
        %v3582 = vor.u32 1.1754944e-38, %v3581
        %v3583 = vsel %vm3580, %v3582, %v3578
        %v3584 = vmul.f32 1.0, %v3583
        %v3585 = vrcp.pop %v2751
        %v3586 = vmul.f32 %v2751, %v3585
        %v3587 = vsub.f32 1.0, %v3586
        %v3588 = vmul.f32 %v3585, %v3587
        %v3589 = vadd.f32 %v3585, %v3588
        %vm3590 = vweird.f32 %v2751
        %vm3591 = vweird.f32 %v3585
        %vm3592 = vmor %vm3590, %vm3591
        %v3593 = vsel %vm3592, %v3585, %v3589
        %v3594 = vand.u32 2147483647, %v2751
        %vm3595 = vcmp.eq.f32.partialorder %v3594, 8.507059e+37
        %v3596 = vand.u32 %v2751, 2147483648
        %v3597 = vor.u32 1.1754944e-38, %v3596
        %v3598 = vsel %vm3595, %v3597, %v3593
        %v3599 = vmul.f32 1.0, %v3598
        %v3600 = vrcp.pop %v2752
        %v3601 = vmul.f32 %v2752, %v3600
        %v3602 = vsub.f32 1.0, %v3601
        %v3603 = vmul.f32 %v3600, %v3602
        %v3604 = vadd.f32 %v3600, %v3603
        %vm3605 = vweird.f32 %v2752
        %vm3606 = vweird.f32 %v3600
        %vm3607 = vmor %vm3605, %vm3606
        %v3608 = vsel %vm3607, %v3600, %v3604
        %v3609 = vand.u32 2147483647, %v2752
        %vm3610 = vcmp.eq.f32.partialorder %v3609, 8.507059e+37
        %v3611 = vand.u32 %v2752, 2147483648
        %v3612 = vor.u32 1.1754944e-38, %v3611
        %v3613 = vsel %vm3610, %v3612, %v3608
        %v3614 = vmul.f32 1.0, %v3613
        %v3615 = vrcp.pop %v2753
        %v3616 = vmul.f32 %v2753, %v3615
        %v3617 = vsub.f32 1.0, %v3616
        %v3618 = vmul.f32 %v3615, %v3617
        %v3619 = vadd.f32 %v3615, %v3618
        %vm3620 = vweird.f32 %v2753
        %vm3621 = vweird.f32 %v3615
        %vm3622 = vmor %vm3620, %vm3621
        %v3623 = vsel %vm3622, %v3615, %v3619
        %v3624 = vand.u32 2147483647, %v2753
        %vm3625 = vcmp.eq.f32.partialorder %v3624, 8.507059e+37
        %v3626 = vand.u32 %v2753, 2147483648
        %v3627 = vor.u32 1.1754944e-38, %v3626
        %v3628 = vsel %vm3625, %v3627, %v3623
        %v3629 = vmul.f32 1.0, %v3628
        %v3630 = vrcp.pop %v2754
        %v3631 = vmul.f32 %v2754, %v3630
        %v3632 = vsub.f32 1.0, %v3631
        %v3633 = vmul.f32 %v3630, %v3632
        %v3634 = vadd.f32 %v3630, %v3633
        %vm3635 = vweird.f32 %v2754
        %vm3636 = vweird.f32 %v3630
        %vm3637 = vmor %vm3635, %vm3636
        %v3638 = vsel %vm3637, %v3630, %v3634
        %v3639 = vand.u32 2147483647, %v2754
        %vm3640 = vcmp.eq.f32.partialorder %v3639, 8.507059e+37
        %v3641 = vand.u32 %v2754, 2147483648
        %v3642 = vor.u32 1.1754944e-38, %v3641
        %v3643 = vsel %vm3640, %v3642, %v3638
        %v3644 = vmul.f32 1.0, %v3643
        %v3645 = vrcp.pop %v2755
        %v3646 = vmul.f32 %v2755, %v3645
        %v3647 = vsub.f32 1.0, %v3646
        %v3648 = vmul.f32 %v3645, %v3647
        %v3649 = vadd.f32 %v3645, %v3648
        %vm3650 = vweird.f32 %v2755
        %vm3651 = vweird.f32 %v3645
        %vm3652 = vmor %vm3650, %vm3651
        %v3653 = vsel %vm3652, %v3645, %v3649
        %v3654 = vand.u32 2147483647, %v2755
        %vm3655 = vcmp.eq.f32.partialorder %v3654, 8.507059e+37
        %v3656 = vand.u32 %v2755, 2147483648
        %v3657 = vor.u32 1.1754944e-38, %v3656
        %v3658 = vsel %vm3655, %v3657, %v3653
        %v3659 = vmul.f32 1.0, %v3658
        %v3660 = vrcp.pop %v2756
        %v3661 = vmul.f32 %v2756, %v3660
        %v3662 = vsub.f32 1.0, %v3661
        %v3663 = vmul.f32 %v3660, %v3662
        %v3664 = vadd.f32 %v3660, %v3663
        %vm3665 = vweird.f32 %v2756
        %vm3666 = vweird.f32 %v3660
        %vm3667 = vmor %vm3665, %vm3666
        %v3668 = vsel %vm3667, %v3660, %v3664
        %v3669 = vand.u32 2147483647, %v2756
        %vm3670 = vcmp.eq.f32.partialorder %v3669, 8.507059e+37
        %v3671 = vand.u32 %v2756, 2147483648
        %v3672 = vor.u32 1.1754944e-38, %v3671
        %v3673 = vsel %vm3670, %v3672, %v3668
        %v3674 = vmul.f32 1.0, %v3673
        %v3675 = vrcp.pop %v2757
        %v3676 = vmul.f32 %v2757, %v3675
        %v3677 = vsub.f32 1.0, %v3676
        %v3678 = vmul.f32 %v3675, %v3677
        %v3679 = vadd.f32 %v3675, %v3678
        %vm3680 = vweird.f32 %v2757
        %vm3681 = vweird.f32 %v3675
        %vm3682 = vmor %vm3680, %vm3681
        %v3683 = vsel %vm3682, %v3675, %v3679
        %v3684 = vand.u32 2147483647, %v2757
        %vm3685 = vcmp.eq.f32.partialorder %v3684, 8.507059e+37
        %v3686 = vand.u32 %v2757, 2147483648
        %v3687 = vor.u32 1.1754944e-38, %v3686
        %v3688 = vsel %vm3685, %v3687, %v3683
        %v3689 = vmul.f32 1.0, %v3688
        %v3690 = vrcp.pop %v2758
        %v3691 = vmul.f32 %v2758, %v3690
        %v3692 = vsub.f32 1.0, %v3691
        %v3693 = vmul.f32 %v3690, %v3692
        %v3694 = vadd.f32 %v3690, %v3693
        %vm3695 = vweird.f32 %v2758
        %vm3696 = vweird.f32 %v3690
        %vm3697 = vmor %vm3695, %vm3696
        %v3698 = vsel %vm3697, %v3690, %v3694
        %v3699 = vand.u32 2147483647, %v2758
        %vm3700 = vcmp.eq.f32.partialorder %v3699, 8.507059e+37
        %v3701 = vand.u32 %v2758, 2147483648
        %v3702 = vor.u32 1.1754944e-38, %v3701
        %v3703 = vsel %vm3700, %v3702, %v3698
        %v3704 = vmul.f32 1.0, %v3703
        %v3705 = vrcp.pop %v2759
        %v3706 = vmul.f32 %v2759, %v3705
        %v3707 = vsub.f32 1.0, %v3706
        %v3708 = vmul.f32 %v3705, %v3707
        %v3709 = vadd.f32 %v3705, %v3708
        %vm3710 = vweird.f32 %v2759
        %vm3711 = vweird.f32 %v3705
        %vm3712 = vmor %vm3710, %vm3711
        %v3713 = vsel %vm3712, %v3705, %v3709
        %v3714 = vand.u32 2147483647, %v2759
        %vm3715 = vcmp.eq.f32.partialorder %v3714, 8.507059e+37
        %v3716 = vand.u32 %v2759, 2147483648
        %v3717 = vor.u32 1.1754944e-38, %v3716
        %v3718 = vsel %vm3715, %v3717, %v3713
        %v3719 = vmul.f32 1.0, %v3718
        %3720 = vst [vmem:[%s326] sm:$0xff] %v2774
        %3721 = vst [vmem:[%s326 + $0x8] sm:$0xff] %v2789
        %3722 = vst [vmem:[%s326 + $0x10] sm:$0xff] %v2804
        %3723 = vst [vmem:[%s326 + $0x18] sm:$0xff] %v2819
        %3724 = vst [vmem:[%s326 + $0x20] sm:$0xff] %v2834
        %3725 = vst [vmem:[%s326 + $0x28] sm:$0xff] %v2849
        %3726 = vst [vmem:[%s326 + $0x30] sm:$0xff] %v2864
        %3727 = vst [vmem:[%s326 + $0x38] sm:$0xff] %v2879
        %3728 = vst [vmem:[%s326 + $0x40] sm:$0xff] %v2894
        %3729 = vst [vmem:[%s326 + $0x48] sm:$0xff] %v2909
        %3730 = vst [vmem:[%s326 + $0x50] sm:$0xff] %v2924
        %3731 = vst [vmem:[%s326 + $0x58] sm:$0xff] %v2939
        %3732 = vst [vmem:[%s326 + $0x60] sm:$0xff] %v2954
        %3733 = vst [vmem:[%s326 + $0x68] sm:$0xff] %v2969
        %3734 = vst [vmem:[%s326 + $0x70] sm:$0xff] %v2984
        %3735 = vst [vmem:[%s326 + $0x78] sm:$0xff] %v2999
        %3736 = vst [vmem:[%s326 + $0x80] sm:$0xff] %v3014
        %3737 = vst [vmem:[%s326 + $0x88] sm:$0xff] %v3029
        %3738 = vst [vmem:[%s326 + $0x90] sm:$0xff] %v3044
        %3739 = vst [vmem:[%s326 + $0x98] sm:$0xff] %v3059
        %3740 = vst [vmem:[%s326 + $0xa0] sm:$0xff] %v3074
        %3741 = vst [vmem:[%s326 + $0xa8] sm:$0xff] %v3089
        %3742 = vst [vmem:[%s326 + $0xb0] sm:$0xff] %v3104
        %3743 = vst [vmem:[%s326 + $0xb8] sm:$0xff] %v3119
        %3744 = vst [vmem:[%s326 + $0xc0] sm:$0xff] %v3134
        %3745 = vst [vmem:[%s326 + $0xc8] sm:$0xff] %v3149
        %3746 = vst [vmem:[%s326 + $0xd0] sm:$0xff] %v3164
        %3747 = vst [vmem:[%s326 + $0xd8] sm:$0xff] %v3179
        %3748 = vst [vmem:[%s326 + $0xe0] sm:$0xff] %v3194
        %3749 = vst [vmem:[%s326 + $0xe8] sm:$0xff] %v3209
        %3750 = vst [vmem:[%s326 + $0xf0] sm:$0xff] %v3224
        %3751 = vst [vmem:[%s326 + $0xf8] sm:$0xff] %v3239
        %3752 = vst [vmem:[%s326 + $0x100] sm:$0xff] %v3254
        %3753 = vst [vmem:[%s326 + $0x108] sm:$0xff] %v3269
        %3754 = vst [vmem:[%s326 + $0x110] sm:$0xff] %v3284
        %3755 = vst [vmem:[%s326 + $0x118] sm:$0xff] %v3299
        %3756 = vst [vmem:[%s326 + $0x120] sm:$0xff] %v3314
        %3757 = vst [vmem:[%s326 + $0x128] sm:$0xff] %v3329
        %3758 = vst [vmem:[%s326 + $0x130] sm:$0xff] %v3344
        %3759 = vst [vmem:[%s326 + $0x138] sm:$0xff] %v3359
        %3760 = vst [vmem:[%s326 + $0x140] sm:$0xff] %v3374
        %3761 = vst [vmem:[%s326 + $0x148] sm:$0xff] %v3389
        %3762 = vst [vmem:[%s326 + $0x150] sm:$0xff] %v3404
        %3763 = vst [vmem:[%s326 + $0x158] sm:$0xff] %v3419
        %3764 = vst [vmem:[%s326 + $0x160] sm:$0xff] %v3434
        %3765 = vst [vmem:[%s326 + $0x168] sm:$0xff] %v3449
        %3766 = vst [vmem:[%s326 + $0x170] sm:$0xff] %v3464
        %3767 = vst [vmem:[%s326 + $0x178] sm:$0xff] %v3479
        %3768 = vst [vmem:[%s326 + $0x180] sm:$0xff] %v3494
        %3769 = vst [vmem:[%s326 + $0x188] sm:$0xff] %v3509
        %3770 = vst [vmem:[%s326 + $0x190] sm:$0xff] %v3524
        %3771 = vst [vmem:[%s326 + $0x198] sm:$0xff] %v3539
        %3772 = vst [vmem:[%s326 + $0x1a0] sm:$0xff] %v3554
        %3773 = vst [vmem:[%s326 + $0x1a8] sm:$0xff] %v3569
        %3774 = vst [vmem:[%s326 + $0x1b0] sm:$0xff] %v3584
        %3775 = vst [vmem:[%s326 + $0x1b8] sm:$0xff] %v3599
        %3776 = vst [vmem:[%s326 + $0x1c0] sm:$0xff] %v3614
        %3777 = vst [vmem:[%s326 + $0x1c8] sm:$0xff] %v3629
        %3778 = vst [vmem:[%s326 + $0x1d0] sm:$0xff] %v3644
        %3779 = vst [vmem:[%s326 + $0x1d8] sm:$0xff] %v3659
        %3780 = vst [vmem:[%s326 + $0x1e0] sm:$0xff] %v3674
        %3781 = vst [vmem:[%s326 + $0x1e8] sm:$0xff] %v3689
        %3782 = vst [vmem:[%s326 + $0x1f0] sm:$0xff] %v3704
        %3783 = vst [vmem:[%s326 + $0x1f8] sm:$0xff] %v3719
        %s3784 = sand.u32 %s225, 1
        %s3785 = scalar_lea.sflag [#allocation3], %s3784
        %s3786 = sand.u32 %s225, 1
        %s3787 = smul.addr %s3786, 512
        %s3788 = scalar_lea.vmem [#allocation2], %s3787
        // Predicated region
        $region57: #{tpu_custom_call.1} parent=55 // pred_check
          %p3789 = pneg %p235
        $region58: #{tpu_custom_call.1} parent=55 // pred_check_branch
          %3791 = sbr.rel (%p3789) target = $region60
        $region59: #{tpu_custom_call.1} parent=55 // pred_region
          %s3792 = smul.u32 64, %s23
          %3794 = vsyncadd %s3785, 0
          %s3795 = smul.addr %s3792, 8
          %s3796 = scalar_lea.hbm %s9, %s3795
          %s3797 = sshll.u32 %s3788, 4
          %s3798 = int_to_ptr.vmem [resolvable:$true] %s3797
          %s3799 = sshll.u32 %s3796, 4
          %s3800 = int_to_ptr.hbm [resolvable:$true] %s3799
          %3805 = dma.vmem_to_hbm [thread:$0]  %s3798, 8192, %s3800, %s3785, 128, 128, 8
        $region60: #{tpu_custom_call.1} parent=55 // pred_fallthru
          _
      $region56: #{tpu_custom_call.1} parent=5 // pred_fallthru
        _
      %p3806 = scmp.le.s32.totalorder 2, %s18
      // Predicated region
      $region61: #{tpu_custom_call.1} parent=5 // pred_check
        %p3807 = pneg %p3806
      $region62: #{tpu_custom_call.1} parent=5 // pred_check_branch
        %3809 = sbr.rel (%p3807) target = $region64
      $region63: #{tpu_custom_call.1} parent=5 // pred_region
        %s3810 = ssub.s32 %s18, 2
        // Predicated region
        $region65: #{tpu_custom_call.1} parent=63 // pred_check
          %p3811 = pneg %p241
        $region66: #{tpu_custom_call.1} parent=63 // pred_check_branch
          %3813 = sbr.rel (%p3811) target = $region68
        $region67: #{tpu_custom_call.1} parent=63 // pred_region
          %s3814 = sand.u32 %s226, 1
          %s3815 = scalar_lea.sflag [#allocation3], %s3814
          %s3816 = sand.u32 %s226, 1
          %s3817 = smul.addr %s3816, 512
          %s3818 = scalar_lea.vmem [#allocation2], %s3817
          %3820 = dma.done %s3815, 8192
        $region68: #{tpu_custom_call.1} parent=63 // pred_fallthru
          _
      $region64: #{tpu_custom_call.1} parent=5 // pred_fallthru
        _
    $region6: #{tpu_custom_call.1} parent=1 // loop_footer
      %s22 = sadd.s32 1, %s18
    $region7: #{tpu_custom_call.1} parent=1 // loop_footer_branch
      %17 = sbr.rel target = $region3
    $region8: #{tpu_custom_call.1} parent=1 // loop_exit
      _
    %3821 = vsyncpa [#allocation3], 1
    %s3822 = scalar_lea.sflag [#allocation3], 1
    %3823 = vsyncpa %s3822, 1

</llo_original>
